<compile_context>
chip_gen: v7x
topology: tpu7x:2x2x1
jax: 0.10.0
libtpu: 0.0.40
codegen_flags: <defaults>
</compile_context>

<pallas_src>
import functools

import jax
import jax.numpy as jnp
from jax.experimental import pallas as pl
from jax.experimental.pallas import tpu as pltpu


# ----------------------------------------------------------------------------
# Single fused kernel: conv1+relu+pool -> conv2+relu+pool -> fc1 -> fc2 -> fc3
# ----------------------------------------------------------------------------

def _fused_net_kernel(x_ref, t1_ref, b1e_ref, sa1_ref, sb1_ref,
                      t2_ref, b2e_ref, sa2_ref, sb2_ref,
                      w1r_ref, b1f_ref, w2p_ref, b2f_ref, w3p_ref, b3f_ref,
                      out_ref):
    f32 = jnp.float32
    bf16 = jnp.bfloat16
    dot = functools.partial(jnp.dot, preferred_element_type=f32)

    bt = x_ref.shape[0]                              # images in this tile
    x = x_ref[...]                                   # (bt, 28, 28) bf16

    # ---- conv1 (1->6, 5x5, valid) as 5 banded matmuls; batch folded into M.
    #      columns of the result are oc*24 + ow, rows are (image, out_row).
    acc1 = dot(x[:, 0:24, :].reshape(bt * 24, 28), t1_ref[0])        # (bt*24, 144) f32
    for ki in range(1, 5):
        acc1 = acc1 + dot(x[:, ki:ki + 24, :].reshape(bt * 24, 28), t1_ref[ki])
    y1 = jnp.maximum(acc1 + b1e_ref[...], 0.0).astype(bf16)          # bias + ReLU

    # ---- fused 2x2 max-pool #1: column pool via one-hot matmuls (MXU),
    #      row pool via reshape + max over the size-2 sublane axis (VPU/XLU).
    cmax1 = jnp.maximum(dot(y1, sa1_ref[...]), dot(y1, sb1_ref[...]))  # (bt*24, 72) f32
    p1 = jnp.max(cmax1.reshape(bt, 12, 2, 72), axis=2).astype(bf16)    # (bt, 12, 72)

    # ---- conv2 (6->16, 5x5, valid); input-channel sum folded into K=72 -----
    acc2 = dot(p1[:, 0:8, :].reshape(bt * 8, 72), t2_ref[0])          # (bt*8, 128) f32
    for ki in range(1, 5):
        acc2 = acc2 + dot(p1[:, ki:ki + 8, :].reshape(bt * 8, 72), t2_ref[ki])
    y2 = jnp.maximum(acc2 + b2e_ref[...], 0.0).astype(bf16)           # (bt*8, 128)

    # ---- fused 2x2 max-pool #2 ---------------------------------------------
    cmax2 = jnp.maximum(dot(y2, sa2_ref[...]), dot(y2, sb2_ref[...]))  # (bt*8, 64) f32
    p2 = jnp.max(cmax2.reshape(bt, 4, 2, 64), axis=2).astype(bf16)     # (bt, 4, 64)

    # ---- fc1 (256 -> 120, padded to 128): PyTorch's NCHW flatten order is
    #      absorbed into W1r, so the contraction over the 4 pooled rows is
    #      4 accumulating (bt,64)x(64,128) matmuls -- no in-kernel transpose.
    z1 = dot(p2[:, 0, :], w1r_ref[0])                                  # (bt, 128) f32
    for i in range(1, 4):
        z1 = z1 + dot(p2[:, i, :], w1r_ref[i])
    a1 = jnp.maximum(z1 + b1f_ref[...], 0.0).astype(bf16)

    # ---- fc2 (120 -> 84, padded) + ReLU; fc3 (84 -> 10, padded) ------------
    a2 = jnp.maximum(dot(a1, w2p_ref[...]) + b2f_ref[...], 0.0).astype(bf16)
    out_ref[...] = dot(a2, w3p_ref[...]) + b3f_ref[...]                # (bt, 128) f32


# ----------------------------------------------------------------------------
# Parameter preparation (done ONCE): PyTorch-layout params -> kernel operands
# ----------------------------------------------------------------------------

def init_params(key):
    """Deterministic PyTorch-default-like init, in PyTorch layouts."""
    def uniform(key, shape, fan_in):
        bound = 1.0 / jnp.sqrt(jnp.float32(fan_in))
        return jax.random.uniform(key, shape, jnp.float32, -bound, bound)

    keys = jax.random.split(key, 10)
    return {
        "conv1_w": uniform(keys[0], (6, 1, 5, 5), 1 * 5 * 5),
        "conv1_b": uniform(keys[1], (6,), 1 * 5 * 5),
        "conv2_w": uniform(keys[2], (16, 6, 5, 5), 6 * 5 * 5),
        "conv2_b": uniform(keys[3], (16,), 6 * 5 * 5),
        "fc1_w": uniform(keys[4], (120, 256), 256),
        "fc1_b": uniform(keys[5], (120,), 256),
        "fc2_w": uniform(keys[6], (84, 120), 120),
        "fc2_b": uniform(keys[7], (84,), 120),
        "fc3_w": uniform(keys[8], (10, 84), 84),
        "fc3_b": uniform(keys[9], (10,), 84),
    }


def prepare_kernel_params(p):
    """Banded conv matrices, pooling selectors, padded FC mats (MXU operands in bf16)."""
    f32 = jnp.float32
    bf16 = jnp.bfloat16
    w1 = p["conv1_w"].astype(f32)   # (6, 1, 5, 5)
    b1 = p["conv1_b"].astype(f32)   # (6,)
    w2 = p["conv2_w"].astype(f32)   # (16, 6, 5, 5)
    b2 = p["conv2_b"].astype(f32)   # (16,)

    # conv1 banded weights: T1[ki, c, oc*24+ow] = w1[oc,0,ki,c-ow] for 0<=c-ow<=4
    c = jnp.arange(28)[:, None]
    ow = jnp.arange(24)[None, :]
    d = c - ow
    valid = (d >= 0) & (d <= 4)
    dcl = jnp.clip(d, 0, 4)
    band1 = jnp.where(valid[None, None], w1[:, 0][:, :, dcl], 0.0)   # (6,5,28,24)
    T1 = band1.transpose(1, 2, 0, 3).reshape(5, 28, 6 * 24)          # (5,28,144)
    b1e = jnp.repeat(b1, 24).reshape(1, 144)

    # conv2 banded weights over pooled conv1 layout (12 rows, 6*12 cols):
    # T2[ki, ic*12+c, oc2*8+ow] = w2[oc2,ic,ki,c-ow] for 0<=c-ow<=4
    c2 = jnp.arange(12)[:, None]
    ow2 = jnp.arange(8)[None, :]
    d2 = c2 - ow2
    valid2 = (d2 >= 0) & (d2 <= 4)
    dcl2 = jnp.clip(d2, 0, 4)
    band2 = jnp.where(valid2[None, None, None], w2[:, :, :, dcl2], 0.0)  # (16,6,5,12,8)
    T2 = band2.transpose(2, 1, 3, 0, 4).reshape(5, 6 * 12, 16 * 8)       # (5,72,128)
    b2e = jnp.repeat(b2, 8).reshape(1, 128)

    # 2x2 max-pool column-selection matrices (even/odd columns within each group)
    def col_select(group_w, n_groups, offset):
        k = jnp.arange(n_groups * (group_w // 2))
        src = (k // (group_w // 2)) * group_w + 2 * (k % (group_w // 2)) + offset
        return jax.nn.one_hot(src, n_groups * group_w, dtype=f32).T

    Sa1, Sb1 = col_select(24, 6, 0), col_select(24, 6, 1)    # (144, 72)
    Sa2, Sb2 = col_select(8, 16, 0), col_select(8, 16, 1)    # (128, 64)

    # fc1: absorb PyTorch flatten order (oc2, i, j) into a (4, 64, 128) weight
    fc1_w = p["fc1_w"].astype(f32)                           # (120, 256)
    W1r = fc1_w.reshape(120, 16, 4, 4).transpose(2, 1, 3, 0).reshape(4, 64, 120)
    W1r = jnp.pad(W1r, ((0, 0), (0, 0), (0, 8)))             # pad 120 -> 128 lanes
    b1f = jnp.pad(p["fc1_b"].astype(f32), (0, 8)).reshape(1, 128)

    W2p = jnp.zeros((128, 128), f32).at[:120, :84].set(p["fc2_w"].astype(f32).T)
    b2f = jnp.pad(p["fc2_b"].astype(f32), (0, 44)).reshape(1, 128)

    W3p = jnp.zeros((128, 128), f32).at[:84, :10].set(p["fc3_w"].astype(f32).T)
    b3f = jnp.pad(p["fc3_b"].astype(f32), (0, 118)).reshape(1, 128)

    # MXU operands in bf16 (one-hot selectors & banded zeros are exact in bf16);
    # biases stay f32 because they are added to f32 accumulators.
    return {"T1": T1.astype(bf16), "b1e": b1e,
            "Sa1": Sa1.astype(bf16), "Sb1": Sb1.astype(bf16),
            "T2": T2.astype(bf16), "b2e": b2e,
            "Sa2": Sa2.astype(bf16), "Sb2": Sb2.astype(bf16),
            "W1r": W1r.astype(bf16), "b1f": b1f,
            "W2p": W2p.astype(bf16), "b2f": b2f,
            "W3p": W3p.astype(bf16), "b3f": b3f}


# ----------------------------------------------------------------------------
# Forward pass: one pallas_call, grid over batch tiles
# ----------------------------------------------------------------------------

def _round_up(v, m):
    return ((v + m - 1) // m) * m


def net_forward(x, kp, max_block_batch=32):
    """x: (N, 1, 28, 28) -> logits (N, 10)."""
    n = x.shape[0]
    x3 = x.reshape(n, 28, 28).astype(jnp.bfloat16)

    # Batch tile: multiple of 8 (sublane-dense output block); aim for >= 2 grid
    # steps so dimension_semantics=("parallel",) can use both v7x TensorCores.
    bt = min(max_block_batch, max(8, _round_up(pl.cdiv(n, 2), 8)))
    n_pad = _round_up(n, bt)
    if n_pad != n:
        x3 = jnp.pad(x3, ((0, n_pad - n), (0, 0), (0, 0)))

    operands = (x3, kp["T1"], kp["b1e"], kp["Sa1"], kp["Sb1"],
                kp["T2"], kp["b2e"], kp["Sa2"], kp["Sb2"],
                kp["W1r"], kp["b1f"], kp["W2p"], kp["b2f"], kp["W3p"], kp["b3f"])

    def const_spec(a):
        # Whole array, same block every grid step -> VMEM-resident, no re-DMA.
        nd = a.ndim
        return pl.BlockSpec(a.shape, lambda b, _nd=nd: (0,) * _nd)

    in_specs = [pl.BlockSpec((bt, 28, 28), lambda b: (b, 0, 0))]
    in_specs += [const_spec(a) for a in operands[1:]]

    out = pl.pallas_call(
        _fused_net_kernel,
        out_shape=jax.ShapeDtypeStruct((n_pad, 128), jnp.float32),
        grid_spec=pltpu.PrefetchScalarGridSpec(
            num_scalar_prefetch=0,
            grid=(n_pad // bt,),
            in_specs=in_specs,
            out_specs=pl.BlockSpec((bt, 128), lambda b: (b, 0)),
        ),
        compiler_params=pltpu.CompilerParams(dimension_semantics=("parallel",)),
    )(*operands)

    # Padded batch rows and padded logit lanes are dropped here only.
    return out[:n, :10]


# ----------------------------------------------------------------------------
# Pure-JAX reference (PyTorch semantics) for a self-check
# ----------------------------------------------------------------------------

def reference_forward(x, params):
    hp = jax.lax.Precision.HIGHEST

    def conv_relu(x, w, b):
        y = jax.lax.conv_general_dilated(
            x, w, window_strides=(1, 1), padding="VALID",
            dimension_numbers=("NCHW", "OIHW", "NCHW"), precision=hp)
        return jax.nn.relu(y + b[None, :, None, None])

    def pool(x):
        return jax.lax.reduce_window(x, -jnp.inf, jax.lax.max,
                                     (1, 1, 2, 2), (1, 1, 2, 2), "VALID")

    x = pool(conv_relu(x, params["conv1_w"], params["conv1_b"]))
    x = pool(conv_relu(x, params["conv2_w"], params["conv2_b"]))
    x = x.reshape(x.shape[0], -1)
    x = jax.nn.relu(jnp.dot(x, params["fc1_w"].T, precision=hp) + params["fc1_b"])
    x = jax.nn.relu(jnp.dot(x, params["fc2_w"].T, precision=hp) + params["fc2_b"])
    return jnp.dot(x, params["fc3_w"].T, precision=hp) + params["fc3_b"]


if __name__ == "__main__":
    key = jax.random.PRNGKey(0)
    k_params, k_x = jax.random.split(key)
    params = init_params(k_params)
    kparams = prepare_kernel_params(params)

    # Input spatial size must be 28x28 so the flattened features == 256.
    # n=10 exercises batch padding and a 2-step ("parallel") grid.
    n = 10
    x = jax.random.normal(k_x, (n, 1, 28, 28), dtype=jnp.float32)

    out = jax.jit(net_forward)(x, kparams)
    out = jax.block_until_ready(out)
    assert out.shape == (n, 10), out.shape
    assert bool(jnp.all(jnp.isfinite(out)))

    ref = reference_forward(x, params)
    max_diff = float(jnp.max(jnp.abs(out - ref)))
    assert jnp.allclose(out, ref, atol=5e-2, rtol=5e-2), f"max diff {max_diff}"

    print("KERNEL_OK")
</pallas_src>

<mosaic_0001>
module attributes {stable_mosaic.version = 11 : i64} {
  func.func @_fused_net_kernel(%arg0: i32, %arg1: memref<8x28x28xbf16, #tpu.memory_space<vmem>>, %arg2: memref<5x28x144xbf16, #tpu.memory_space<vmem>>, %arg3: memref<1x144xf32, #tpu.memory_space<vmem>>, %arg4: memref<144x72xbf16, #tpu.memory_space<vmem>>, %arg5: memref<144x72xbf16, #tpu.memory_space<vmem>>, %arg6: memref<5x72x128xbf16, #tpu.memory_space<vmem>>, %arg7: memref<1x128xf32, #tpu.memory_space<vmem>>, %arg8: memref<128x64xbf16, #tpu.memory_space<vmem>>, %arg9: memref<128x64xbf16, #tpu.memory_space<vmem>>, %arg10: memref<4x64x128xbf16, #tpu.memory_space<vmem>>, %arg11: memref<1x128xf32, #tpu.memory_space<vmem>>, %arg12: memref<128x128xbf16, #tpu.memory_space<vmem>>, %arg13: memref<1x128xf32, #tpu.memory_space<vmem>>, %arg14: memref<128x128xbf16, #tpu.memory_space<vmem>>, %arg15: memref<1x128xf32, #tpu.memory_space<vmem>>, %arg16: memref<8x128xf32, #tpu.memory_space<vmem>>) attributes {dimension_semantics = [#tpu.dimension_semantics<parallel>], iteration_bounds = array<i64: 2>, scalar_prefetch = 0 : i64, scratch_operands = 0 : i64, tpu.core_type = #tpu.core_type<tc>, window_params = [{transform_indices = @transform_0, window_bounds = array<i64: 8, 28, 28>}, {pipeline_mode = #tpu.pipeline_mode<synchronous>, transform_indices = @transform_1, window_bounds = array<i64: 5, 28, 144>}, {pipeline_mode = #tpu.pipeline_mode<synchronous>, transform_indices = @transform_2, window_bounds = array<i64: 1, 144>}, {pipeline_mode = #tpu.pipeline_mode<synchronous>, transform_indices = @transform_3, window_bounds = array<i64: 144, 72>}, {pipeline_mode = #tpu.pipeline_mode<synchronous>, transform_indices = @transform_4, window_bounds = array<i64: 144, 72>}, {pipeline_mode = #tpu.pipeline_mode<synchronous>, transform_indices = @transform_5, window_bounds = array<i64: 5, 72, 128>}, {pipeline_mode = #tpu.pipeline_mode<synchronous>, transform_indices = @transform_6, window_bounds = array<i64: 1, 128>}, {pipeline_mode = #tpu.pipeline_mode<synchronous>, transform_indices = @transform_7, window_bounds = array<i64: 128, 64>}, {pipeline_mode = #tpu.pipeline_mode<synchronous>, transform_indices = @transform_8, window_bounds = array<i64: 128, 64>}, {pipeline_mode = #tpu.pipeline_mode<synchronous>, transform_indices = @transform_9, window_bounds = array<i64: 4, 64, 128>}, {pipeline_mode = #tpu.pipeline_mode<synchronous>, transform_indices = @transform_10, window_bounds = array<i64: 1, 128>}, {pipeline_mode = #tpu.pipeline_mode<synchronous>, transform_indices = @transform_11, window_bounds = array<i64: 128, 128>}, {pipeline_mode = #tpu.pipeline_mode<synchronous>, transform_indices = @transform_12, window_bounds = array<i64: 1, 128>}, {pipeline_mode = #tpu.pipeline_mode<synchronous>, transform_indices = @transform_13, window_bounds = array<i64: 128, 128>}, {pipeline_mode = #tpu.pipeline_mode<synchronous>, transform_indices = @transform_14, window_bounds = array<i64: 1, 128>}, {transform_indices = @transform_15, window_bounds = array<i64: 8, 128>}]} {
    %c0 = arith.constant 0 : index
    %c0_0 = arith.constant 0 : index
    %c0_1 = arith.constant 0 : index
    %0 = vector.load %arg1[%c0, %c0_0, %c0_1] : memref<8x28x28xbf16, #tpu.memory_space<vmem>>, vector<8x28x28xbf16>
    %1 = vector.extract_strided_slice %0 {offsets = [0, 0, 0], sizes = [8, 24, 28], strides = [1, 1, 1]} : vector<8x28x28xbf16> to vector<8x24x28xbf16>
    %2 = vector.shape_cast %1 : vector<8x24x28xbf16> to vector<192x28xbf16>
    %c0_2 = arith.constant 0 : index
    %c0_3 = arith.constant 0 : index
    %c0_4 = arith.constant 0 : index
    %3 = vector.load %arg2[%c0_2, %c0_3, %c0_4] : memref<5x28x144xbf16, #tpu.memory_space<vmem>>, vector<1x28x144xbf16>
    %4 = vector.shape_cast %3 : vector<1x28x144xbf16> to vector<28x144xbf16>
    %cst = arith.constant dense<0.000000e+00> : vector<192x144xf32>
    %5 = tpu.matmul %2, %4, %cst {dimension_numbers = #tpu.dot_dimension_numbers<[1], [0], [0], [1], [0, 0, 1, 1], [], []>} : vector<192x28xbf16>, vector<28x144xbf16>, vector<192x144xf32> -> vector<192x144xf32>
    %6 = vector.extract_strided_slice %0 {offsets = [0, 1, 0], sizes = [8, 24, 28], strides = [1, 1, 1]} : vector<8x28x28xbf16> to vector<8x24x28xbf16>
    %7 = vector.shape_cast %6 : vector<8x24x28xbf16> to vector<192x28xbf16>
    %c1 = arith.constant 1 : index
    %c0_5 = arith.constant 0 : index
    %c0_6 = arith.constant 0 : index
    %8 = vector.load %arg2[%c1, %c0_5, %c0_6] : memref<5x28x144xbf16, #tpu.memory_space<vmem>>, vector<1x28x144xbf16>
    %9 = vector.shape_cast %8 : vector<1x28x144xbf16> to vector<28x144xbf16>
    %cst_7 = arith.constant dense<0.000000e+00> : vector<192x144xf32>
    %10 = tpu.matmul %7, %9, %cst_7 {dimension_numbers = #tpu.dot_dimension_numbers<[1], [0], [0], [1], [0, 0, 1, 1], [], []>} : vector<192x28xbf16>, vector<28x144xbf16>, vector<192x144xf32> -> vector<192x144xf32>
    %11 = arith.addf %5, %10 : vector<192x144xf32>
    %12 = vector.extract_strided_slice %0 {offsets = [0, 2, 0], sizes = [8, 24, 28], strides = [1, 1, 1]} : vector<8x28x28xbf16> to vector<8x24x28xbf16>
    %13 = vector.shape_cast %12 : vector<8x24x28xbf16> to vector<192x28xbf16>
    %c2 = arith.constant 2 : index
    %c0_8 = arith.constant 0 : index
    %c0_9 = arith.constant 0 : index
    %14 = vector.load %arg2[%c2, %c0_8, %c0_9] : memref<5x28x144xbf16, #tpu.memory_space<vmem>>, vector<1x28x144xbf16>
    %15 = vector.shape_cast %14 : vector<1x28x144xbf16> to vector<28x144xbf16>
    %cst_10 = arith.constant dense<0.000000e+00> : vector<192x144xf32>
    %16 = tpu.matmul %13, %15, %cst_10 {dimension_numbers = #tpu.dot_dimension_numbers<[1], [0], [0], [1], [0, 0, 1, 1], [], []>} : vector<192x28xbf16>, vector<28x144xbf16>, vector<192x144xf32> -> vector<192x144xf32>
    %17 = arith.addf %11, %16 : vector<192x144xf32>
    %18 = vector.extract_strided_slice %0 {offsets = [0, 3, 0], sizes = [8, 24, 28], strides = [1, 1, 1]} : vector<8x28x28xbf16> to vector<8x24x28xbf16>
    %19 = vector.shape_cast %18 : vector<8x24x28xbf16> to vector<192x28xbf16>
    %c3 = arith.constant 3 : index
    %c0_11 = arith.constant 0 : index
    %c0_12 = arith.constant 0 : index
    %20 = vector.load %arg2[%c3, %c0_11, %c0_12] : memref<5x28x144xbf16, #tpu.memory_space<vmem>>, vector<1x28x144xbf16>
    %21 = vector.shape_cast %20 : vector<1x28x144xbf16> to vector<28x144xbf16>
    %cst_13 = arith.constant dense<0.000000e+00> : vector<192x144xf32>
    %22 = tpu.matmul %19, %21, %cst_13 {dimension_numbers = #tpu.dot_dimension_numbers<[1], [0], [0], [1], [0, 0, 1, 1], [], []>} : vector<192x28xbf16>, vector<28x144xbf16>, vector<192x144xf32> -> vector<192x144xf32>
    %23 = arith.addf %17, %22 : vector<192x144xf32>
    %24 = vector.extract_strided_slice %0 {offsets = [0, 4, 0], sizes = [8, 24, 28], strides = [1, 1, 1]} : vector<8x28x28xbf16> to vector<8x24x28xbf16>
    %25 = vector.shape_cast %24 : vector<8x24x28xbf16> to vector<192x28xbf16>
    %c4 = arith.constant 4 : index
    %c0_14 = arith.constant 0 : index
    %c0_15 = arith.constant 0 : index
    %26 = vector.load %arg2[%c4, %c0_14, %c0_15] : memref<5x28x144xbf16, #tpu.memory_space<vmem>>, vector<1x28x144xbf16>
    %27 = vector.shape_cast %26 : vector<1x28x144xbf16> to vector<28x144xbf16>
    %cst_16 = arith.constant dense<0.000000e+00> : vector<192x144xf32>
    %28 = tpu.matmul %25, %27, %cst_16 {dimension_numbers = #tpu.dot_dimension_numbers<[1], [0], [0], [1], [0, 0, 1, 1], [], []>} : vector<192x28xbf16>, vector<28x144xbf16>, vector<192x144xf32> -> vector<192x144xf32>
    %29 = arith.addf %23, %28 : vector<192x144xf32>
    %c0_17 = arith.constant 0 : index
    %c0_18 = arith.constant 0 : index
    %30 = vector.load %arg3[%c0_17, %c0_18] : memref<1x144xf32, #tpu.memory_space<vmem>>, vector<1x144xf32>
    %31 = vector.broadcast %30 : vector<1x144xf32> to vector<192x144xf32>
    %32 = arith.addf %29, %31 : vector<192x144xf32>
    %cst_19 = arith.constant 0.000000e+00 : f32
    %33 = vector.broadcast %cst_19 : f32 to vector<192x144xf32>
    %34 = arith.maximumf %32, %33 : vector<192x144xf32>
    %35 = arith.truncf %34 : vector<192x144xf32> to vector<192x144xbf16>
    %c0_20 = arith.constant 0 : index
    %c0_21 = arith.constant 0 : index
    %36 = vector.load %arg4[%c0_20, %c0_21] : memref<144x72xbf16, #tpu.memory_space<vmem>>, vector<144x72xbf16>
    %cst_22 = arith.constant dense<0.000000e+00> : vector<192x72xf32>
    %37 = tpu.matmul %35, %36, %cst_22 {dimension_numbers = #tpu.dot_dimension_numbers<[1], [0], [0], [1], [0, 0, 1, 1], [], []>} : vector<192x144xbf16>, vector<144x72xbf16>, vector<192x72xf32> -> vector<192x72xf32>
    %c0_23 = arith.constant 0 : index
    %c0_24 = arith.constant 0 : index
    %38 = vector.load %arg5[%c0_23, %c0_24] : memref<144x72xbf16, #tpu.memory_space<vmem>>, vector<144x72xbf16>
    %cst_25 = arith.constant dense<0.000000e+00> : vector<192x72xf32>
    %39 = tpu.matmul %35, %38, %cst_25 {dimension_numbers = #tpu.dot_dimension_numbers<[1], [0], [0], [1], [0, 0, 1, 1], [], []>} : vector<192x144xbf16>, vector<144x72xbf16>, vector<192x72xf32> -> vector<192x72xf32>
    %40 = arith.maximumf %37, %39 : vector<192x72xf32>
    %41 = vector.shape_cast %40 : vector<192x72xf32> to vector<8x12x2x72xf32>
    %cst_26 = arith.constant dense<0xFF800000> : vector<8x12x72xf32>
    %42 = vector.multi_reduction <maximumf>, %41, %cst_26 [2] : vector<8x12x2x72xf32> to vector<8x12x72xf32>
    %43 = arith.truncf %42 : vector<8x12x72xf32> to vector<8x12x72xbf16>
    %44 = vector.extract_strided_slice %43 {offsets = [0, 0, 0], sizes = [8, 8, 72], strides = [1, 1, 1]} : vector<8x12x72xbf16> to vector<8x8x72xbf16>
    %45 = vector.shape_cast %44 : vector<8x8x72xbf16> to vector<64x72xbf16>
    %c0_27 = arith.constant 0 : index
    %c0_28 = arith.constant 0 : index
    %c0_29 = arith.constant 0 : index
    %46 = vector.load %arg6[%c0_27, %c0_28, %c0_29] : memref<5x72x128xbf16, #tpu.memory_space<vmem>>, vector<1x72x128xbf16>
    %47 = vector.shape_cast %46 : vector<1x72x128xbf16> to vector<72x128xbf16>
    %cst_30 = arith.constant dense<0.000000e+00> : vector<64x128xf32>
    %48 = tpu.matmul %45, %47, %cst_30 {dimension_numbers = #tpu.dot_dimension_numbers<[1], [0], [0], [1], [0, 0, 1, 1], [], []>} : vector<64x72xbf16>, vector<72x128xbf16>, vector<64x128xf32> -> vector<64x128xf32>
    %49 = vector.extract_strided_slice %43 {offsets = [0, 1, 0], sizes = [8, 8, 72], strides = [1, 1, 1]} : vector<8x12x72xbf16> to vector<8x8x72xbf16>
    %50 = vector.shape_cast %49 : vector<8x8x72xbf16> to vector<64x72xbf16>
    %c1_31 = arith.constant 1 : index
    %c0_32 = arith.constant 0 : index
    %c0_33 = arith.constant 0 : index
    %51 = vector.load %arg6[%c1_31, %c0_32, %c0_33] : memref<5x72x128xbf16, #tpu.memory_space<vmem>>, vector<1x72x128xbf16>
    %52 = vector.shape_cast %51 : vector<1x72x128xbf16> to vector<72x128xbf16>
    %cst_34 = arith.constant dense<0.000000e+00> : vector<64x128xf32>
    %53 = tpu.matmul %50, %52, %cst_34 {dimension_numbers = #tpu.dot_dimension_numbers<[1], [0], [0], [1], [0, 0, 1, 1], [], []>} : vector<64x72xbf16>, vector<72x128xbf16>, vector<64x128xf32> -> vector<64x128xf32>
    %54 = arith.addf %48, %53 : vector<64x128xf32>
    %55 = vector.extract_strided_slice %43 {offsets = [0, 2, 0], sizes = [8, 8, 72], strides = [1, 1, 1]} : vector<8x12x72xbf16> to vector<8x8x72xbf16>
    %56 = vector.shape_cast %55 : vector<8x8x72xbf16> to vector<64x72xbf16>
    %c2_35 = arith.constant 2 : index
    %c0_36 = arith.constant 0 : index
    %c0_37 = arith.constant 0 : index
    %57 = vector.load %arg6[%c2_35, %c0_36, %c0_37] : memref<5x72x128xbf16, #tpu.memory_space<vmem>>, vector<1x72x128xbf16>
    %58 = vector.shape_cast %57 : vector<1x72x128xbf16> to vector<72x128xbf16>
    %cst_38 = arith.constant dense<0.000000e+00> : vector<64x128xf32>
    %59 = tpu.matmul %56, %58, %cst_38 {dimension_numbers = #tpu.dot_dimension_numbers<[1], [0], [0], [1], [0, 0, 1, 1], [], []>} : vector<64x72xbf16>, vector<72x128xbf16>, vector<64x128xf32> -> vector<64x128xf32>
    %60 = arith.addf %54, %59 : vector<64x128xf32>
    %61 = vector.extract_strided_slice %43 {offsets = [0, 3, 0], sizes = [8, 8, 72], strides = [1, 1, 1]} : vector<8x12x72xbf16> to vector<8x8x72xbf16>
    %62 = vector.shape_cast %61 : vector<8x8x72xbf16> to vector<64x72xbf16>
    %c3_39 = arith.constant 3 : index
    %c0_40 = arith.constant 0 : index
    %c0_41 = arith.constant 0 : index
    %63 = vector.load %arg6[%c3_39, %c0_40, %c0_41] : memref<5x72x128xbf16, #tpu.memory_space<vmem>>, vector<1x72x128xbf16>
    %64 = vector.shape_cast %63 : vector<1x72x128xbf16> to vector<72x128xbf16>
    %cst_42 = arith.constant dense<0.000000e+00> : vector<64x128xf32>
    %65 = tpu.matmul %62, %64, %cst_42 {dimension_numbers = #tpu.dot_dimension_numbers<[1], [0], [0], [1], [0, 0, 1, 1], [], []>} : vector<64x72xbf16>, vector<72x128xbf16>, vector<64x128xf32> -> vector<64x128xf32>
    %66 = arith.addf %60, %65 : vector<64x128xf32>
    %67 = vector.extract_strided_slice %43 {offsets = [0, 4, 0], sizes = [8, 8, 72], strides = [1, 1, 1]} : vector<8x12x72xbf16> to vector<8x8x72xbf16>
    %68 = vector.shape_cast %67 : vector<8x8x72xbf16> to vector<64x72xbf16>
    %c4_43 = arith.constant 4 : index
    %c0_44 = arith.constant 0 : index
    %c0_45 = arith.constant 0 : index
    %69 = vector.load %arg6[%c4_43, %c0_44, %c0_45] : memref<5x72x128xbf16, #tpu.memory_space<vmem>>, vector<1x72x128xbf16>
    %70 = vector.shape_cast %69 : vector<1x72x128xbf16> to vector<72x128xbf16>
    %cst_46 = arith.constant dense<0.000000e+00> : vector<64x128xf32>
    %71 = tpu.matmul %68, %70, %cst_46 {dimension_numbers = #tpu.dot_dimension_numbers<[1], [0], [0], [1], [0, 0, 1, 1], [], []>} : vector<64x72xbf16>, vector<72x128xbf16>, vector<64x128xf32> -> vector<64x128xf32>
    %72 = arith.addf %66, %71 : vector<64x128xf32>
    %c0_47 = arith.constant 0 : index
    %c0_48 = arith.constant 0 : index
    %73 = vector.load %arg7[%c0_47, %c0_48] : memref<1x128xf32, #tpu.memory_space<vmem>>, vector<1x128xf32>
    %74 = vector.broadcast %73 : vector<1x128xf32> to vector<64x128xf32>
    %75 = arith.addf %72, %74 : vector<64x128xf32>
    %cst_49 = arith.constant 0.000000e+00 : f32
    %76 = vector.broadcast %cst_49 : f32 to vector<64x128xf32>
    %77 = arith.maximumf %75, %76 : vector<64x128xf32>
    %78 = arith.truncf %77 : vector<64x128xf32> to vector<64x128xbf16>
    %c0_50 = arith.constant 0 : index
    %c0_51 = arith.constant 0 : index
    %79 = vector.load %arg8[%c0_50, %c0_51] : memref<128x64xbf16, #tpu.memory_space<vmem>>, vector<128x64xbf16>
    %cst_52 = arith.constant dense<0.000000e+00> : vector<64x64xf32>
    %80 = tpu.matmul %78, %79, %cst_52 {dimension_numbers = #tpu.dot_dimension_numbers<[1], [0], [0], [1], [0, 0, 1, 1], [], []>} : vector<64x128xbf16>, vector<128x64xbf16>, vector<64x64xf32> -> vector<64x64xf32>
    %c0_53 = arith.constant 0 : index
    %c0_54 = arith.constant 0 : index
    %81 = vector.load %arg9[%c0_53, %c0_54] : memref<128x64xbf16, #tpu.memory_space<vmem>>, vector<128x64xbf16>
    %cst_55 = arith.constant dense<0.000000e+00> : vector<64x64xf32>
    %82 = tpu.matmul %78, %81, %cst_55 {dimension_numbers = #tpu.dot_dimension_numbers<[1], [0], [0], [1], [0, 0, 1, 1], [], []>} : vector<64x128xbf16>, vector<128x64xbf16>, vector<64x64xf32> -> vector<64x64xf32>
    %83 = arith.maximumf %80, %82 : vector<64x64xf32>
    %84 = vector.shape_cast %83 : vector<64x64xf32> to vector<8x4x2x64xf32>
    %cst_56 = arith.constant dense<0xFF800000> : vector<8x4x64xf32>
    %85 = vector.multi_reduction <maximumf>, %84, %cst_56 [2] : vector<8x4x2x64xf32> to vector<8x4x64xf32>
    %86 = arith.truncf %85 : vector<8x4x64xf32> to vector<8x4x64xbf16>
    %87 = vector.extract_strided_slice %86 {offsets = [0, 0, 0], sizes = [8, 1, 64], strides = [1, 1, 1]} : vector<8x4x64xbf16> to vector<8x1x64xbf16>
    %88 = vector.shape_cast %87 : vector<8x1x64xbf16> to vector<8x64xbf16>
    %c0_57 = arith.constant 0 : index
    %c0_58 = arith.constant 0 : index
    %c0_59 = arith.constant 0 : index
    %89 = vector.load %arg10[%c0_57, %c0_58, %c0_59] : memref<4x64x128xbf16, #tpu.memory_space<vmem>>, vector<1x64x128xbf16>
    %90 = vector.shape_cast %89 : vector<1x64x128xbf16> to vector<64x128xbf16>
    %cst_60 = arith.constant dense<0.000000e+00> : vector<8x128xf32>
    %91 = tpu.matmul %88, %90, %cst_60 {dimension_numbers = #tpu.dot_dimension_numbers<[1], [0], [0], [1], [0, 0, 1, 1], [], []>} : vector<8x64xbf16>, vector<64x128xbf16>, vector<8x128xf32> -> vector<8x128xf32>
    %92 = vector.extract_strided_slice %86 {offsets = [0, 1, 0], sizes = [8, 1, 64], strides = [1, 1, 1]} : vector<8x4x64xbf16> to vector<8x1x64xbf16>
    %93 = vector.shape_cast %92 : vector<8x1x64xbf16> to vector<8x64xbf16>
    %c1_61 = arith.constant 1 : index
    %c0_62 = arith.constant 0 : index
    %c0_63 = arith.constant 0 : index
    %94 = vector.load %arg10[%c1_61, %c0_62, %c0_63] : memref<4x64x128xbf16, #tpu.memory_space<vmem>>, vector<1x64x128xbf16>
    %95 = vector.shape_cast %94 : vector<1x64x128xbf16> to vector<64x128xbf16>
    %cst_64 = arith.constant dense<0.000000e+00> : vector<8x128xf32>
    %96 = tpu.matmul %93, %95, %cst_64 {dimension_numbers = #tpu.dot_dimension_numbers<[1], [0], [0], [1], [0, 0, 1, 1], [], []>} : vector<8x64xbf16>, vector<64x128xbf16>, vector<8x128xf32> -> vector<8x128xf32>
    %97 = arith.addf %91, %96 : vector<8x128xf32>
    %98 = vector.extract_strided_slice %86 {offsets = [0, 2, 0], sizes = [8, 1, 64], strides = [1, 1, 1]} : vector<8x4x64xbf16> to vector<8x1x64xbf16>
    %99 = vector.shape_cast %98 : vector<8x1x64xbf16> to vector<8x64xbf16>
    %c2_65 = arith.constant 2 : index
    %c0_66 = arith.constant 0 : index
    %c0_67 = arith.constant 0 : index
    %100 = vector.load %arg10[%c2_65, %c0_66, %c0_67] : memref<4x64x128xbf16, #tpu.memory_space<vmem>>, vector<1x64x128xbf16>
    %101 = vector.shape_cast %100 : vector<1x64x128xbf16> to vector<64x128xbf16>
    %cst_68 = arith.constant dense<0.000000e+00> : vector<8x128xf32>
    %102 = tpu.matmul %99, %101, %cst_68 {dimension_numbers = #tpu.dot_dimension_numbers<[1], [0], [0], [1], [0, 0, 1, 1], [], []>} : vector<8x64xbf16>, vector<64x128xbf16>, vector<8x128xf32> -> vector<8x128xf32>
    %103 = arith.addf %97, %102 : vector<8x128xf32>
    %104 = vector.extract_strided_slice %86 {offsets = [0, 3, 0], sizes = [8, 1, 64], strides = [1, 1, 1]} : vector<8x4x64xbf16> to vector<8x1x64xbf16>
    %105 = vector.shape_cast %104 : vector<8x1x64xbf16> to vector<8x64xbf16>
    %c3_69 = arith.constant 3 : index
    %c0_70 = arith.constant 0 : index
    %c0_71 = arith.constant 0 : index
    %106 = vector.load %arg10[%c3_69, %c0_70, %c0_71] : memref<4x64x128xbf16, #tpu.memory_space<vmem>>, vector<1x64x128xbf16>
    %107 = vector.shape_cast %106 : vector<1x64x128xbf16> to vector<64x128xbf16>
    %cst_72 = arith.constant dense<0.000000e+00> : vector<8x128xf32>
    %108 = tpu.matmul %105, %107, %cst_72 {dimension_numbers = #tpu.dot_dimension_numbers<[1], [0], [0], [1], [0, 0, 1, 1], [], []>} : vector<8x64xbf16>, vector<64x128xbf16>, vector<8x128xf32> -> vector<8x128xf32>
    %109 = arith.addf %103, %108 : vector<8x128xf32>
    %c0_73 = arith.constant 0 : index
    %c0_74 = arith.constant 0 : index
    %110 = vector.load %arg11[%c0_73, %c0_74] : memref<1x128xf32, #tpu.memory_space<vmem>>, vector<1x128xf32>
    %111 = vector.broadcast %110 : vector<1x128xf32> to vector<8x128xf32>
    %112 = arith.addf %109, %111 : vector<8x128xf32>
    %cst_75 = arith.constant 0.000000e+00 : f32
    %113 = vector.broadcast %cst_75 : f32 to vector<8x128xf32>
    %114 = arith.maximumf %112, %113 : vector<8x128xf32>
    %115 = arith.truncf %114 : vector<8x128xf32> to vector<8x128xbf16>
    %c0_76 = arith.constant 0 : index
    %c0_77 = arith.constant 0 : index
    %116 = vector.load %arg12[%c0_76, %c0_77] : memref<128x128xbf16, #tpu.memory_space<vmem>>, vector<128x128xbf16>
    %cst_78 = arith.constant dense<0.000000e+00> : vector<8x128xf32>
    %117 = tpu.matmul %115, %116, %cst_78 {dimension_numbers = #tpu.dot_dimension_numbers<[1], [0], [0], [1], [0, 0, 1, 1], [], []>} : vector<8x128xbf16>, vector<128x128xbf16>, vector<8x128xf32> -> vector<8x128xf32>
    %c0_79 = arith.constant 0 : index
    %c0_80 = arith.constant 0 : index
    %118 = vector.load %arg13[%c0_79, %c0_80] : memref<1x128xf32, #tpu.memory_space<vmem>>, vector<1x128xf32>
    %119 = vector.broadcast %118 : vector<1x128xf32> to vector<8x128xf32>
    %120 = arith.addf %117, %119 : vector<8x128xf32>
    %cst_81 = arith.constant 0.000000e+00 : f32
    %121 = vector.broadcast %cst_81 : f32 to vector<8x128xf32>
    %122 = arith.maximumf %120, %121 : vector<8x128xf32>
    %123 = arith.truncf %122 : vector<8x128xf32> to vector<8x128xbf16>
    %c0_82 = arith.constant 0 : index
    %c0_83 = arith.constant 0 : index
    %124 = vector.load %arg14[%c0_82, %c0_83] : memref<128x128xbf16, #tpu.memory_space<vmem>>, vector<128x128xbf16>
    %cst_84 = arith.constant dense<0.000000e+00> : vector<8x128xf32>
    %125 = tpu.matmul %123, %124, %cst_84 {dimension_numbers = #tpu.dot_dimension_numbers<[1], [0], [0], [1], [0, 0, 1, 1], [], []>} : vector<8x128xbf16>, vector<128x128xbf16>, vector<8x128xf32> -> vector<8x128xf32>
    %c0_85 = arith.constant 0 : index
    %c0_86 = arith.constant 0 : index
    %126 = vector.load %arg15[%c0_85, %c0_86] : memref<1x128xf32, #tpu.memory_space<vmem>>, vector<1x128xf32>
    %127 = vector.broadcast %126 : vector<1x128xf32> to vector<8x128xf32>
    %128 = arith.addf %125, %127 : vector<8x128xf32>
    %c0_87 = arith.constant 0 : index
    %c0_88 = arith.constant 0 : index
    %129 = vector.load %arg16[%c0_87, %c0_88] : memref<8x128xf32, #tpu.memory_space<vmem>>, vector<8x128xf32>
    tpu.vector_store %arg16[%c0_87, %c0_88], %128 {strides = array<i32>} : memref<8x128xf32, #tpu.memory_space<vmem>>, vector<8x128xf32>,
    return
  }
  func.func @transform_0(%arg0: i32) -> (i32, i32, i32) {
    %c0_i32 = arith.constant 0 : i32
    %c0_i32_0 = arith.constant 0 : i32
    %c0_i32_1 = arith.constant 0 : i32
    return %arg0, %c0_i32, %c0_i32_0 : i32, i32, i32
  }
  func.func @transform_1(%arg0: i32) -> (i32, i32, i32) {
    %c0_i32 = arith.constant 0 : i32
    %c0_i32_0 = arith.constant 0 : i32
    %c0_i32_1 = arith.constant 0 : i32
    %c0_i32_2 = arith.constant 0 : i32
    return %c0_i32, %c0_i32_0, %c0_i32_1 : i32, i32, i32
  }
  func.func @transform_2(%arg0: i32) -> (i32, i32) {
    %c0_i32 = arith.constant 0 : i32
    %c0_i32_0 = arith.constant 0 : i32
    %c0_i32_1 = arith.constant 0 : i32
    return %c0_i32, %c0_i32_0 : i32, i32
  }
  func.func @transform_3(%arg0: i32) -> (i32, i32) {
    %c0_i32 = arith.constant 0 : i32
    %c0_i32_0 = arith.constant 0 : i32
    %c0_i32_1 = arith.constant 0 : i32
    return %c0_i32, %c0_i32_0 : i32, i32
  }
  func.func @transform_4(%arg0: i32) -> (i32, i32) {
    %c0_i32 = arith.constant 0 : i32
    %c0_i32_0 = arith.constant 0 : i32
    %c0_i32_1 = arith.constant 0 : i32
    return %c0_i32, %c0_i32_0 : i32, i32
  }
  func.func @transform_5(%arg0: i32) -> (i32, i32, i32) {
    %c0_i32 = arith.constant 0 : i32
    %c0_i32_0 = arith.constant 0 : i32
    %c0_i32_1 = arith.constant 0 : i32
    %c0_i32_2 = arith.constant 0 : i32
    return %c0_i32, %c0_i32_0, %c0_i32_1 : i32, i32, i32
  }
  func.func @transform_6(%arg0: i32) -> (i32, i32) {
    %c0_i32 = arith.constant 0 : i32
    %c0_i32_0 = arith.constant 0 : i32
    %c0_i32_1 = arith.constant 0 : i32
    return %c0_i32, %c0_i32_0 : i32, i32
  }
  func.func @transform_7(%arg0: i32) -> (i32, i32) {
    %c0_i32 = arith.constant 0 : i32
    %c0_i32_0 = arith.constant 0 : i32
    %c0_i32_1 = arith.constant 0 : i32
    return %c0_i32, %c0_i32_0 : i32, i32
  }
  func.func @transform_8(%arg0: i32) -> (i32, i32) {
    %c0_i32 = arith.constant 0 : i32
    %c0_i32_0 = arith.constant 0 : i32
    %c0_i32_1 = arith.constant 0 : i32
    return %c0_i32, %c0_i32_0 : i32, i32
  }
  func.func @transform_9(%arg0: i32) -> (i32, i32, i32) {
    %c0_i32 = arith.constant 0 : i32
    %c0_i32_0 = arith.constant 0 : i32
    %c0_i32_1 = arith.constant 0 : i32
    %c0_i32_2 = arith.constant 0 : i32
    return %c0_i32, %c0_i32_0, %c0_i32_1 : i32, i32, i32
  }
  func.func @transform_10(%arg0: i32) -> (i32, i32) {
    %c0_i32 = arith.constant 0 : i32
    %c0_i32_0 = arith.constant 0 : i32
    %c0_i32_1 = arith.constant 0 : i32
    return %c0_i32, %c0_i32_0 : i32, i32
  }
  func.func @transform_11(%arg0: i32) -> (i32, i32) {
    %c0_i32 = arith.constant 0 : i32
    %c0_i32_0 = arith.constant 0 : i32
    %c0_i32_1 = arith.constant 0 : i32
    return %c0_i32, %c0_i32_0 : i32, i32
  }
  func.func @transform_12(%arg0: i32) -> (i32, i32) {
    %c0_i32 = arith.constant 0 : i32
    %c0_i32_0 = arith.constant 0 : i32
    %c0_i32_1 = arith.constant 0 : i32
    return %c0_i32, %c0_i32_0 : i32, i32
  }
  func.func @transform_13(%arg0: i32) -> (i32, i32) {
    %c0_i32 = arith.constant 0 : i32
    %c0_i32_0 = arith.constant 0 : i32
    %c0_i32_1 = arith.constant 0 : i32
    return %c0_i32, %c0_i32_0 : i32, i32
  }
  func.func @transform_14(%arg0: i32) -> (i32, i32) {
    %c0_i32 = arith.constant 0 : i32
    %c0_i32_0 = arith.constant 0 : i32
    %c0_i32_1 = arith.constant 0 : i32
    return %c0_i32, %c0_i32_0 : i32, i32
  }
  func.func @transform_15(%arg0: i32) -> (i32, i32) {
    %c0_i32 = arith.constant 0 : i32
    %c0_i32_0 = arith.constant 0 : i32
    return %arg0, %c0_i32 : i32, i32
  }
}

</mosaic_0001>

<llo_original>
// kernel: net_forward.1
$region0: #{net_forward.1}
  #allocation0 [shape = 'u32[]', space=smem, size = 0x4, offset = 0x4, fixed_abs, tag = 'smem constant byte address 0x4 - core index']
  #allocation1 [shape = 'u32[144,128]{1,0:T(1,128)}', space=vmem, size = 0x12000, scoped, tag = 'internal scratch']
  %s0 = inlined_call_operand.vmem [shape: bf16[16,28,28], index: 0, kind: input, shape index: {}]
  %s1 = inlined_call_operand.vmem [shape: bf16[5,28,144], index: 1, kind: input, shape index: {}]
  %s2 = inlined_call_operand.vmem [shape: f32[1,144], index: 2, kind: input, shape index: {}]
  %s3 = inlined_call_operand.vmem [shape: bf16[144,72], index: 3, kind: input, shape index: {}]
  %s4 = inlined_call_operand.vmem [shape: bf16[144,72], index: 4, kind: input, shape index: {}]
  %s5 = inlined_call_operand.vmem [shape: bf16[5,72,128], index: 5, kind: input, shape index: {}]
  %s6 = inlined_call_operand.vmem [shape: f32[1,128], index: 6, kind: input, shape index: {}]
  %s7 = inlined_call_operand.vmem [shape: bf16[128,64], index: 7, kind: input, shape index: {}]
  %s8 = inlined_call_operand.vmem [shape: bf16[128,64], index: 8, kind: input, shape index: {}]
  %s9 = inlined_call_operand.vmem [shape: bf16[4,64,128], index: 9, kind: input, shape index: {}]
  %s10 = inlined_call_operand.vmem [shape: f32[1,128], index: 10, kind: input, shape index: {}]
  %s11 = inlined_call_operand.vmem [shape: bf16[128,128], index: 11, kind: input, shape index: {}]
  %s12 = inlined_call_operand.vmem [shape: f32[1,128], index: 12, kind: input, shape index: {}]
  %s13 = inlined_call_operand.vmem [shape: bf16[128,128], index: 13, kind: input, shape index: {}]
  %s14 = inlined_call_operand.vmem [shape: f32[1,128], index: 14, kind: input, shape index: {}]
  %s15 = inlined_call_operand.hbm [shape: f32[16,128], index: 15, kind: output, shape index: {}]
  %s16 = sld [smem:[#allocation0]]
  $region93: #{net_forward.1} parent=0
    _
  %s18 = ssub.s32 1, %s16
  %s19 = scalar_select 0, %s18, %s16
  $region1: #{net_forward.1} parent=0
    #allocation2 [shape = 'u8[8192]{0}', space=vmem, size = 0x2000, scoped, tag = 'output window, operand 0']
    #allocation3 [shape = 's32[2]{0}', space=sflag, size = 0x8, scoped, tag = 'scoped memory for net_forward.1']
    %20 = vsyncpa [#allocation3], 0
    %s21 = scalar_lea.sflag [#allocation3], 1
    %22 = vsyncpa %s21, 0
    loop: start=0, step=1, limit=4
    $region2: #{net_forward.1} parent=1 // loop_pre_header
      _
    $region3: #{net_forward.1} parent=1 // loop_header
      %s24 = sphi 0, %s28
      %p25 = scmp.ge.s32.totalorder %s24, 4
      %s34 = sphi 0, %s36
      %s37 = sphi 0, %s34
      %s38 = sphi 0, %s37
      %s54 = sphi 0, %s38
      %s58 = sphi 0, %s58
      %s60 = sphi 0, %s58
      %s61 = sphi 0, %s60
      %s75 = sphi 0, %s61
      %s79 = sphi 0, %s79
      %s81 = sphi 0, %s79
      %s82 = sphi 0, %s81
      %s96 = sphi 0, %s82
      %s100 = sphi 0, %s100
      %s102 = sphi 0, %s100
      %s103 = sphi 0, %s102
      %s117 = sphi 0, %s103
      %s121 = sphi 0, %s121
      %s123 = sphi 0, %s121
      %s124 = sphi 0, %s123
      %s138 = sphi 0, %s124
      %s142 = sphi 0, %s142
      %s144 = sphi 0, %s142
      %s145 = sphi 0, %s144
      %s159 = sphi 0, %s145
      %s163 = sphi 0, %s163
      %s165 = sphi 0, %s163
      %s166 = sphi 0, %s165
      %s180 = sphi 0, %s166
      %s184 = sphi 0, %s184
      %s186 = sphi 0, %s184
      %s187 = sphi 0, %s186
      %s201 = sphi 0, %s187
      %s205 = sphi 0, %s205
      %s207 = sphi 0, %s205
      %s208 = sphi 0, %s207
      %s222 = sphi 0, %s208
      %s226 = sphi 0, %s226
      %s228 = sphi 0, %s226
      %s229 = sphi 0, %s228
      %s243 = sphi 0, %s229
      %s247 = sphi 0, %s247
      %s249 = sphi 0, %s247
      %s250 = sphi 0, %s249
      %s264 = sphi 0, %s250
      %s268 = sphi 0, %s268
      %s270 = sphi 0, %s268
      %s271 = sphi 0, %s270
      %s285 = sphi 0, %s271
      %s289 = sphi 0, %s289
      %s291 = sphi 0, %s289
      %s292 = sphi 0, %s291
      %s306 = sphi 0, %s292
      %s310 = sphi 0, %s310
      %s312 = sphi 0, %s310
      %s313 = sphi 0, %s312
      %s327 = sphi 0, %s313
      %s331 = sphi 0, %s331
      %s333 = sphi 0, %s331
      %s334 = sphi 0, %s333
      %s348 = sphi 0, %s334
      %s354 = sphi 0, %s356
      %s357 = sphi 0, %s354
      %s358 = sphi 0, %s357
      %s374 = sphi 0, %s358
    $region4: #{net_forward.1} parent=1 // loop_header_branch
      %27 = sbr.rel (%p25) target = $region8
    $region5: #{net_forward.1} parent=1 // loop_body
      %s29 = ssub.s32 %s24, 1
      %s30 = ssub.s32 %s24, 2
      %s31 = sadd.s32 %s24, 1
      %s32 = ssub.s32 %s24, %s31
      %p33 = scmp.eq.s32.totalorder %s32, 0
      %s35 = sadd.s32 %s34, 1
      %s36 = scalar_select %p33, %s34, %s35
      %p39 = pneg %p33
      %p40 = scmp.eq.s32.totalorder %s24, 1
      %p41 = por %p39, %p40
      %p42 = scmp.ne.s32.totalorder %s34, %s37
      %p43 = scmp.eq.s32.totalorder %s24, 0
      %p44 = por %p42, %p43
      %p45 = scmp.ne.s32.totalorder %s34, %s37
      %p46 = scmp.eq.s32.totalorder %s29, 1
      %p47 = por %p45, %p46
      %p48 = scmp.ne.s32.totalorder %s37, %s38
      %p49 = scmp.eq.s32.totalorder %s29, 0
      %p50 = por %p48, %p49
      %p51 = scmp.ne.s32.totalorder %s37, %s38
      %p52 = scmp.eq.s32.totalorder %s30, 1
      %p53 = por %p51, %p52
      %p55 = scmp.ne.s32.totalorder %s38, %s54
      %p56 = scmp.eq.s32.totalorder %s30, 0
      %p57 = por %p55, %p56
      %s59 = sadd.s32 %s58, 1
      %p62 = scmp.eq.s32.totalorder %s24, 1
      %p63 = scmp.ne.s32.totalorder %s58, %s60
      %p64 = scmp.eq.s32.totalorder %s24, 0
      %p65 = por %p63, %p64
      %p66 = scmp.ne.s32.totalorder %s58, %s60
      %p67 = scmp.eq.s32.totalorder %s29, 1
      %p68 = por %p66, %p67
      %p69 = scmp.ne.s32.totalorder %s60, %s61
      %p70 = scmp.eq.s32.totalorder %s29, 0
      %p71 = por %p69, %p70
      %p72 = scmp.ne.s32.totalorder %s60, %s61
      %p73 = scmp.eq.s32.totalorder %s30, 1
      %p74 = por %p72, %p73
      %p76 = scmp.ne.s32.totalorder %s61, %s75
      %p77 = scmp.eq.s32.totalorder %s30, 0
      %p78 = por %p76, %p77
      %s80 = sadd.s32 %s79, 1
      %p83 = scmp.eq.s32.totalorder %s24, 1
      %p84 = scmp.ne.s32.totalorder %s79, %s81
      %p85 = scmp.eq.s32.totalorder %s24, 0
      %p86 = por %p84, %p85
      %p87 = scmp.ne.s32.totalorder %s79, %s81
      %p88 = scmp.eq.s32.totalorder %s29, 1
      %p89 = por %p87, %p88
      %p90 = scmp.ne.s32.totalorder %s81, %s82
      %p91 = scmp.eq.s32.totalorder %s29, 0
      %p92 = por %p90, %p91
      %p93 = scmp.ne.s32.totalorder %s81, %s82
      %p94 = scmp.eq.s32.totalorder %s30, 1
      %p95 = por %p93, %p94
      %p97 = scmp.ne.s32.totalorder %s82, %s96
      %p98 = scmp.eq.s32.totalorder %s30, 0
      %p99 = por %p97, %p98
      %s101 = sadd.s32 %s100, 1
      %p104 = scmp.eq.s32.totalorder %s24, 1
      %p105 = scmp.ne.s32.totalorder %s100, %s102
      %p106 = scmp.eq.s32.totalorder %s24, 0
      %p107 = por %p105, %p106
      %p108 = scmp.ne.s32.totalorder %s100, %s102
      %p109 = scmp.eq.s32.totalorder %s29, 1
      %p110 = por %p108, %p109
      %p111 = scmp.ne.s32.totalorder %s102, %s103
      %p112 = scmp.eq.s32.totalorder %s29, 0
      %p113 = por %p111, %p112
      %p114 = scmp.ne.s32.totalorder %s102, %s103
      %p115 = scmp.eq.s32.totalorder %s30, 1
      %p116 = por %p114, %p115
      %p118 = scmp.ne.s32.totalorder %s103, %s117
      %p119 = scmp.eq.s32.totalorder %s30, 0
      %p120 = por %p118, %p119
      %s122 = sadd.s32 %s121, 1
      %p125 = scmp.eq.s32.totalorder %s24, 1
      %p126 = scmp.ne.s32.totalorder %s121, %s123
      %p127 = scmp.eq.s32.totalorder %s24, 0
      %p128 = por %p126, %p127
      %p129 = scmp.ne.s32.totalorder %s121, %s123
      %p130 = scmp.eq.s32.totalorder %s29, 1
      %p131 = por %p129, %p130
      %p132 = scmp.ne.s32.totalorder %s123, %s124
      %p133 = scmp.eq.s32.totalorder %s29, 0
      %p134 = por %p132, %p133
      %p135 = scmp.ne.s32.totalorder %s123, %s124
      %p136 = scmp.eq.s32.totalorder %s30, 1
      %p137 = por %p135, %p136
      %p139 = scmp.ne.s32.totalorder %s124, %s138
      %p140 = scmp.eq.s32.totalorder %s30, 0
      %p141 = por %p139, %p140
      %s143 = sadd.s32 %s142, 1
      %p146 = scmp.eq.s32.totalorder %s24, 1
      %p147 = scmp.ne.s32.totalorder %s142, %s144
      %p148 = scmp.eq.s32.totalorder %s24, 0
      %p149 = por %p147, %p148
      %p150 = scmp.ne.s32.totalorder %s142, %s144
      %p151 = scmp.eq.s32.totalorder %s29, 1
      %p152 = por %p150, %p151
      %p153 = scmp.ne.s32.totalorder %s144, %s145
      %p154 = scmp.eq.s32.totalorder %s29, 0
      %p155 = por %p153, %p154
      %p156 = scmp.ne.s32.totalorder %s144, %s145
      %p157 = scmp.eq.s32.totalorder %s30, 1
      %p158 = por %p156, %p157
      %p160 = scmp.ne.s32.totalorder %s145, %s159
      %p161 = scmp.eq.s32.totalorder %s30, 0
      %p162 = por %p160, %p161
      %s164 = sadd.s32 %s163, 1
      %p167 = scmp.eq.s32.totalorder %s24, 1
      %p168 = scmp.ne.s32.totalorder %s163, %s165
      %p169 = scmp.eq.s32.totalorder %s24, 0
      %p170 = por %p168, %p169
      %p171 = scmp.ne.s32.totalorder %s163, %s165
      %p172 = scmp.eq.s32.totalorder %s29, 1
      %p173 = por %p171, %p172
      %p174 = scmp.ne.s32.totalorder %s165, %s166
      %p175 = scmp.eq.s32.totalorder %s29, 0
      %p176 = por %p174, %p175
      %p177 = scmp.ne.s32.totalorder %s165, %s166
      %p178 = scmp.eq.s32.totalorder %s30, 1
      %p179 = por %p177, %p178
      %p181 = scmp.ne.s32.totalorder %s166, %s180
      %p182 = scmp.eq.s32.totalorder %s30, 0
      %p183 = por %p181, %p182
      %s185 = sadd.s32 %s184, 1
      %p188 = scmp.eq.s32.totalorder %s24, 1
      %p189 = scmp.ne.s32.totalorder %s184, %s186
      %p190 = scmp.eq.s32.totalorder %s24, 0
      %p191 = por %p189, %p190
      %p192 = scmp.ne.s32.totalorder %s184, %s186
      %p193 = scmp.eq.s32.totalorder %s29, 1
      %p194 = por %p192, %p193
      %p195 = scmp.ne.s32.totalorder %s186, %s187
      %p196 = scmp.eq.s32.totalorder %s29, 0
      %p197 = por %p195, %p196
      %p198 = scmp.ne.s32.totalorder %s186, %s187
      %p199 = scmp.eq.s32.totalorder %s30, 1
      %p200 = por %p198, %p199
      %p202 = scmp.ne.s32.totalorder %s187, %s201
      %p203 = scmp.eq.s32.totalorder %s30, 0
      %p204 = por %p202, %p203
      %s206 = sadd.s32 %s205, 1
      %p209 = scmp.eq.s32.totalorder %s24, 1
      %p210 = scmp.ne.s32.totalorder %s205, %s207
      %p211 = scmp.eq.s32.totalorder %s24, 0
      %p212 = por %p210, %p211
      %p213 = scmp.ne.s32.totalorder %s205, %s207
      %p214 = scmp.eq.s32.totalorder %s29, 1
      %p215 = por %p213, %p214
      %p216 = scmp.ne.s32.totalorder %s207, %s208
      %p217 = scmp.eq.s32.totalorder %s29, 0
      %p218 = por %p216, %p217
      %p219 = scmp.ne.s32.totalorder %s207, %s208
      %p220 = scmp.eq.s32.totalorder %s30, 1
      %p221 = por %p219, %p220
      %p223 = scmp.ne.s32.totalorder %s208, %s222
      %p224 = scmp.eq.s32.totalorder %s30, 0
      %p225 = por %p223, %p224
      %s227 = sadd.s32 %s226, 1
      %p230 = scmp.eq.s32.totalorder %s24, 1
      %p231 = scmp.ne.s32.totalorder %s226, %s228
      %p232 = scmp.eq.s32.totalorder %s24, 0
      %p233 = por %p231, %p232
      %p234 = scmp.ne.s32.totalorder %s226, %s228
      %p235 = scmp.eq.s32.totalorder %s29, 1
      %p236 = por %p234, %p235
      %p237 = scmp.ne.s32.totalorder %s228, %s229
      %p238 = scmp.eq.s32.totalorder %s29, 0
      %p239 = por %p237, %p238
      %p240 = scmp.ne.s32.totalorder %s228, %s229
      %p241 = scmp.eq.s32.totalorder %s30, 1
      %p242 = por %p240, %p241
      %p244 = scmp.ne.s32.totalorder %s229, %s243
      %p245 = scmp.eq.s32.totalorder %s30, 0
      %p246 = por %p244, %p245
      %s248 = sadd.s32 %s247, 1
      %p251 = scmp.eq.s32.totalorder %s24, 1
      %p252 = scmp.ne.s32.totalorder %s247, %s249
      %p253 = scmp.eq.s32.totalorder %s24, 0
      %p254 = por %p252, %p253
      %p255 = scmp.ne.s32.totalorder %s247, %s249
      %p256 = scmp.eq.s32.totalorder %s29, 1
      %p257 = por %p255, %p256
      %p258 = scmp.ne.s32.totalorder %s249, %s250
      %p259 = scmp.eq.s32.totalorder %s29, 0
      %p260 = por %p258, %p259
      %p261 = scmp.ne.s32.totalorder %s249, %s250
      %p262 = scmp.eq.s32.totalorder %s30, 1
      %p263 = por %p261, %p262
      %p265 = scmp.ne.s32.totalorder %s250, %s264
      %p266 = scmp.eq.s32.totalorder %s30, 0
      %p267 = por %p265, %p266
      %s269 = sadd.s32 %s268, 1
      %p272 = scmp.eq.s32.totalorder %s24, 1
      %p273 = scmp.ne.s32.totalorder %s268, %s270
      %p274 = scmp.eq.s32.totalorder %s24, 0
      %p275 = por %p273, %p274
      %p276 = scmp.ne.s32.totalorder %s268, %s270
      %p277 = scmp.eq.s32.totalorder %s29, 1
      %p278 = por %p276, %p277
      %p279 = scmp.ne.s32.totalorder %s270, %s271
      %p280 = scmp.eq.s32.totalorder %s29, 0
      %p281 = por %p279, %p280
      %p282 = scmp.ne.s32.totalorder %s270, %s271
      %p283 = scmp.eq.s32.totalorder %s30, 1
      %p284 = por %p282, %p283
      %p286 = scmp.ne.s32.totalorder %s271, %s285
      %p287 = scmp.eq.s32.totalorder %s30, 0
      %p288 = por %p286, %p287
      %s290 = sadd.s32 %s289, 1
      %p293 = scmp.eq.s32.totalorder %s24, 1
      %p294 = scmp.ne.s32.totalorder %s289, %s291
      %p295 = scmp.eq.s32.totalorder %s24, 0
      %p296 = por %p294, %p295
      %p297 = scmp.ne.s32.totalorder %s289, %s291
      %p298 = scmp.eq.s32.totalorder %s29, 1
      %p299 = por %p297, %p298
      %p300 = scmp.ne.s32.totalorder %s291, %s292
      %p301 = scmp.eq.s32.totalorder %s29, 0
      %p302 = por %p300, %p301
      %p303 = scmp.ne.s32.totalorder %s291, %s292
      %p304 = scmp.eq.s32.totalorder %s30, 1
      %p305 = por %p303, %p304
      %p307 = scmp.ne.s32.totalorder %s292, %s306
      %p308 = scmp.eq.s32.totalorder %s30, 0
      %p309 = por %p307, %p308
      %s311 = sadd.s32 %s310, 1
      %p314 = scmp.eq.s32.totalorder %s24, 1
      %p315 = scmp.ne.s32.totalorder %s310, %s312
      %p316 = scmp.eq.s32.totalorder %s24, 0
      %p317 = por %p315, %p316
      %p318 = scmp.ne.s32.totalorder %s310, %s312
      %p319 = scmp.eq.s32.totalorder %s29, 1
      %p320 = por %p318, %p319
      %p321 = scmp.ne.s32.totalorder %s312, %s313
      %p322 = scmp.eq.s32.totalorder %s29, 0
      %p323 = por %p321, %p322
      %p324 = scmp.ne.s32.totalorder %s312, %s313
      %p325 = scmp.eq.s32.totalorder %s30, 1
      %p326 = por %p324, %p325
      %p328 = scmp.ne.s32.totalorder %s313, %s327
      %p329 = scmp.eq.s32.totalorder %s30, 0
      %p330 = por %p328, %p329
      %s332 = sadd.s32 %s331, 1
      %p335 = scmp.eq.s32.totalorder %s24, 1
      %p336 = scmp.ne.s32.totalorder %s331, %s333
      %p337 = scmp.eq.s32.totalorder %s24, 0
      %p338 = por %p336, %p337
      %p339 = scmp.ne.s32.totalorder %s331, %s333
      %p340 = scmp.eq.s32.totalorder %s29, 1
      %p341 = por %p339, %p340
      %p342 = scmp.ne.s32.totalorder %s333, %s334
      %p343 = scmp.eq.s32.totalorder %s29, 0
      %p344 = por %p342, %p343
      %p345 = scmp.ne.s32.totalorder %s333, %s334
      %p346 = scmp.eq.s32.totalorder %s30, 1
      %p347 = por %p345, %p346
      %p349 = scmp.ne.s32.totalorder %s334, %s348
      %p350 = scmp.eq.s32.totalorder %s30, 0
      %p351 = por %p349, %p350
      %s352 = ssub.s32 %s24, %s31
      %p353 = scmp.eq.s32.totalorder %s352, 0
      %s355 = sadd.s32 %s354, 1
      %s356 = scalar_select %p353, %s354, %s355
      %p359 = pneg %p353
      %p360 = scmp.eq.s32.totalorder %s24, 1
      %p361 = por %p359, %p360
      %p362 = scmp.ne.s32.totalorder %s354, %s357
      %p363 = scmp.eq.s32.totalorder %s24, 0
      %p364 = por %p362, %p363
      %p365 = scmp.ne.s32.totalorder %s354, %s357
      %p366 = scmp.eq.s32.totalorder %s29, 1
      %p367 = por %p365, %p366
      %p368 = scmp.ne.s32.totalorder %s357, %s358
      %p369 = scmp.eq.s32.totalorder %s29, 0
      %p370 = por %p368, %p369
      %p371 = scmp.ne.s32.totalorder %s357, %s358
      %p372 = scmp.eq.s32.totalorder %s30, 1
      %p373 = por %p371, %p372
      %p375 = scmp.ne.s32.totalorder %s358, %s374
      %p376 = scmp.eq.s32.totalorder %s30, 0
      %p377 = por %p375, %p376
      %p378 = scmp.le.s32.totalorder 1, %s24
      %p379 = scmp.lt.s32.totalorder %s24, 3
      %p380 = pnand %p378, %p379
      %p381 = pneg %p380
      // Predicated region
      $region9: #{net_forward.1} parent=5 // pred_check
        _
      $region10: #{net_forward.1} parent=5 // pred_check_branch
        %383 = sbr.rel (%p380) target = $region12
      $region11: #{net_forward.1} parent=5 // pred_region
        %s384 = ssub.s32 %s24, 1
        // Predicated region
        $region13: #{net_forward.1} parent=11 // pred_check
          %p385 = pneg %p71
        $region14: #{net_forward.1} parent=11 // pred_check_branch
          %387 = sbr.rel (%p385) target = $region16
        $region15: #{net_forward.1} parent=11 // pred_region
          _
        $region16: #{net_forward.1} parent=11 // pred_fallthru
          _
        // Predicated region
        $region17: #{net_forward.1} parent=11 // pred_check
          %p388 = pneg %p92
        $region18: #{net_forward.1} parent=11 // pred_check_branch
          %390 = sbr.rel (%p388) target = $region20
        $region19: #{net_forward.1} parent=11 // pred_region
          _
        $region20: #{net_forward.1} parent=11 // pred_fallthru
          _
        // Predicated region
        $region21: #{net_forward.1} parent=11 // pred_check
          %p391 = pneg %p113
        $region22: #{net_forward.1} parent=11 // pred_check_branch
          %393 = sbr.rel (%p391) target = $region24
        $region23: #{net_forward.1} parent=11 // pred_region
          _
        $region24: #{net_forward.1} parent=11 // pred_fallthru
          _
        // Predicated region
        $region25: #{net_forward.1} parent=11 // pred_check
          %p394 = pneg %p134
        $region26: #{net_forward.1} parent=11 // pred_check_branch
          %396 = sbr.rel (%p394) target = $region28
        $region27: #{net_forward.1} parent=11 // pred_region
          _
        $region28: #{net_forward.1} parent=11 // pred_fallthru
          _
        // Predicated region
        $region29: #{net_forward.1} parent=11 // pred_check
          %p397 = pneg %p155
        $region30: #{net_forward.1} parent=11 // pred_check_branch
          %399 = sbr.rel (%p397) target = $region32
        $region31: #{net_forward.1} parent=11 // pred_region
          _
        $region32: #{net_forward.1} parent=11 // pred_fallthru
          _
        // Predicated region
        $region33: #{net_forward.1} parent=11 // pred_check
          %p400 = pneg %p176
        $region34: #{net_forward.1} parent=11 // pred_check_branch
          %402 = sbr.rel (%p400) target = $region36
        $region35: #{net_forward.1} parent=11 // pred_region
          _
        $region36: #{net_forward.1} parent=11 // pred_fallthru
          _
        // Predicated region
        $region37: #{net_forward.1} parent=11 // pred_check
          %p403 = pneg %p197
        $region38: #{net_forward.1} parent=11 // pred_check_branch
          %405 = sbr.rel (%p403) target = $region40
        $region39: #{net_forward.1} parent=11 // pred_region
          _
        $region40: #{net_forward.1} parent=11 // pred_fallthru
          _
        // Predicated region
        $region41: #{net_forward.1} parent=11 // pred_check
          %p406 = pneg %p218
        $region42: #{net_forward.1} parent=11 // pred_check_branch
          %408 = sbr.rel (%p406) target = $region44
        $region43: #{net_forward.1} parent=11 // pred_region
          _
        $region44: #{net_forward.1} parent=11 // pred_fallthru
          _
        // Predicated region
        $region45: #{net_forward.1} parent=11 // pred_check
          %p409 = pneg %p239
        $region46: #{net_forward.1} parent=11 // pred_check_branch
          %411 = sbr.rel (%p409) target = $region48
        $region47: #{net_forward.1} parent=11 // pred_region
          _
        $region48: #{net_forward.1} parent=11 // pred_fallthru
          _
        // Predicated region
        $region49: #{net_forward.1} parent=11 // pred_check
          %p412 = pneg %p260
        $region50: #{net_forward.1} parent=11 // pred_check_branch
          %414 = sbr.rel (%p412) target = $region52
        $region51: #{net_forward.1} parent=11 // pred_region
          _
        $region52: #{net_forward.1} parent=11 // pred_fallthru
          _
        // Predicated region
        $region53: #{net_forward.1} parent=11 // pred_check
          %p415 = pneg %p281
        $region54: #{net_forward.1} parent=11 // pred_check_branch
          %417 = sbr.rel (%p415) target = $region56
        $region55: #{net_forward.1} parent=11 // pred_region
          _
        $region56: #{net_forward.1} parent=11 // pred_fallthru
          _
        // Predicated region
        $region57: #{net_forward.1} parent=11 // pred_check
          %p418 = pneg %p302
        $region58: #{net_forward.1} parent=11 // pred_check_branch
          %420 = sbr.rel (%p418) target = $region60
        $region59: #{net_forward.1} parent=11 // pred_region
          _
        $region60: #{net_forward.1} parent=11 // pred_fallthru
          _
        // Predicated region
        $region61: #{net_forward.1} parent=11 // pred_check
          %p421 = pneg %p323
        $region62: #{net_forward.1} parent=11 // pred_check_branch
          %423 = sbr.rel (%p421) target = $region64
        $region63: #{net_forward.1} parent=11 // pred_region
          _
        $region64: #{net_forward.1} parent=11 // pred_fallthru
          _
        // Predicated region
        $region65: #{net_forward.1} parent=11 // pred_check
          %p424 = pneg %p344
        $region66: #{net_forward.1} parent=11 // pred_check_branch
          %426 = sbr.rel (%p424) target = $region68
        $region67: #{net_forward.1} parent=11 // pred_region
          _
        $region68: #{net_forward.1} parent=11 // pred_fallthru
          _
      $region12: #{net_forward.1} parent=5 // pred_fallthru
        _
      %p427 = scmp.lt.s32.totalorder %s24, 2
      // Predicated region
      $region69: #{net_forward.1} parent=5 // pred_check
        %p428 = pneg %p427
      $region70: #{net_forward.1} parent=5 // pred_check_branch
        %430 = sbr.rel (%p428) target = $region72
      $region71: #{net_forward.1} parent=5 // pred_region
        // Predicated region
        $region73: #{net_forward.1} parent=71 // pred_check
          %p431 = pneg %p44
        $region74: #{net_forward.1} parent=71 // pred_check_branch
          %433 = sbr.rel (%p431) target = $region76
        $region75: #{net_forward.1} parent=71 // pred_region
          %s434 = smul.u32 8, %s24
          %p435 = scmp.lt.s32.totalorder %s434, 15
          %s436 = scalar_select %p435, %s434, 15
          %s437 = smul.addr %s436, 4
          %s438 = smul.addr %s437, 4
          %s439 = scalar_lea.vmem %s0, %s438
          %s440 = smul.u32 8, %s24
        $region76: #{net_forward.1} parent=71 // pred_fallthru
          _
      $region72: #{net_forward.1} parent=5 // pred_fallthru
        _
      %p441 = scmp.le.s32.totalorder 1, %s24
      %p442 = scmp.lt.s32.totalorder %s24, 3
      %p443 = pnand %p441, %p442
      %p444 = pneg %p443
      // Predicated region
      $region77: #{net_forward.1} parent=5 // pred_check
        _
      $region78: #{net_forward.1} parent=5 // pred_check_branch
        %446 = sbr.rel (%p443) target = $region80
      $region79: #{net_forward.1} parent=5 // pred_region
        %s447 = ssub.s32 %s24, 1
        %s448 = smul.u32 8, %s29
        %p449 = scmp.lt.s32.totalorder %s448, 15
        %s450 = scalar_select %p449, %s448, 15
        %s451 = smul.addr %s450, 4
        %s452 = smul.addr %s451, 4
        %s453 = scalar_lea.vmem %s0, %s452
        %p454 = pneg %p50
        %p455 = pneg %p47
        %p456 = pneg %p71
        %p457 = pneg %p68
        %p458 = pneg %p92
        %p459 = pneg %p89
        %p460 = pneg %p113
        %p461 = pneg %p110
        %p462 = pneg %p134
        %p463 = pneg %p131
        %p464 = pneg %p155
        %p465 = pneg %p152
        %p466 = pneg %p176
        %p467 = pneg %p173
        %p468 = pneg %p197
        %p469 = pneg %p194
        %p470 = pneg %p218
        %p471 = pneg %p215
        %p472 = pneg %p239
        %p473 = pneg %p236
        %p474 = pneg %p260
        %p475 = pneg %p257
        %p476 = pneg %p281
        %p477 = pneg %p278
        %p478 = pneg %p302
        %p479 = pneg %p299
        %p480 = pneg %p323
        %p481 = pneg %p320
        %p482 = pneg %p344
        %p483 = pneg %p341
        %p484 = pneg %p370
        %p485 = pneg %p367
        %s486 = sand.u32 %s357, 1
        %s487 = scalar_lea.sflag [#allocation3], %s486
        %s488 = sand.u32 %s357, 1
        %s489 = smul.addr %s488, 8
        %s490 = scalar_lea.vmem [#allocation2], %s489
        %s491 = smul.u32 8, %s29
        %p492 = scmp.lt.s32.totalorder %s491, 15
        %s493 = scalar_select %p492, %s491, 15
        %s494 = smul.addr %s493, 4
        %s495 = smul.addr %s494, 4
        %s496 = scalar_lea.vmem %s0, %s495
        %s497 = smul.u32 8, %s29
        %v499 = vld [vmem:[%s496] sm:$0xf]
        %v500 = vld [vmem:[%s496 + $0x4] sm:$0xf]
        %v501 = vld [vmem:[%s496 + $0x8] sm:$0xf]
        %v502 = vld [vmem:[%s496 + $0xc] sm:$0x3]
        %v503 = vld [vmem:[%s496 + $0x10] sm:$0xf]
        %v504 = vld [vmem:[%s496 + $0x14] sm:$0xf]
        %v505 = vld [vmem:[%s496 + $0x18] sm:$0xf]
        %v506 = vld [vmem:[%s496 + $0x1c] sm:$0x3]
        %v507 = vld [vmem:[%s496 + $0x20] sm:$0xf]
        %v508 = vld [vmem:[%s496 + $0x24] sm:$0xf]
        %v509 = vld [vmem:[%s496 + $0x28] sm:$0xf]
        %v510 = vld [vmem:[%s496 + $0x2c] sm:$0x3]
        %v511 = vld [vmem:[%s496 + $0x30] sm:$0xf]
        %v512 = vld [vmem:[%s496 + $0x34] sm:$0xf]
        %v513 = vld [vmem:[%s496 + $0x38] sm:$0xf]
        %v514 = vld [vmem:[%s496 + $0x3c] sm:$0x3]
        %v515 = vld [vmem:[%s496 + $0x40] sm:$0xf]
        %v516 = vld [vmem:[%s496 + $0x44] sm:$0xf]
        %v517 = vld [vmem:[%s496 + $0x48] sm:$0xf]
        %v518 = vld [vmem:[%s496 + $0x4c] sm:$0x3]
        %v519 = vld [vmem:[%s496 + $0x50] sm:$0xf]
        %v520 = vld [vmem:[%s496 + $0x54] sm:$0xf]
        %v521 = vld [vmem:[%s496 + $0x58] sm:$0xf]
        %v522 = vld [vmem:[%s496 + $0x5c] sm:$0x3]
        %v523 = vld [vmem:[%s496 + $0x60] sm:$0xf]
        %v524 = vld [vmem:[%s496 + $0x64] sm:$0xf]
        %v525 = vld [vmem:[%s496 + $0x68] sm:$0xf]
        %v526 = vld [vmem:[%s496 + $0x6c] sm:$0x3]
        %v527 = vld [vmem:[%s496 + $0x70] sm:$0xf]
        %v528 = vld [vmem:[%s496 + $0x74] sm:$0xf]
        %v529 = vld [vmem:[%s496 + $0x78] sm:$0xf]
        %v530 = vld [vmem:[%s496 + $0x7c] sm:$0x3]
        %v531 = vld [vmem:[%s1] sm:$0xff]
        %v532 = vld [vmem:[%s1 + $0x8] sm:$0xff]
        %v533 = vld [vmem:[%s1 + $0x10] sm:$0xff]
        %v534 = vld [vmem:[%s1 + $0x18] sm:$0x33]
        %vm535 = vsmask.f32 3328
        %vm536 = vsmask.f32 7440
        %vm537 = vmor %vm535, %vm536
        %v539 = vshrl.u32 %v499, 16
        %v541 = vrot.slane %v539, 4
        %v542 = vshll.u32 %v499, 16
        %v544 = vrot.slane %v542, 5
        %v545 = vor.u32 %v541, %v544
        %v546 = vrot.slane %v545, 4
        %v548 = vshll.u32 %v500, 16
        %v550 = vrot.slane %v548, 5
        %v551 = vsel %vm537, %v546, %v550
        %v552 = vshrl.u32 %v500, 16
        %v554 = vrot.slane %v552, 4
        %v555 = vor.u32 %v554, %v550
        %v556 = vrot.slane %v555, 4
        %v558 = vshll.u32 %v501, 16
        %v560 = vrot.slane %v558, 5
        %v561 = vsel %vm537, %v556, %v560
        %v562 = vshrl.u32 %v501, 16
        %v564 = vrot.slane %v562, 4
        %v565 = vor.u32 %v564, %v560
        %v566 = vrot.slane %v565, 4
        %v568 = vshll.u32 %v502, 16
        %v570 = vrot.slane %v568, 5
        %v571 = vsel %vm537, %v566, %v570
        %v573 = vshrl.u32 %v503, 16
        %v575 = vrot.slane %v573, 4
        %v576 = vshll.u32 %v503, 16
        %v578 = vrot.slane %v576, 5
        %v579 = vor.u32 %v575, %v578
        %v580 = vrot.slane %v579, 4
        %v582 = vshll.u32 %v504, 16
        %v584 = vrot.slane %v582, 5
        %v585 = vsel %vm537, %v580, %v584
        %v586 = vshrl.u32 %v504, 16
        %v588 = vrot.slane %v586, 4
        %v589 = vor.u32 %v588, %v584
        %v590 = vrot.slane %v589, 4
        %v592 = vshll.u32 %v505, 16
        %v594 = vrot.slane %v592, 5
        %v595 = vsel %vm537, %v590, %v594
        %v596 = vshrl.u32 %v505, 16
        %v598 = vrot.slane %v596, 4
        %v599 = vor.u32 %v598, %v594
        %v600 = vrot.slane %v599, 4
        %v602 = vshll.u32 %v506, 16
        %v604 = vrot.slane %v602, 5
        %v605 = vsel %vm537, %v600, %v604
        %v607 = vshrl.u32 %v507, 16
        %v609 = vrot.slane %v607, 4
        %v610 = vshll.u32 %v507, 16
        %v612 = vrot.slane %v610, 5
        %v613 = vor.u32 %v609, %v612
        %v614 = vrot.slane %v613, 4
        %v616 = vshll.u32 %v508, 16
        %v618 = vrot.slane %v616, 5
        %v619 = vsel %vm537, %v614, %v618
        %v620 = vshrl.u32 %v508, 16
        %v622 = vrot.slane %v620, 4
        %v623 = vor.u32 %v622, %v618
        %v624 = vrot.slane %v623, 4
        %v626 = vshll.u32 %v509, 16
        %v628 = vrot.slane %v626, 5
        %v629 = vsel %vm537, %v624, %v628
        %v630 = vshrl.u32 %v509, 16
        %v632 = vrot.slane %v630, 4
        %v633 = vor.u32 %v632, %v628
        %v634 = vrot.slane %v633, 4
        %v636 = vshll.u32 %v510, 16
        %v638 = vrot.slane %v636, 5
        %v639 = vsel %vm537, %v634, %v638
        %v641 = vshrl.u32 %v511, 16
        %v643 = vrot.slane %v641, 4
        %v644 = vshll.u32 %v511, 16
        %v646 = vrot.slane %v644, 5
        %v647 = vor.u32 %v643, %v646
        %v648 = vrot.slane %v647, 4
        %v650 = vshll.u32 %v512, 16
        %v652 = vrot.slane %v650, 5
        %v653 = vsel %vm537, %v648, %v652
        %v654 = vshrl.u32 %v512, 16
        %v656 = vrot.slane %v654, 4
        %v657 = vor.u32 %v656, %v652
        %v658 = vrot.slane %v657, 4
        %v660 = vshll.u32 %v513, 16
        %v662 = vrot.slane %v660, 5
        %v663 = vsel %vm537, %v658, %v662
        %v664 = vshrl.u32 %v513, 16
        %v666 = vrot.slane %v664, 4
        %v667 = vor.u32 %v666, %v662
        %v668 = vrot.slane %v667, 4
        %v670 = vshll.u32 %v514, 16
        %v672 = vrot.slane %v670, 5
        %v673 = vsel %vm537, %v668, %v672
        %v675 = vshrl.u32 %v515, 16
        %v677 = vrot.slane %v675, 4
        %v678 = vshll.u32 %v515, 16
        %v680 = vrot.slane %v678, 5
        %v681 = vor.u32 %v677, %v680
        %v682 = vrot.slane %v681, 4
        %v684 = vshll.u32 %v516, 16
        %v686 = vrot.slane %v684, 5
        %v687 = vsel %vm537, %v682, %v686
        %v688 = vshrl.u32 %v516, 16
        %v690 = vrot.slane %v688, 4
        %v691 = vor.u32 %v690, %v686
        %v692 = vrot.slane %v691, 4
        %v694 = vshll.u32 %v517, 16
        %v696 = vrot.slane %v694, 5
        %v697 = vsel %vm537, %v692, %v696
        %v698 = vshrl.u32 %v517, 16
        %v700 = vrot.slane %v698, 4
        %v701 = vor.u32 %v700, %v696
        %v702 = vrot.slane %v701, 4
        %v704 = vshll.u32 %v518, 16
        %v706 = vrot.slane %v704, 5
        %v707 = vsel %vm537, %v702, %v706
        %v709 = vshrl.u32 %v519, 16
        %v711 = vrot.slane %v709, 4
        %v712 = vshll.u32 %v519, 16
        %v714 = vrot.slane %v712, 5
        %v715 = vor.u32 %v711, %v714
        %v716 = vrot.slane %v715, 4
        %v718 = vshll.u32 %v520, 16
        %v720 = vrot.slane %v718, 5
        %v721 = vsel %vm537, %v716, %v720
        %v722 = vshrl.u32 %v520, 16
        %v724 = vrot.slane %v722, 4
        %v725 = vor.u32 %v724, %v720
        %v726 = vrot.slane %v725, 4
        %v728 = vshll.u32 %v521, 16
        %v730 = vrot.slane %v728, 5
        %v731 = vsel %vm537, %v726, %v730
        %v732 = vshrl.u32 %v521, 16
        %v734 = vrot.slane %v732, 4
        %v735 = vor.u32 %v734, %v730
        %v736 = vrot.slane %v735, 4
        %v738 = vshll.u32 %v522, 16
        %v740 = vrot.slane %v738, 5
        %v741 = vsel %vm537, %v736, %v740
        %v743 = vshrl.u32 %v523, 16
        %v745 = vrot.slane %v743, 4
        %v746 = vshll.u32 %v523, 16
        %v748 = vrot.slane %v746, 5
        %v749 = vor.u32 %v745, %v748
        %v750 = vrot.slane %v749, 4
        %v752 = vshll.u32 %v524, 16
        %v754 = vrot.slane %v752, 5
        %v755 = vsel %vm537, %v750, %v754
        %v756 = vshrl.u32 %v524, 16
        %v758 = vrot.slane %v756, 4
        %v759 = vor.u32 %v758, %v754
        %v760 = vrot.slane %v759, 4
        %v762 = vshll.u32 %v525, 16
        %v764 = vrot.slane %v762, 5
        %v765 = vsel %vm537, %v760, %v764
        %v766 = vshrl.u32 %v525, 16
        %v768 = vrot.slane %v766, 4
        %v769 = vor.u32 %v768, %v764
        %v770 = vrot.slane %v769, 4
        %v772 = vshll.u32 %v526, 16
        %v774 = vrot.slane %v772, 5
        %v775 = vsel %vm537, %v770, %v774
        %v777 = vshrl.u32 %v527, 16
        %v779 = vrot.slane %v777, 4
        %v780 = vshll.u32 %v527, 16
        %v782 = vrot.slane %v780, 5
        %v783 = vor.u32 %v779, %v782
        %v784 = vrot.slane %v783, 4
        %v786 = vshll.u32 %v528, 16
        %v788 = vrot.slane %v786, 5
        %v789 = vsel %vm537, %v784, %v788
        %v790 = vshrl.u32 %v528, 16
        %v792 = vrot.slane %v790, 4
        %v793 = vor.u32 %v792, %v788
        %v794 = vrot.slane %v793, 4
        %v796 = vshll.u32 %v529, 16
        %v798 = vrot.slane %v796, 5
        %v799 = vsel %vm537, %v794, %v798
        %v800 = vshrl.u32 %v529, 16
        %v802 = vrot.slane %v800, 4
        %v803 = vor.u32 %v802, %v798
        %v804 = vrot.slane %v803, 4
        %v806 = vshll.u32 %v530, 16
        %v808 = vrot.slane %v806, 5
        %v809 = vsel %vm537, %v804, %v808
        %s810 = scalar_lea.vmem %s1, 32
        %v811 = vld [vmem:[%s810] sm:$0xff]
        %v812 = vld [vmem:[%s810 + $0x8] sm:$0xff]
        %v813 = vld [vmem:[%s810 + $0x10] sm:$0xff]
        %v814 = vld [vmem:[%s810 + $0x18] sm:$0x33]
        %v815 = vunpack.c.l.b16 %v551
        %v816 = vunpack.c.l.b16 %v561
        %v817 = vunpack.c.l.b16 %v571
        %v818 = vunpack.c.l.b16 %v585
        %v819 = vunpack.c.l.b16 %v595
        %v820 = vunpack.c.l.b16 %v605
        %v821 = vunpack.c.l.b16 %v619
        %v822 = vunpack.c.l.b16 %v629
        %v823 = vunpack.c.l.b16 %v639
        %v824 = vunpack.c.l.b16 %v653
        %v825 = vunpack.c.l.b16 %v663
        %v826 = vunpack.c.l.b16 %v673
        %v827 = vunpack.c.l.b16 %v687
        %v828 = vunpack.c.l.b16 %v697
        %v829 = vunpack.c.l.b16 %v707
        %v830 = vunpack.c.l.b16 %v721
        %v831 = vunpack.c.l.b16 %v731
        %v832 = vunpack.c.l.b16 %v741
        %v833 = vunpack.c.l.b16 %v755
        %v834 = vunpack.c.l.b16 %v765
        %v835 = vunpack.c.l.b16 %v775
        %v836 = vunpack.c.l.b16 %v789
        %v837 = vunpack.c.l.b16 %v799
        %v838 = vunpack.c.l.b16 %v809
        %v839 = vpack.c.b16 %v816, %v815
        %v840 = vpack.c.b16 %v818, %v817
        %v841 = vpack.c.b16 %v820, %v819
        %v842 = vpack.c.b16 %v822, %v821
        %v843 = vpack.c.b16 %v824, %v823
        %v844 = vpack.c.b16 %v826, %v825
        %v845 = vpack.c.b16 %v828, %v827
        %v846 = vpack.c.b16 %v830, %v829
        %v847 = vpack.c.b16 %v832, %v831
        %v848 = vpack.c.b16 %v834, %v833
        %v849 = vpack.c.b16 %v836, %v835
        %v850 = vpack.c.b16 %v838, %v837
        %v855 = vunpack.c.l.b16 %v811
        %v856 = vunpack.c.h.b16 %v811
        %v857 = vunpack.c.l.b16 %v812
        %v858 = vunpack.c.h.b16 %v812
        %v859 = vunpack.c.l.b16 %v813
        %v860 = vunpack.c.h.b16 %v813
        %v861 = vunpack.c.l.b16 %v814
        %v862 = vunpack.c.h.b16 %v814
        %v863 = vpack.c.b16 %v857, %v855
        %v864 = vpack.c.b16 %v858, %v856
        %v865 = vpack.c.b16 %v861, %v859
        %v866 = vpack.c.b16 %v862, %v860
        %vm869 = vcmask 228352
        %v871 = vsel %vm869, %v839, 0
        %v874 = vsel %vm869, %v840, 0
        %v877 = vsel %vm869, %v841, 0
        %v880 = vsel %vm869, %v842, 0
        %v883 = vsel %vm869, %v843, 0
        %v886 = vsel %vm869, %v844, 0
        %v889 = vsel %vm869, %v845, 0
        %v892 = vsel %vm869, %v846, 0
        %v895 = vsel %vm869, %v847, 0
        %v898 = vsel %vm869, %v848, 0
        %v901 = vsel %vm869, %v849, 0
        %v904 = vsel %vm869, %v850, 0
        %vm906 = vcmask 1045504
        %v908 = vsel %vm906, %v865, 0
        %v911 = vsel %vm906, %v866, 0
        %913 = vmatprep.subr.bf16.mxu0 %v864
        %914 = vmatpush1.bf16.msra.mxu0 %v863
        %915 = vmatprep.subr.bf16.mxu0 %v911
        %916 = vmatpush1.bf16.msra.mxu0 %v908
        %917 = vmatprep.subr.bf16.mxu0 0
        %918 = vmatpush1.bf16.msra.mxu0 0
        %919 = vmatprep.subr.bf16.mxu0 0
        %920 = vmatpush1.bf16.msra.mxu0 0
        %921 = vmatprep.subr.bf16.mxu0 0
        %922 = vmatpush1.bf16.msra.mxu0 0
        %923 = vmatprep.subr.bf16.mxu0 0
        %924 = vmatpush1.bf16.msra.mxu0 0
        %925 = vmatprep.subr.bf16.mxu0 0
        %926 = vmatpush1.bf16.msra.mxu0 0
        %927 = vmatprep.subr.bf16.mxu0 0
        %928 = vmatpush1.bf16.msra.mxu0 0
        %929 = vmatprep.subr.bf16.mxu0 0
        %930 = vmatpush1.bf16.msra.mxu0 0
        %931 = vmatprep.subr.bf16.mxu0 0
        %932 = vmatpush1.bf16.msra.mxu0 0
        %933 = vmatprep.subr.bf16.mxu0 0
        %934 = vmatpush1.bf16.msra.mxu0 0
        %935 = vmatprep.subr.bf16.mxu0 0
        %936 = vmatpush1.bf16.msra.mxu0 0
        %937 = vmatprep.subr.bf16.mxu0 0
        %938 = vmatpush1.bf16.msra.mxu0 0
        %939 = vmatprep.subr.bf16.mxu0 0
        %940 = vmatpush1.bf16.msra.mxu0 0
        %941 = vmatprep.subr.bf16.mxu0 0
        %942 = vmatpush1.bf16.msra.mxu0 0
        %943 = vmatprep.subr.bf16.mxu0 0
        %944 = vmatpush1.bf16.msra.mxu0 0
        %945 = vmatprep.mubr.bf16.mxu0 0
        %946 = vmatmul.mubr.bf16.gmra.mrb[0].mxu0 %v871
        %v947 = vpop.f32.mrb[0].mxu0
        %v948 = vadd.f32 0.0, %v947
        %v949 = vpop.f32.mrb[0].mxu0
        %v950 = vadd.f32 0.0, %v949
        %v951 = vpop.f32.mrb[0].mxu0
        %v952 = vadd.f32 0.0, %v951
        %v953 = vpop.f32.mrb[0].mxu0
        %v954 = vadd.f32 0.0, %v953
        %955 = vmatprep.mubr.bf16.mxu0 0
        %956 = vmatmul.mubr.bf16.gmra.mrb[0].mxu0 %v874
        %v957 = vpop.f32.mrb[0].mxu0
        %v958 = vadd.f32 0.0, %v957
        %v959 = vpop.f32.mrb[0].mxu0
        %v960 = vadd.f32 0.0, %v959
        %v961 = vpop.f32.mrb[0].mxu0
        %v962 = vadd.f32 0.0, %v961
        %v963 = vpop.f32.mrb[0].mxu0
        %v964 = vadd.f32 0.0, %v963
        %965 = vmatprep.mubr.bf16.mxu0 0
        %966 = vmatmul.mubr.bf16.gmra.mrb[0].mxu0 %v877
        %v967 = vpop.f32.mrb[0].mxu0
        %v968 = vadd.f32 0.0, %v967
        %v969 = vpop.f32.mrb[0].mxu0
        %v970 = vadd.f32 0.0, %v969
        %v971 = vpop.f32.mrb[0].mxu0
        %v972 = vadd.f32 0.0, %v971
        %v973 = vpop.f32.mrb[0].mxu0
        %v974 = vadd.f32 0.0, %v973
        %975 = vmatprep.mubr.bf16.mxu0 0
        %976 = vmatmul.mubr.bf16.gmra.mrb[0].mxu0 %v880
        %v977 = vpop.f32.mrb[0].mxu0
        %v978 = vadd.f32 0.0, %v977
        %v979 = vpop.f32.mrb[0].mxu0
        %v980 = vadd.f32 0.0, %v979
        %v981 = vpop.f32.mrb[0].mxu0
        %v982 = vadd.f32 0.0, %v981
        %v983 = vpop.f32.mrb[0].mxu0
        %v984 = vadd.f32 0.0, %v983
        %985 = vmatprep.mubr.bf16.mxu0 0
        %986 = vmatmul.mubr.bf16.gmra.mrb[0].mxu0 %v883
        %v987 = vpop.f32.mrb[0].mxu0
        %v988 = vadd.f32 0.0, %v987
        %v989 = vpop.f32.mrb[0].mxu0
        %v990 = vadd.f32 0.0, %v989
        %v991 = vpop.f32.mrb[0].mxu0
        %v992 = vadd.f32 0.0, %v991
        %v993 = vpop.f32.mrb[0].mxu0
        %v994 = vadd.f32 0.0, %v993
        %995 = vmatprep.mubr.bf16.mxu0 0
        %996 = vmatmul.mubr.bf16.gmra.mrb[0].mxu0 %v886
        %v997 = vpop.f32.mrb[0].mxu0
        %v998 = vadd.f32 0.0, %v997
        %v999 = vpop.f32.mrb[0].mxu0
        %v1000 = vadd.f32 0.0, %v999
        %v1001 = vpop.f32.mrb[0].mxu0
        %v1002 = vadd.f32 0.0, %v1001
        %v1003 = vpop.f32.mrb[0].mxu0
        %v1004 = vadd.f32 0.0, %v1003
        %1005 = vmatprep.mubr.bf16.mxu0 0
        %1006 = vmatmul.mubr.bf16.gmra.mrb[0].mxu0 %v889
        %v1007 = vpop.f32.mrb[0].mxu0
        %v1008 = vadd.f32 0.0, %v1007
        %v1009 = vpop.f32.mrb[0].mxu0
        %v1010 = vadd.f32 0.0, %v1009
        %v1011 = vpop.f32.mrb[0].mxu0
        %v1012 = vadd.f32 0.0, %v1011
        %v1013 = vpop.f32.mrb[0].mxu0
        %v1014 = vadd.f32 0.0, %v1013
        %1015 = vmatprep.mubr.bf16.mxu0 0
        %1016 = vmatmul.mubr.bf16.gmra.mrb[0].mxu0 %v892
        %v1017 = vpop.f32.mrb[0].mxu0
        %v1018 = vadd.f32 0.0, %v1017
        %v1019 = vpop.f32.mrb[0].mxu0
        %v1020 = vadd.f32 0.0, %v1019
        %v1021 = vpop.f32.mrb[0].mxu0
        %v1022 = vadd.f32 0.0, %v1021
        %v1023 = vpop.f32.mrb[0].mxu0
        %v1024 = vadd.f32 0.0, %v1023
        %1025 = vmatprep.mubr.bf16.mxu0 0
        %1026 = vmatmul.mubr.bf16.gmra.mrb[0].mxu0 %v895
        %v1027 = vpop.f32.mrb[0].mxu0
        %v1028 = vadd.f32 0.0, %v1027
        %v1029 = vpop.f32.mrb[0].mxu0
        %v1030 = vadd.f32 0.0, %v1029
        %v1031 = vpop.f32.mrb[0].mxu0
        %v1032 = vadd.f32 0.0, %v1031
        %v1033 = vpop.f32.mrb[0].mxu0
        %v1034 = vadd.f32 0.0, %v1033
        %1035 = vmatprep.mubr.bf16.mxu0 0
        %1036 = vmatmul.mubr.bf16.gmra.mrb[0].mxu0 %v898
        %v1037 = vpop.f32.mrb[0].mxu0
        %v1038 = vadd.f32 0.0, %v1037
        %v1039 = vpop.f32.mrb[0].mxu0
        %v1040 = vadd.f32 0.0, %v1039
        %v1041 = vpop.f32.mrb[0].mxu0
        %v1042 = vadd.f32 0.0, %v1041
        %v1043 = vpop.f32.mrb[0].mxu0
        %v1044 = vadd.f32 0.0, %v1043
        %1045 = vmatprep.mubr.bf16.mxu0 0
        %1046 = vmatmul.mubr.bf16.gmra.mrb[0].mxu0 %v901
        %v1047 = vpop.f32.mrb[0].mxu0
        %v1048 = vadd.f32 0.0, %v1047
        %v1049 = vpop.f32.mrb[0].mxu0
        %v1050 = vadd.f32 0.0, %v1049
        %v1051 = vpop.f32.mrb[0].mxu0
        %v1052 = vadd.f32 0.0, %v1051
        %v1053 = vpop.f32.mrb[0].mxu0
        %v1054 = vadd.f32 0.0, %v1053
        %1055 = vmatprep.mubr.bf16.mxu0 0
        %1056 = vmatmul.mubr.bf16.gmra.mrb[0].mxu0 %v904
        %v1057 = vpop.f32.mrb[0].mxu0
        %v1058 = vadd.f32 0.0, %v1057
        %v1059 = vpop.f32.mrb[0].mxu0
        %v1060 = vadd.f32 0.0, %v1059
        %v1061 = vpop.f32.mrb[0].mxu0
        %v1062 = vadd.f32 0.0, %v1061
        %v1063 = vpop.f32.mrb[0].mxu0
        %v1064 = vadd.f32 0.0, %v1063
        %1065 = vdwg.mxu0
        %v1090 = vunpack.c.l.b16 %v499
        %v1091 = vunpack.c.l.b16 %v500
        %v1092 = vunpack.c.l.b16 %v501
        %v1093 = vunpack.c.l.b16 %v503
        %v1094 = vunpack.c.l.b16 %v504
        %v1095 = vunpack.c.l.b16 %v505
        %v1096 = vunpack.c.l.b16 %v507
        %v1097 = vunpack.c.l.b16 %v508
        %v1098 = vunpack.c.l.b16 %v509
        %v1099 = vunpack.c.l.b16 %v511
        %v1100 = vunpack.c.l.b16 %v512
        %v1101 = vunpack.c.l.b16 %v513
        %v1102 = vunpack.c.l.b16 %v515
        %v1103 = vunpack.c.l.b16 %v516
        %v1104 = vunpack.c.l.b16 %v517
        %v1105 = vunpack.c.l.b16 %v519
        %v1106 = vunpack.c.l.b16 %v520
        %v1107 = vunpack.c.l.b16 %v521
        %v1108 = vunpack.c.l.b16 %v523
        %v1109 = vunpack.c.l.b16 %v524
        %v1110 = vunpack.c.l.b16 %v525
        %v1111 = vunpack.c.l.b16 %v527
        %v1112 = vunpack.c.l.b16 %v528
        %v1113 = vunpack.c.l.b16 %v529
        %v1114 = vpack.c.b16 %v1091, %v1090
        %v1115 = vpack.c.b16 %v1093, %v1092
        %v1116 = vpack.c.b16 %v1095, %v1094
        %v1117 = vpack.c.b16 %v1097, %v1096
        %v1118 = vpack.c.b16 %v1099, %v1098
        %v1119 = vpack.c.b16 %v1101, %v1100
        %v1120 = vpack.c.b16 %v1103, %v1102
        %v1121 = vpack.c.b16 %v1105, %v1104
        %v1122 = vpack.c.b16 %v1107, %v1106
        %v1123 = vpack.c.b16 %v1109, %v1108
        %v1124 = vpack.c.b16 %v1111, %v1110
        %v1125 = vpack.c.b16 %v1113, %v1112
        %v1130 = vunpack.c.l.b16 %v531
        %v1131 = vunpack.c.h.b16 %v531
        %v1132 = vunpack.c.l.b16 %v532
        %v1133 = vunpack.c.h.b16 %v532
        %v1134 = vunpack.c.l.b16 %v533
        %v1135 = vunpack.c.h.b16 %v533
        %v1136 = vunpack.c.l.b16 %v534
        %v1137 = vunpack.c.h.b16 %v534
        %v1138 = vpack.c.b16 %v1132, %v1130
        %v1139 = vpack.c.b16 %v1133, %v1131
        %v1140 = vpack.c.b16 %v1136, %v1134
        %v1141 = vpack.c.b16 %v1137, %v1135
        %v1145 = vsel %vm869, %v1114, 0
        %v1148 = vsel %vm869, %v1115, 0
        %v1151 = vsel %vm869, %v1116, 0
        %v1154 = vsel %vm869, %v1117, 0
        %v1157 = vsel %vm869, %v1118, 0
        %v1160 = vsel %vm869, %v1119, 0
        %v1163 = vsel %vm869, %v1120, 0
        %v1166 = vsel %vm869, %v1121, 0
        %v1169 = vsel %vm869, %v1122, 0
        %v1172 = vsel %vm869, %v1123, 0
        %v1175 = vsel %vm869, %v1124, 0
        %v1178 = vsel %vm869, %v1125, 0
        %v1181 = vsel %vm906, %v1140, 0
        %v1184 = vsel %vm906, %v1141, 0
        %1186 = vmatprep.subr.bf16.mxu0 %v1139
        %1187 = vmatpush1.bf16.msra.mxu0 %v1138
        %1188 = vmatprep.subr.bf16.mxu0 %v1184
        %1189 = vmatpush1.bf16.msra.mxu0 %v1181
        %1190 = vmatprep.subr.bf16.mxu0 0
        %1191 = vmatpush1.bf16.msra.mxu0 0
        %1192 = vmatprep.subr.bf16.mxu0 0
        %1193 = vmatpush1.bf16.msra.mxu0 0
        %1194 = vmatprep.subr.bf16.mxu0 0
        %1195 = vmatpush1.bf16.msra.mxu0 0
        %1196 = vmatprep.subr.bf16.mxu0 0
        %1197 = vmatpush1.bf16.msra.mxu0 0
        %1198 = vmatprep.subr.bf16.mxu0 0
        %1199 = vmatpush1.bf16.msra.mxu0 0
        %1200 = vmatprep.subr.bf16.mxu0 0
        %1201 = vmatpush1.bf16.msra.mxu0 0
        %1202 = vmatprep.subr.bf16.mxu0 0
        %1203 = vmatpush1.bf16.msra.mxu0 0
        %1204 = vmatprep.subr.bf16.mxu0 0
        %1205 = vmatpush1.bf16.msra.mxu0 0
        %1206 = vmatprep.subr.bf16.mxu0 0
        %1207 = vmatpush1.bf16.msra.mxu0 0
        %1208 = vmatprep.subr.bf16.mxu0 0
        %1209 = vmatpush1.bf16.msra.mxu0 0
        %1210 = vmatprep.subr.bf16.mxu0 0
        %1211 = vmatpush1.bf16.msra.mxu0 0
        %1212 = vmatprep.subr.bf16.mxu0 0
        %1213 = vmatpush1.bf16.msra.mxu0 0
        %1214 = vmatprep.subr.bf16.mxu0 0
        %1215 = vmatpush1.bf16.msra.mxu0 0
        %1216 = vmatprep.subr.bf16.mxu0 0
        %1217 = vmatpush1.bf16.msra.mxu0 0
        %1218 = vmatprep.mubr.bf16.mxu0 0
        %1219 = vmatmul.mubr.bf16.gmra.mrb[0].mxu0 %v1145
        %v1220 = vpop.f32.mrb[0].mxu0
        %v1221 = vadd.f32 %v948, %v1220
        %v1222 = vpop.f32.mrb[0].mxu0
        %v1223 = vadd.f32 %v950, %v1222
        %v1224 = vpop.f32.mrb[0].mxu0
        %v1225 = vadd.f32 %v952, %v1224
        %v1226 = vpop.f32.mrb[0].mxu0
        %v1227 = vadd.f32 %v954, %v1226
        %1228 = vmatprep.mubr.bf16.mxu0 0
        %1229 = vmatmul.mubr.bf16.gmra.mrb[0].mxu0 %v1148
        %v1230 = vpop.f32.mrb[0].mxu0
        %v1231 = vadd.f32 %v958, %v1230
        %v1232 = vpop.f32.mrb[0].mxu0
        %v1233 = vadd.f32 %v960, %v1232
        %v1234 = vpop.f32.mrb[0].mxu0
        %v1235 = vadd.f32 %v962, %v1234
        %v1236 = vpop.f32.mrb[0].mxu0
        %v1237 = vadd.f32 %v964, %v1236
        %1238 = vmatprep.mubr.bf16.mxu0 0
        %1239 = vmatmul.mubr.bf16.gmra.mrb[0].mxu0 %v1151
        %v1240 = vpop.f32.mrb[0].mxu0
        %v1241 = vadd.f32 %v968, %v1240
        %v1242 = vpop.f32.mrb[0].mxu0
        %v1243 = vadd.f32 %v970, %v1242
        %v1244 = vpop.f32.mrb[0].mxu0
        %v1245 = vadd.f32 %v972, %v1244
        %v1246 = vpop.f32.mrb[0].mxu0
        %v1247 = vadd.f32 %v974, %v1246
        %1248 = vmatprep.mubr.bf16.mxu0 0
        %1249 = vmatmul.mubr.bf16.gmra.mrb[0].mxu0 %v1154
        %v1250 = vpop.f32.mrb[0].mxu0
        %v1251 = vadd.f32 %v978, %v1250
        %v1252 = vpop.f32.mrb[0].mxu0
        %v1253 = vadd.f32 %v980, %v1252
        %v1254 = vpop.f32.mrb[0].mxu0
        %v1255 = vadd.f32 %v982, %v1254
        %v1256 = vpop.f32.mrb[0].mxu0
        %v1257 = vadd.f32 %v984, %v1256
        %1258 = vmatprep.mubr.bf16.mxu0 0
        %1259 = vmatmul.mubr.bf16.gmra.mrb[0].mxu0 %v1157
        %v1260 = vpop.f32.mrb[0].mxu0
        %v1261 = vadd.f32 %v988, %v1260
        %v1262 = vpop.f32.mrb[0].mxu0
        %v1263 = vadd.f32 %v990, %v1262
        %v1264 = vpop.f32.mrb[0].mxu0
        %v1265 = vadd.f32 %v992, %v1264
        %v1266 = vpop.f32.mrb[0].mxu0
        %v1267 = vadd.f32 %v994, %v1266
        %1268 = vmatprep.mubr.bf16.mxu0 0
        %1269 = vmatmul.mubr.bf16.gmra.mrb[0].mxu0 %v1160
        %v1270 = vpop.f32.mrb[0].mxu0
        %v1271 = vadd.f32 %v998, %v1270
        %v1272 = vpop.f32.mrb[0].mxu0
        %v1273 = vadd.f32 %v1000, %v1272
        %v1274 = vpop.f32.mrb[0].mxu0
        %v1275 = vadd.f32 %v1002, %v1274
        %v1276 = vpop.f32.mrb[0].mxu0
        %v1277 = vadd.f32 %v1004, %v1276
        %1278 = vmatprep.mubr.bf16.mxu0 0
        %1279 = vmatmul.mubr.bf16.gmra.mrb[0].mxu0 %v1163
        %v1280 = vpop.f32.mrb[0].mxu0
        %v1281 = vadd.f32 %v1008, %v1280
        %v1282 = vpop.f32.mrb[0].mxu0
        %v1283 = vadd.f32 %v1010, %v1282
        %v1284 = vpop.f32.mrb[0].mxu0
        %v1285 = vadd.f32 %v1012, %v1284
        %v1286 = vpop.f32.mrb[0].mxu0
        %v1287 = vadd.f32 %v1014, %v1286
        %1288 = vmatprep.mubr.bf16.mxu0 0
        %1289 = vmatmul.mubr.bf16.gmra.mrb[0].mxu0 %v1166
        %v1290 = vpop.f32.mrb[0].mxu0
        %v1291 = vadd.f32 %v1018, %v1290
        %v1292 = vpop.f32.mrb[0].mxu0
        %v1293 = vadd.f32 %v1020, %v1292
        %v1294 = vpop.f32.mrb[0].mxu0
        %v1295 = vadd.f32 %v1022, %v1294
        %v1296 = vpop.f32.mrb[0].mxu0
        %v1297 = vadd.f32 %v1024, %v1296
        %1298 = vmatprep.mubr.bf16.mxu0 0
        %1299 = vmatmul.mubr.bf16.gmra.mrb[0].mxu0 %v1169
        %v1300 = vpop.f32.mrb[0].mxu0
        %v1301 = vadd.f32 %v1028, %v1300
        %v1302 = vpop.f32.mrb[0].mxu0
        %v1303 = vadd.f32 %v1030, %v1302
        %v1304 = vpop.f32.mrb[0].mxu0
        %v1305 = vadd.f32 %v1032, %v1304
        %v1306 = vpop.f32.mrb[0].mxu0
        %v1307 = vadd.f32 %v1034, %v1306
        %1308 = vmatprep.mubr.bf16.mxu0 0
        %1309 = vmatmul.mubr.bf16.gmra.mrb[0].mxu0 %v1172
        %v1310 = vpop.f32.mrb[0].mxu0
        %v1311 = vadd.f32 %v1038, %v1310
        %v1312 = vpop.f32.mrb[0].mxu0
        %v1313 = vadd.f32 %v1040, %v1312
        %v1314 = vpop.f32.mrb[0].mxu0
        %v1315 = vadd.f32 %v1042, %v1314
        %v1316 = vpop.f32.mrb[0].mxu0
        %v1317 = vadd.f32 %v1044, %v1316
        %1318 = vmatprep.mubr.bf16.mxu0 0
        %1319 = vmatmul.mubr.bf16.gmra.mrb[0].mxu0 %v1175
        %v1320 = vpop.f32.mrb[0].mxu0
        %v1321 = vadd.f32 %v1048, %v1320
        %v1322 = vpop.f32.mrb[0].mxu0
        %v1323 = vadd.f32 %v1050, %v1322
        %v1324 = vpop.f32.mrb[0].mxu0
        %v1325 = vadd.f32 %v1052, %v1324
        %v1326 = vpop.f32.mrb[0].mxu0
        %v1327 = vadd.f32 %v1054, %v1326
        %1328 = vmatprep.mubr.bf16.mxu0 0
        %1329 = vmatmul.mubr.bf16.gmra.mrb[0].mxu0 %v1178
        %v1330 = vpop.f32.mrb[0].mxu0
        %v1331 = vadd.f32 %v1058, %v1330
        %v1332 = vpop.f32.mrb[0].mxu0
        %v1333 = vadd.f32 %v1060, %v1332
        %v1334 = vpop.f32.mrb[0].mxu0
        %v1335 = vadd.f32 %v1062, %v1334
        %v1336 = vpop.f32.mrb[0].mxu0
        %v1337 = vadd.f32 %v1064, %v1336
        %1338 = vdwg.mxu0
        %vm1347 = vcmask 1042432
        %vm1348 = vcmask 1046532
        %vm1349 = vmor %vm1347, %vm1348
        %v1350 = vrot.slane %v499, 5
        %v1351 = vrot.slane %v1350, 4
        %v1352 = vrot.slane %v500, 5
        %v1353 = vsel %vm1349, %v1351, %v1352
        %v1354 = vrot.slane %v1352, 4
        %v1355 = vrot.slane %v501, 5
        %v1356 = vsel %vm1349, %v1354, %v1355
        %v1357 = vrot.slane %v1355, 4
        %v1358 = vrot.slane %v502, 5
        %v1359 = vsel %vm1349, %v1357, %v1358
        %v1360 = vrot.slane %v503, 5
        %v1361 = vrot.slane %v1360, 4
        %v1362 = vrot.slane %v504, 5
        %v1363 = vsel %vm1349, %v1361, %v1362
        %v1364 = vrot.slane %v1362, 4
        %v1365 = vrot.slane %v505, 5
        %v1366 = vsel %vm1349, %v1364, %v1365
        %v1367 = vrot.slane %v1365, 4
        %v1368 = vrot.slane %v506, 5
        %v1369 = vsel %vm1349, %v1367, %v1368
        %v1370 = vrot.slane %v507, 5
        %v1371 = vrot.slane %v1370, 4
        %v1372 = vrot.slane %v508, 5
        %v1373 = vsel %vm1349, %v1371, %v1372
        %v1374 = vrot.slane %v1372, 4
        %v1375 = vrot.slane %v509, 5
        %v1376 = vsel %vm1349, %v1374, %v1375
        %v1377 = vrot.slane %v1375, 4
        %v1378 = vrot.slane %v510, 5
        %v1379 = vsel %vm1349, %v1377, %v1378
        %v1380 = vrot.slane %v511, 5
        %v1381 = vrot.slane %v1380, 4
        %v1382 = vrot.slane %v512, 5
        %v1383 = vsel %vm1349, %v1381, %v1382
        %v1384 = vrot.slane %v1382, 4
        %v1385 = vrot.slane %v513, 5
        %v1386 = vsel %vm1349, %v1384, %v1385
        %v1387 = vrot.slane %v1385, 4
        %v1388 = vrot.slane %v514, 5
        %v1389 = vsel %vm1349, %v1387, %v1388
        %v1390 = vrot.slane %v515, 5
        %v1391 = vrot.slane %v1390, 4
        %v1392 = vrot.slane %v516, 5
        %v1393 = vsel %vm1349, %v1391, %v1392
        %v1394 = vrot.slane %v1392, 4
        %v1395 = vrot.slane %v517, 5
        %v1396 = vsel %vm1349, %v1394, %v1395
        %v1397 = vrot.slane %v1395, 4
        %v1398 = vrot.slane %v518, 5
        %v1399 = vsel %vm1349, %v1397, %v1398
        %v1400 = vrot.slane %v519, 5
        %v1401 = vrot.slane %v1400, 4
        %v1402 = vrot.slane %v520, 5
        %v1403 = vsel %vm1349, %v1401, %v1402
        %v1404 = vrot.slane %v1402, 4
        %v1405 = vrot.slane %v521, 5
        %v1406 = vsel %vm1349, %v1404, %v1405
        %v1407 = vrot.slane %v1405, 4
        %v1408 = vrot.slane %v522, 5
        %v1409 = vsel %vm1349, %v1407, %v1408
        %v1410 = vrot.slane %v523, 5
        %v1411 = vrot.slane %v1410, 4
        %v1412 = vrot.slane %v524, 5
        %v1413 = vsel %vm1349, %v1411, %v1412
        %v1414 = vrot.slane %v1412, 4
        %v1415 = vrot.slane %v525, 5
        %v1416 = vsel %vm1349, %v1414, %v1415
        %v1417 = vrot.slane %v1415, 4
        %v1418 = vrot.slane %v526, 5
        %v1419 = vsel %vm1349, %v1417, %v1418
        %v1420 = vrot.slane %v527, 5
        %v1421 = vrot.slane %v1420, 4
        %v1422 = vrot.slane %v528, 5
        %v1423 = vsel %vm1349, %v1421, %v1422
        %v1424 = vrot.slane %v1422, 4
        %v1425 = vrot.slane %v529, 5
        %v1426 = vsel %vm1349, %v1424, %v1425
        %v1427 = vrot.slane %v1425, 4
        %v1428 = vrot.slane %v530, 5
        %v1429 = vsel %vm1349, %v1427, %v1428
        %s1430 = scalar_lea.vmem %s1, 64
        %v1431 = vld [vmem:[%s1430] sm:$0xff]
        %v1432 = vld [vmem:[%s1430 + $0x8] sm:$0xff]
        %v1433 = vld [vmem:[%s1430 + $0x10] sm:$0xff]
        %v1434 = vld [vmem:[%s1430 + $0x18] sm:$0x33]
        %v1435 = vunpack.c.l.b16 %v1353
        %v1436 = vunpack.c.l.b16 %v1356
        %v1437 = vunpack.c.l.b16 %v1359
        %v1438 = vunpack.c.l.b16 %v1363
        %v1439 = vunpack.c.l.b16 %v1366
        %v1440 = vunpack.c.l.b16 %v1369
        %v1441 = vunpack.c.l.b16 %v1373
        %v1442 = vunpack.c.l.b16 %v1376
        %v1443 = vunpack.c.l.b16 %v1379
        %v1444 = vunpack.c.l.b16 %v1383
        %v1445 = vunpack.c.l.b16 %v1386
        %v1446 = vunpack.c.l.b16 %v1389
        %v1447 = vunpack.c.l.b16 %v1393
        %v1448 = vunpack.c.l.b16 %v1396
        %v1449 = vunpack.c.l.b16 %v1399
        %v1450 = vunpack.c.l.b16 %v1403
        %v1451 = vunpack.c.l.b16 %v1406
        %v1452 = vunpack.c.l.b16 %v1409
        %v1453 = vunpack.c.l.b16 %v1413
        %v1454 = vunpack.c.l.b16 %v1416
        %v1455 = vunpack.c.l.b16 %v1419
        %v1456 = vunpack.c.l.b16 %v1423
        %v1457 = vunpack.c.l.b16 %v1426
        %v1458 = vunpack.c.l.b16 %v1429
        %v1459 = vpack.c.b16 %v1436, %v1435
        %v1460 = vpack.c.b16 %v1438, %v1437
        %v1461 = vpack.c.b16 %v1440, %v1439
        %v1462 = vpack.c.b16 %v1442, %v1441
        %v1463 = vpack.c.b16 %v1444, %v1443
        %v1464 = vpack.c.b16 %v1446, %v1445
        %v1465 = vpack.c.b16 %v1448, %v1447
        %v1466 = vpack.c.b16 %v1450, %v1449
        %v1467 = vpack.c.b16 %v1452, %v1451
        %v1468 = vpack.c.b16 %v1454, %v1453
        %v1469 = vpack.c.b16 %v1456, %v1455
        %v1470 = vpack.c.b16 %v1458, %v1457
        %v1475 = vunpack.c.l.b16 %v1431
        %v1476 = vunpack.c.h.b16 %v1431
        %v1477 = vunpack.c.l.b16 %v1432
        %v1478 = vunpack.c.h.b16 %v1432
        %v1479 = vunpack.c.l.b16 %v1433
        %v1480 = vunpack.c.h.b16 %v1433
        %v1481 = vunpack.c.l.b16 %v1434
        %v1482 = vunpack.c.h.b16 %v1434
        %v1483 = vpack.c.b16 %v1477, %v1475
        %v1484 = vpack.c.b16 %v1478, %v1476
        %v1485 = vpack.c.b16 %v1481, %v1479
        %v1486 = vpack.c.b16 %v1482, %v1480
        %v1490 = vsel %vm869, %v1459, 0
        %v1493 = vsel %vm869, %v1460, 0
        %v1496 = vsel %vm869, %v1461, 0
        %v1499 = vsel %vm869, %v1462, 0
        %v1502 = vsel %vm869, %v1463, 0
        %v1505 = vsel %vm869, %v1464, 0
        %v1508 = vsel %vm869, %v1465, 0
        %v1511 = vsel %vm869, %v1466, 0
        %v1514 = vsel %vm869, %v1467, 0
        %v1517 = vsel %vm869, %v1468, 0
        %v1520 = vsel %vm869, %v1469, 0
        %v1523 = vsel %vm869, %v1470, 0
        %v1526 = vsel %vm906, %v1485, 0
        %v1529 = vsel %vm906, %v1486, 0
        %1531 = vmatprep.subr.bf16.mxu0 %v1484
        %1532 = vmatpush1.bf16.msra.mxu0 %v1483
        %1533 = vmatprep.subr.bf16.mxu0 %v1529
        %1534 = vmatpush1.bf16.msra.mxu0 %v1526
        %1535 = vmatprep.subr.bf16.mxu0 0
        %1536 = vmatpush1.bf16.msra.mxu0 0
        %1537 = vmatprep.subr.bf16.mxu0 0
        %1538 = vmatpush1.bf16.msra.mxu0 0
        %1539 = vmatprep.subr.bf16.mxu0 0
        %1540 = vmatpush1.bf16.msra.mxu0 0
        %1541 = vmatprep.subr.bf16.mxu0 0
        %1542 = vmatpush1.bf16.msra.mxu0 0
        %1543 = vmatprep.subr.bf16.mxu0 0
        %1544 = vmatpush1.bf16.msra.mxu0 0
        %1545 = vmatprep.subr.bf16.mxu0 0
        %1546 = vmatpush1.bf16.msra.mxu0 0
        %1547 = vmatprep.subr.bf16.mxu0 0
        %1548 = vmatpush1.bf16.msra.mxu0 0
        %1549 = vmatprep.subr.bf16.mxu0 0
        %1550 = vmatpush1.bf16.msra.mxu0 0
        %1551 = vmatprep.subr.bf16.mxu0 0
        %1552 = vmatpush1.bf16.msra.mxu0 0
        %1553 = vmatprep.subr.bf16.mxu0 0
        %1554 = vmatpush1.bf16.msra.mxu0 0
        %1555 = vmatprep.subr.bf16.mxu0 0
        %1556 = vmatpush1.bf16.msra.mxu0 0
        %1557 = vmatprep.subr.bf16.mxu0 0
        %1558 = vmatpush1.bf16.msra.mxu0 0
        %1559 = vmatprep.subr.bf16.mxu0 0
        %1560 = vmatpush1.bf16.msra.mxu0 0
        %1561 = vmatprep.subr.bf16.mxu0 0
        %1562 = vmatpush1.bf16.msra.mxu0 0
        %1563 = vmatprep.mubr.bf16.mxu0 0
        %1564 = vmatmul.mubr.bf16.gmra.mrb[0].mxu0 %v1490
        %v1565 = vpop.f32.mrb[0].mxu0
        %v1566 = vadd.f32 0.0, %v1565
        %v1567 = vpop.f32.mrb[0].mxu0
        %v1568 = vadd.f32 0.0, %v1567
        %v1569 = vpop.f32.mrb[0].mxu0
        %v1570 = vadd.f32 0.0, %v1569
        %v1571 = vpop.f32.mrb[0].mxu0
        %v1572 = vadd.f32 0.0, %v1571
        %1573 = vmatprep.mubr.bf16.mxu0 0
        %1574 = vmatmul.mubr.bf16.gmra.mrb[0].mxu0 %v1493
        %v1575 = vpop.f32.mrb[0].mxu0
        %v1576 = vadd.f32 0.0, %v1575
        %v1577 = vpop.f32.mrb[0].mxu0
        %v1578 = vadd.f32 0.0, %v1577
        %v1579 = vpop.f32.mrb[0].mxu0
        %v1580 = vadd.f32 0.0, %v1579
        %v1581 = vpop.f32.mrb[0].mxu0
        %v1582 = vadd.f32 0.0, %v1581
        %1583 = vmatprep.mubr.bf16.mxu0 0
        %1584 = vmatmul.mubr.bf16.gmra.mrb[0].mxu0 %v1496
        %v1585 = vpop.f32.mrb[0].mxu0
        %v1586 = vadd.f32 0.0, %v1585
        %v1587 = vpop.f32.mrb[0].mxu0
        %v1588 = vadd.f32 0.0, %v1587
        %v1589 = vpop.f32.mrb[0].mxu0
        %v1590 = vadd.f32 0.0, %v1589
        %v1591 = vpop.f32.mrb[0].mxu0
        %v1592 = vadd.f32 0.0, %v1591
        %1593 = vmatprep.mubr.bf16.mxu0 0
        %1594 = vmatmul.mubr.bf16.gmra.mrb[0].mxu0 %v1499
        %v1595 = vpop.f32.mrb[0].mxu0
        %v1596 = vadd.f32 0.0, %v1595
        %v1597 = vpop.f32.mrb[0].mxu0
        %v1598 = vadd.f32 0.0, %v1597
        %v1599 = vpop.f32.mrb[0].mxu0
        %v1600 = vadd.f32 0.0, %v1599
        %v1601 = vpop.f32.mrb[0].mxu0
        %v1602 = vadd.f32 0.0, %v1601
        %1603 = vmatprep.mubr.bf16.mxu0 0
        %1604 = vmatmul.mubr.bf16.gmra.mrb[0].mxu0 %v1502
        %v1605 = vpop.f32.mrb[0].mxu0
        %v1606 = vadd.f32 0.0, %v1605
        %v1607 = vpop.f32.mrb[0].mxu0
        %v1608 = vadd.f32 0.0, %v1607
        %v1609 = vpop.f32.mrb[0].mxu0
        %v1610 = vadd.f32 0.0, %v1609
        %v1611 = vpop.f32.mrb[0].mxu0
        %v1612 = vadd.f32 0.0, %v1611
        %1613 = vmatprep.mubr.bf16.mxu0 0
        %1614 = vmatmul.mubr.bf16.gmra.mrb[0].mxu0 %v1505
        %v1615 = vpop.f32.mrb[0].mxu0
        %v1616 = vadd.f32 0.0, %v1615
        %v1617 = vpop.f32.mrb[0].mxu0
        %v1618 = vadd.f32 0.0, %v1617
        %v1619 = vpop.f32.mrb[0].mxu0
        %v1620 = vadd.f32 0.0, %v1619
        %v1621 = vpop.f32.mrb[0].mxu0
        %v1622 = vadd.f32 0.0, %v1621
        %1623 = vmatprep.mubr.bf16.mxu0 0
        %1624 = vmatmul.mubr.bf16.gmra.mrb[0].mxu0 %v1508
        %v1625 = vpop.f32.mrb[0].mxu0
        %v1626 = vadd.f32 0.0, %v1625
        %v1627 = vpop.f32.mrb[0].mxu0
        %v1628 = vadd.f32 0.0, %v1627
        %v1629 = vpop.f32.mrb[0].mxu0
        %v1630 = vadd.f32 0.0, %v1629
        %v1631 = vpop.f32.mrb[0].mxu0
        %v1632 = vadd.f32 0.0, %v1631
        %1633 = vmatprep.mubr.bf16.mxu0 0
        %1634 = vmatmul.mubr.bf16.gmra.mrb[0].mxu0 %v1511
        %v1635 = vpop.f32.mrb[0].mxu0
        %v1636 = vadd.f32 0.0, %v1635
        %v1637 = vpop.f32.mrb[0].mxu0
        %v1638 = vadd.f32 0.0, %v1637
        %v1639 = vpop.f32.mrb[0].mxu0
        %v1640 = vadd.f32 0.0, %v1639
        %v1641 = vpop.f32.mrb[0].mxu0
        %v1642 = vadd.f32 0.0, %v1641
        %1643 = vmatprep.mubr.bf16.mxu0 0
        %1644 = vmatmul.mubr.bf16.gmra.mrb[0].mxu0 %v1514
        %v1645 = vpop.f32.mrb[0].mxu0
        %v1646 = vadd.f32 0.0, %v1645
        %v1647 = vpop.f32.mrb[0].mxu0
        %v1648 = vadd.f32 0.0, %v1647
        %v1649 = vpop.f32.mrb[0].mxu0
        %v1650 = vadd.f32 0.0, %v1649
        %v1651 = vpop.f32.mrb[0].mxu0
        %v1652 = vadd.f32 0.0, %v1651
        %1653 = vmatprep.mubr.bf16.mxu0 0
        %1654 = vmatmul.mubr.bf16.gmra.mrb[0].mxu0 %v1517
        %v1655 = vpop.f32.mrb[0].mxu0
        %v1656 = vadd.f32 0.0, %v1655
        %v1657 = vpop.f32.mrb[0].mxu0
        %v1658 = vadd.f32 0.0, %v1657
        %v1659 = vpop.f32.mrb[0].mxu0
        %v1660 = vadd.f32 0.0, %v1659
        %v1661 = vpop.f32.mrb[0].mxu0
        %v1662 = vadd.f32 0.0, %v1661
        %1663 = vmatprep.mubr.bf16.mxu0 0
        %1664 = vmatmul.mubr.bf16.gmra.mrb[0].mxu0 %v1520
        %v1665 = vpop.f32.mrb[0].mxu0
        %v1666 = vadd.f32 0.0, %v1665
        %v1667 = vpop.f32.mrb[0].mxu0
        %v1668 = vadd.f32 0.0, %v1667
        %v1669 = vpop.f32.mrb[0].mxu0
        %v1670 = vadd.f32 0.0, %v1669
        %v1671 = vpop.f32.mrb[0].mxu0
        %v1672 = vadd.f32 0.0, %v1671
        %1673 = vmatprep.mubr.bf16.mxu0 0
        %1674 = vmatmul.mubr.bf16.gmra.mrb[0].mxu0 %v1523
        %v1675 = vpop.f32.mrb[0].mxu0
        %v1676 = vadd.f32 0.0, %v1675
        %v1677 = vpop.f32.mrb[0].mxu0
        %v1678 = vadd.f32 0.0, %v1677
        %v1679 = vpop.f32.mrb[0].mxu0
        %v1680 = vadd.f32 0.0, %v1679
        %v1681 = vpop.f32.mrb[0].mxu0
        %v1682 = vadd.f32 0.0, %v1681
        %1683 = vdwg.mxu0
        %v1684 = vadd.f32 %v1221, %v1566
        %v1685 = vadd.f32 %v1223, %v1568
        %v1686 = vadd.f32 %v1225, %v1570
        %v1687 = vadd.f32 %v1227, %v1572
        %v1688 = vadd.f32 %v1231, %v1576
        %v1689 = vadd.f32 %v1233, %v1578
        %v1690 = vadd.f32 %v1235, %v1580
        %v1691 = vadd.f32 %v1237, %v1582
        %v1692 = vadd.f32 %v1241, %v1586
        %v1693 = vadd.f32 %v1243, %v1588
        %v1694 = vadd.f32 %v1245, %v1590
        %v1695 = vadd.f32 %v1247, %v1592
        %v1696 = vadd.f32 %v1251, %v1596
        %v1697 = vadd.f32 %v1253, %v1598
        %v1698 = vadd.f32 %v1255, %v1600
        %v1699 = vadd.f32 %v1257, %v1602
        %v1700 = vadd.f32 %v1261, %v1606
        %v1701 = vadd.f32 %v1263, %v1608
        %v1702 = vadd.f32 %v1265, %v1610
        %v1703 = vadd.f32 %v1267, %v1612
        %v1704 = vadd.f32 %v1271, %v1616
        %v1705 = vadd.f32 %v1273, %v1618
        %v1706 = vadd.f32 %v1275, %v1620
        %v1707 = vadd.f32 %v1277, %v1622
        %v1708 = vadd.f32 %v1281, %v1626
        %v1709 = vadd.f32 %v1283, %v1628
        %v1710 = vadd.f32 %v1285, %v1630
        %v1711 = vadd.f32 %v1287, %v1632
        %v1712 = vadd.f32 %v1291, %v1636
        %v1713 = vadd.f32 %v1293, %v1638
        %v1714 = vadd.f32 %v1295, %v1640
        %v1715 = vadd.f32 %v1297, %v1642
        %v1716 = vadd.f32 %v1301, %v1646
        %v1717 = vadd.f32 %v1303, %v1648
        %v1718 = vadd.f32 %v1305, %v1650
        %v1719 = vadd.f32 %v1307, %v1652
        %v1720 = vadd.f32 %v1311, %v1656
        %v1721 = vadd.f32 %v1313, %v1658
        %v1722 = vadd.f32 %v1315, %v1660
        %v1723 = vadd.f32 %v1317, %v1662
        %v1724 = vadd.f32 %v1321, %v1666
        %v1725 = vadd.f32 %v1323, %v1668
        %v1726 = vadd.f32 %v1325, %v1670
        %v1727 = vadd.f32 %v1327, %v1672
        %v1728 = vadd.f32 %v1331, %v1676
        %v1729 = vadd.f32 %v1333, %v1678
        %v1730 = vadd.f32 %v1335, %v1680
        %v1731 = vadd.f32 %v1337, %v1682
        %vm1732 = vsmask.f32 2304
        %vm1733 = vsmask.f32 6416
        %vm1734 = vmor %vm1732, %vm1733
        %v1735 = vrot.slane %v539, 5
        %v1736 = vrot.slane %v542, 6
        %v1737 = vor.u32 %v1735, %v1736
        %v1738 = vrot.slane %v1737, 4
        %v1739 = vrot.slane %v552, 5
        %v1740 = vrot.slane %v548, 6
        %v1741 = vor.u32 %v1739, %v1740
        %v1742 = vsel %vm1734, %v1738, %v1741
        %v1743 = vrot.slane %v1741, 4
        %v1744 = vrot.slane %v562, 5
        %v1745 = vrot.slane %v558, 6
        %v1746 = vor.u32 %v1744, %v1745
        %v1747 = vsel %vm1734, %v1743, %v1746
        %v1748 = vrot.slane %v1746, 4
        %v1749 = vshrl.u32 %v502, 16
        %v1751 = vrot.slane %v1749, 5
        %v1752 = vrot.slane %v568, 6
        %v1753 = vor.u32 %v1751, %v1752
        %v1754 = vsel %vm1734, %v1748, %v1753
        %v1755 = vrot.slane %v573, 5
        %v1756 = vrot.slane %v576, 6
        %v1757 = vor.u32 %v1755, %v1756
        %v1758 = vrot.slane %v1757, 4
        %v1759 = vrot.slane %v586, 5
        %v1760 = vrot.slane %v582, 6
        %v1761 = vor.u32 %v1759, %v1760
        %v1762 = vsel %vm1734, %v1758, %v1761
        %v1763 = vrot.slane %v1761, 4
        %v1764 = vrot.slane %v596, 5
        %v1765 = vrot.slane %v592, 6
        %v1766 = vor.u32 %v1764, %v1765
        %v1767 = vsel %vm1734, %v1763, %v1766
        %v1768 = vrot.slane %v1766, 4
        %v1769 = vshrl.u32 %v506, 16
        %v1771 = vrot.slane %v1769, 5
        %v1772 = vrot.slane %v602, 6
        %v1773 = vor.u32 %v1771, %v1772
        %v1774 = vsel %vm1734, %v1768, %v1773
        %v1775 = vrot.slane %v607, 5
        %v1776 = vrot.slane %v610, 6
        %v1777 = vor.u32 %v1775, %v1776
        %v1778 = vrot.slane %v1777, 4
        %v1779 = vrot.slane %v620, 5
        %v1780 = vrot.slane %v616, 6
        %v1781 = vor.u32 %v1779, %v1780
        %v1782 = vsel %vm1734, %v1778, %v1781
        %v1783 = vrot.slane %v1781, 4
        %v1784 = vrot.slane %v630, 5
        %v1785 = vrot.slane %v626, 6
        %v1786 = vor.u32 %v1784, %v1785
        %v1787 = vsel %vm1734, %v1783, %v1786
        %v1788 = vrot.slane %v1786, 4
        %v1789 = vshrl.u32 %v510, 16
        %v1791 = vrot.slane %v1789, 5
        %v1792 = vrot.slane %v636, 6
        %v1793 = vor.u32 %v1791, %v1792
        %v1794 = vsel %vm1734, %v1788, %v1793
        %v1795 = vrot.slane %v641, 5
        %v1796 = vrot.slane %v644, 6
        %v1797 = vor.u32 %v1795, %v1796
        %v1798 = vrot.slane %v1797, 4
        %v1799 = vrot.slane %v654, 5
        %v1800 = vrot.slane %v650, 6
        %v1801 = vor.u32 %v1799, %v1800
        %v1802 = vsel %vm1734, %v1798, %v1801
        %v1803 = vrot.slane %v1801, 4
        %v1804 = vrot.slane %v664, 5
        %v1805 = vrot.slane %v660, 6
        %v1806 = vor.u32 %v1804, %v1805
        %v1807 = vsel %vm1734, %v1803, %v1806
        %v1808 = vrot.slane %v1806, 4
        %v1809 = vshrl.u32 %v514, 16
        %v1811 = vrot.slane %v1809, 5
        %v1812 = vrot.slane %v670, 6
        %v1813 = vor.u32 %v1811, %v1812
        %v1814 = vsel %vm1734, %v1808, %v1813
        %v1815 = vrot.slane %v675, 5
        %v1816 = vrot.slane %v678, 6
        %v1817 = vor.u32 %v1815, %v1816
        %v1818 = vrot.slane %v1817, 4
        %v1819 = vrot.slane %v688, 5
        %v1820 = vrot.slane %v684, 6
        %v1821 = vor.u32 %v1819, %v1820
        %v1822 = vsel %vm1734, %v1818, %v1821
        %v1823 = vrot.slane %v1821, 4
        %v1824 = vrot.slane %v698, 5
        %v1825 = vrot.slane %v694, 6
        %v1826 = vor.u32 %v1824, %v1825
        %v1827 = vsel %vm1734, %v1823, %v1826
        %v1828 = vrot.slane %v1826, 4
        %v1829 = vshrl.u32 %v518, 16
        %v1831 = vrot.slane %v1829, 5
        %v1832 = vrot.slane %v704, 6
        %v1833 = vor.u32 %v1831, %v1832
        %v1834 = vsel %vm1734, %v1828, %v1833
        %v1835 = vrot.slane %v709, 5
        %v1836 = vrot.slane %v712, 6
        %v1837 = vor.u32 %v1835, %v1836
        %v1838 = vrot.slane %v1837, 4
        %v1839 = vrot.slane %v722, 5
        %v1840 = vrot.slane %v718, 6
        %v1841 = vor.u32 %v1839, %v1840
        %v1842 = vsel %vm1734, %v1838, %v1841
        %v1843 = vrot.slane %v1841, 4
        %v1844 = vrot.slane %v732, 5
        %v1845 = vrot.slane %v728, 6
        %v1846 = vor.u32 %v1844, %v1845
        %v1847 = vsel %vm1734, %v1843, %v1846
        %v1848 = vrot.slane %v1846, 4
        %v1849 = vshrl.u32 %v522, 16
        %v1851 = vrot.slane %v1849, 5
        %v1852 = vrot.slane %v738, 6
        %v1853 = vor.u32 %v1851, %v1852
        %v1854 = vsel %vm1734, %v1848, %v1853
        %v1855 = vrot.slane %v743, 5
        %v1856 = vrot.slane %v746, 6
        %v1857 = vor.u32 %v1855, %v1856
        %v1858 = vrot.slane %v1857, 4
        %v1859 = vrot.slane %v756, 5
        %v1860 = vrot.slane %v752, 6
        %v1861 = vor.u32 %v1859, %v1860
        %v1862 = vsel %vm1734, %v1858, %v1861
        %v1863 = vrot.slane %v1861, 4
        %v1864 = vrot.slane %v766, 5
        %v1865 = vrot.slane %v762, 6
        %v1866 = vor.u32 %v1864, %v1865
        %v1867 = vsel %vm1734, %v1863, %v1866
        %v1868 = vrot.slane %v1866, 4
        %v1869 = vshrl.u32 %v526, 16
        %v1871 = vrot.slane %v1869, 5
        %v1872 = vrot.slane %v772, 6
        %v1873 = vor.u32 %v1871, %v1872
        %v1874 = vsel %vm1734, %v1868, %v1873
        %v1875 = vrot.slane %v777, 5
        %v1876 = vrot.slane %v780, 6
        %v1877 = vor.u32 %v1875, %v1876
        %v1878 = vrot.slane %v1877, 4
        %v1879 = vrot.slane %v790, 5
        %v1880 = vrot.slane %v786, 6
        %v1881 = vor.u32 %v1879, %v1880
        %v1882 = vsel %vm1734, %v1878, %v1881
        %v1883 = vrot.slane %v1881, 4
        %v1884 = vrot.slane %v800, 5
        %v1885 = vrot.slane %v796, 6
        %v1886 = vor.u32 %v1884, %v1885
        %v1887 = vsel %vm1734, %v1883, %v1886
        %v1888 = vrot.slane %v1886, 4
        %v1889 = vshrl.u32 %v530, 16
        %v1891 = vrot.slane %v1889, 5
        %v1892 = vrot.slane %v806, 6
        %v1893 = vor.u32 %v1891, %v1892
        %v1894 = vsel %vm1734, %v1888, %v1893
        %s1895 = scalar_lea.vmem %s1, 96
        %v1896 = vld [vmem:[%s1895] sm:$0xff]
        %v1897 = vld [vmem:[%s1895 + $0x8] sm:$0xff]
        %v1898 = vld [vmem:[%s1895 + $0x10] sm:$0xff]
        %v1899 = vld [vmem:[%s1895 + $0x18] sm:$0x33]
        %v1900 = vunpack.c.l.b16 %v1742
        %v1901 = vunpack.c.l.b16 %v1747
        %v1902 = vunpack.c.l.b16 %v1754
        %v1903 = vunpack.c.l.b16 %v1762
        %v1904 = vunpack.c.l.b16 %v1767
        %v1905 = vunpack.c.l.b16 %v1774
        %v1906 = vunpack.c.l.b16 %v1782
        %v1907 = vunpack.c.l.b16 %v1787
        %v1908 = vunpack.c.l.b16 %v1794
        %v1909 = vunpack.c.l.b16 %v1802
        %v1910 = vunpack.c.l.b16 %v1807
        %v1911 = vunpack.c.l.b16 %v1814
        %v1912 = vunpack.c.l.b16 %v1822
        %v1913 = vunpack.c.l.b16 %v1827
        %v1914 = vunpack.c.l.b16 %v1834
        %v1915 = vunpack.c.l.b16 %v1842
        %v1916 = vunpack.c.l.b16 %v1847
        %v1917 = vunpack.c.l.b16 %v1854
        %v1918 = vunpack.c.l.b16 %v1862
        %v1919 = vunpack.c.l.b16 %v1867
        %v1920 = vunpack.c.l.b16 %v1874
        %v1921 = vunpack.c.l.b16 %v1882
        %v1922 = vunpack.c.l.b16 %v1887
        %v1923 = vunpack.c.l.b16 %v1894
        %v1924 = vpack.c.b16 %v1901, %v1900
        %v1925 = vpack.c.b16 %v1903, %v1902
        %v1926 = vpack.c.b16 %v1905, %v1904
        %v1927 = vpack.c.b16 %v1907, %v1906
        %v1928 = vpack.c.b16 %v1909, %v1908
        %v1929 = vpack.c.b16 %v1911, %v1910
        %v1930 = vpack.c.b16 %v1913, %v1912
        %v1931 = vpack.c.b16 %v1915, %v1914
        %v1932 = vpack.c.b16 %v1917, %v1916
        %v1933 = vpack.c.b16 %v1919, %v1918
        %v1934 = vpack.c.b16 %v1921, %v1920
        %v1935 = vpack.c.b16 %v1923, %v1922
        %v1940 = vunpack.c.l.b16 %v1896
        %v1941 = vunpack.c.h.b16 %v1896
        %v1942 = vunpack.c.l.b16 %v1897
        %v1943 = vunpack.c.h.b16 %v1897
        %v1944 = vunpack.c.l.b16 %v1898
        %v1945 = vunpack.c.h.b16 %v1898
        %v1946 = vunpack.c.l.b16 %v1899
        %v1947 = vunpack.c.h.b16 %v1899
        %v1948 = vpack.c.b16 %v1942, %v1940
        %v1949 = vpack.c.b16 %v1943, %v1941
        %v1950 = vpack.c.b16 %v1946, %v1944
        %v1951 = vpack.c.b16 %v1947, %v1945
        %v1955 = vsel %vm869, %v1924, 0
        %v1958 = vsel %vm869, %v1925, 0
        %v1961 = vsel %vm869, %v1926, 0
        %v1964 = vsel %vm869, %v1927, 0
        %v1967 = vsel %vm869, %v1928, 0
        %v1970 = vsel %vm869, %v1929, 0
        %v1973 = vsel %vm869, %v1930, 0
        %v1976 = vsel %vm869, %v1931, 0
        %v1979 = vsel %vm869, %v1932, 0
        %v1982 = vsel %vm869, %v1933, 0
        %v1985 = vsel %vm869, %v1934, 0
        %v1988 = vsel %vm869, %v1935, 0
        %v1991 = vsel %vm906, %v1950, 0
        %v1994 = vsel %vm906, %v1951, 0
        %1996 = vmatprep.subr.bf16.mxu0 %v1949
        %1997 = vmatpush1.bf16.msra.mxu0 %v1948
        %1998 = vmatprep.subr.bf16.mxu0 %v1994
        %1999 = vmatpush1.bf16.msra.mxu0 %v1991
        %2000 = vmatprep.subr.bf16.mxu0 0
        %2001 = vmatpush1.bf16.msra.mxu0 0
        %2002 = vmatprep.subr.bf16.mxu0 0
        %2003 = vmatpush1.bf16.msra.mxu0 0
        %2004 = vmatprep.subr.bf16.mxu0 0
        %2005 = vmatpush1.bf16.msra.mxu0 0
        %2006 = vmatprep.subr.bf16.mxu0 0
        %2007 = vmatpush1.bf16.msra.mxu0 0
        %2008 = vmatprep.subr.bf16.mxu0 0
        %2009 = vmatpush1.bf16.msra.mxu0 0
        %2010 = vmatprep.subr.bf16.mxu0 0
        %2011 = vmatpush1.bf16.msra.mxu0 0
        %2012 = vmatprep.subr.bf16.mxu0 0
        %2013 = vmatpush1.bf16.msra.mxu0 0
        %2014 = vmatprep.subr.bf16.mxu0 0
        %2015 = vmatpush1.bf16.msra.mxu0 0
        %2016 = vmatprep.subr.bf16.mxu0 0
        %2017 = vmatpush1.bf16.msra.mxu0 0
        %2018 = vmatprep.subr.bf16.mxu0 0
        %2019 = vmatpush1.bf16.msra.mxu0 0
        %2020 = vmatprep.subr.bf16.mxu0 0
        %2021 = vmatpush1.bf16.msra.mxu0 0
        %2022 = vmatprep.subr.bf16.mxu0 0
        %2023 = vmatpush1.bf16.msra.mxu0 0
        %2024 = vmatprep.subr.bf16.mxu0 0
        %2025 = vmatpush1.bf16.msra.mxu0 0
        %2026 = vmatprep.subr.bf16.mxu0 0
        %2027 = vmatpush1.bf16.msra.mxu0 0
        %2028 = vmatprep.mubr.bf16.mxu0 0
        %2029 = vmatmul.mubr.bf16.gmra.mrb[0].mxu0 %v1955
        %v2030 = vpop.f32.mrb[0].mxu0
        %v2031 = vadd.f32 0.0, %v2030
        %v2032 = vpop.f32.mrb[0].mxu0
        %v2033 = vadd.f32 0.0, %v2032
        %v2034 = vpop.f32.mrb[0].mxu0
        %v2035 = vadd.f32 0.0, %v2034
        %v2036 = vpop.f32.mrb[0].mxu0
        %v2037 = vadd.f32 0.0, %v2036
        %2038 = vmatprep.mubr.bf16.mxu0 0
        %2039 = vmatmul.mubr.bf16.gmra.mrb[0].mxu0 %v1958
        %v2040 = vpop.f32.mrb[0].mxu0
        %v2041 = vadd.f32 0.0, %v2040
        %v2042 = vpop.f32.mrb[0].mxu0
        %v2043 = vadd.f32 0.0, %v2042
        %v2044 = vpop.f32.mrb[0].mxu0
        %v2045 = vadd.f32 0.0, %v2044
        %v2046 = vpop.f32.mrb[0].mxu0
        %v2047 = vadd.f32 0.0, %v2046
        %2048 = vmatprep.mubr.bf16.mxu0 0
        %2049 = vmatmul.mubr.bf16.gmra.mrb[0].mxu0 %v1961
        %v2050 = vpop.f32.mrb[0].mxu0
        %v2051 = vadd.f32 0.0, %v2050
        %v2052 = vpop.f32.mrb[0].mxu0
        %v2053 = vadd.f32 0.0, %v2052
        %v2054 = vpop.f32.mrb[0].mxu0
        %v2055 = vadd.f32 0.0, %v2054
        %v2056 = vpop.f32.mrb[0].mxu0
        %v2057 = vadd.f32 0.0, %v2056
        %2058 = vmatprep.mubr.bf16.mxu0 0
        %2059 = vmatmul.mubr.bf16.gmra.mrb[0].mxu0 %v1964
        %v2060 = vpop.f32.mrb[0].mxu0
        %v2061 = vadd.f32 0.0, %v2060
        %v2062 = vpop.f32.mrb[0].mxu0
        %v2063 = vadd.f32 0.0, %v2062
        %v2064 = vpop.f32.mrb[0].mxu0
        %v2065 = vadd.f32 0.0, %v2064
        %v2066 = vpop.f32.mrb[0].mxu0
        %v2067 = vadd.f32 0.0, %v2066
        %2068 = vmatprep.mubr.bf16.mxu0 0
        %2069 = vmatmul.mubr.bf16.gmra.mrb[0].mxu0 %v1967
        %v2070 = vpop.f32.mrb[0].mxu0
        %v2071 = vadd.f32 0.0, %v2070
        %v2072 = vpop.f32.mrb[0].mxu0
        %v2073 = vadd.f32 0.0, %v2072
        %v2074 = vpop.f32.mrb[0].mxu0
        %v2075 = vadd.f32 0.0, %v2074
        %v2076 = vpop.f32.mrb[0].mxu0
        %v2077 = vadd.f32 0.0, %v2076
        %2078 = vmatprep.mubr.bf16.mxu0 0
        %2079 = vmatmul.mubr.bf16.gmra.mrb[0].mxu0 %v1970
        %v2080 = vpop.f32.mrb[0].mxu0
        %v2081 = vadd.f32 0.0, %v2080
        %v2082 = vpop.f32.mrb[0].mxu0
        %v2083 = vadd.f32 0.0, %v2082
        %v2084 = vpop.f32.mrb[0].mxu0
        %v2085 = vadd.f32 0.0, %v2084
        %v2086 = vpop.f32.mrb[0].mxu0
        %v2087 = vadd.f32 0.0, %v2086
        %2088 = vmatprep.mubr.bf16.mxu0 0
        %2089 = vmatmul.mubr.bf16.gmra.mrb[0].mxu0 %v1973
        %v2090 = vpop.f32.mrb[0].mxu0
        %v2091 = vadd.f32 0.0, %v2090
        %v2092 = vpop.f32.mrb[0].mxu0
        %v2093 = vadd.f32 0.0, %v2092
        %v2094 = vpop.f32.mrb[0].mxu0
        %v2095 = vadd.f32 0.0, %v2094
        %v2096 = vpop.f32.mrb[0].mxu0
        %v2097 = vadd.f32 0.0, %v2096
        %2098 = vmatprep.mubr.bf16.mxu0 0
        %2099 = vmatmul.mubr.bf16.gmra.mrb[0].mxu0 %v1976
        %v2100 = vpop.f32.mrb[0].mxu0
        %v2101 = vadd.f32 0.0, %v2100
        %v2102 = vpop.f32.mrb[0].mxu0
        %v2103 = vadd.f32 0.0, %v2102
        %v2104 = vpop.f32.mrb[0].mxu0
        %v2105 = vadd.f32 0.0, %v2104
        %v2106 = vpop.f32.mrb[0].mxu0
        %v2107 = vadd.f32 0.0, %v2106
        %2108 = vmatprep.mubr.bf16.mxu0 0
        %2109 = vmatmul.mubr.bf16.gmra.mrb[0].mxu0 %v1979
        %v2110 = vpop.f32.mrb[0].mxu0
        %v2111 = vadd.f32 0.0, %v2110
        %v2112 = vpop.f32.mrb[0].mxu0
        %v2113 = vadd.f32 0.0, %v2112
        %v2114 = vpop.f32.mrb[0].mxu0
        %v2115 = vadd.f32 0.0, %v2114
        %v2116 = vpop.f32.mrb[0].mxu0
        %v2117 = vadd.f32 0.0, %v2116
        %2118 = vmatprep.mubr.bf16.mxu0 0
        %2119 = vmatmul.mubr.bf16.gmra.mrb[0].mxu0 %v1982
        %v2120 = vpop.f32.mrb[0].mxu0
        %v2121 = vadd.f32 0.0, %v2120
        %v2122 = vpop.f32.mrb[0].mxu0
        %v2123 = vadd.f32 0.0, %v2122
        %v2124 = vpop.f32.mrb[0].mxu0
        %v2125 = vadd.f32 0.0, %v2124
        %v2126 = vpop.f32.mrb[0].mxu0
        %v2127 = vadd.f32 0.0, %v2126
        %2128 = vmatprep.mubr.bf16.mxu0 0
        %2129 = vmatmul.mubr.bf16.gmra.mrb[0].mxu0 %v1985
        %v2130 = vpop.f32.mrb[0].mxu0
        %v2131 = vadd.f32 0.0, %v2130
        %v2132 = vpop.f32.mrb[0].mxu0
        %v2133 = vadd.f32 0.0, %v2132
        %v2134 = vpop.f32.mrb[0].mxu0
        %v2135 = vadd.f32 0.0, %v2134
        %v2136 = vpop.f32.mrb[0].mxu0
        %v2137 = vadd.f32 0.0, %v2136
        %2138 = vmatprep.mubr.bf16.mxu0 0
        %2139 = vmatmul.mubr.bf16.gmra.mrb[0].mxu0 %v1988
        %v2140 = vpop.f32.mrb[0].mxu0
        %v2141 = vadd.f32 0.0, %v2140
        %v2142 = vpop.f32.mrb[0].mxu0
        %v2143 = vadd.f32 0.0, %v2142
        %v2144 = vpop.f32.mrb[0].mxu0
        %v2145 = vadd.f32 0.0, %v2144
        %v2146 = vpop.f32.mrb[0].mxu0
        %v2147 = vadd.f32 0.0, %v2146
        %2148 = vdwg.mxu0
        %v2149 = vadd.f32 %v1684, %v2031
        %v2150 = vadd.f32 %v1685, %v2033
        %v2151 = vadd.f32 %v1686, %v2035
        %v2152 = vadd.f32 %v1687, %v2037
        %v2153 = vadd.f32 %v1688, %v2041
        %v2154 = vadd.f32 %v1689, %v2043
        %v2155 = vadd.f32 %v1690, %v2045
        %v2156 = vadd.f32 %v1691, %v2047
        %v2157 = vadd.f32 %v1692, %v2051
        %v2158 = vadd.f32 %v1693, %v2053
        %v2159 = vadd.f32 %v1694, %v2055
        %v2160 = vadd.f32 %v1695, %v2057
        %v2161 = vadd.f32 %v1696, %v2061
        %v2162 = vadd.f32 %v1697, %v2063
        %v2163 = vadd.f32 %v1698, %v2065
        %v2164 = vadd.f32 %v1699, %v2067
        %v2165 = vadd.f32 %v1700, %v2071
        %v2166 = vadd.f32 %v1701, %v2073
        %v2167 = vadd.f32 %v1702, %v2075
        %v2168 = vadd.f32 %v1703, %v2077
        %v2169 = vadd.f32 %v1704, %v2081
        %v2170 = vadd.f32 %v1705, %v2083
        %v2171 = vadd.f32 %v1706, %v2085
        %v2172 = vadd.f32 %v1707, %v2087
        %v2173 = vadd.f32 %v1708, %v2091
        %v2174 = vadd.f32 %v1709, %v2093
        %v2175 = vadd.f32 %v1710, %v2095
        %v2176 = vadd.f32 %v1711, %v2097
        %v2177 = vadd.f32 %v1712, %v2101
        %v2178 = vadd.f32 %v1713, %v2103
        %v2179 = vadd.f32 %v1714, %v2105
        %v2180 = vadd.f32 %v1715, %v2107
        %v2181 = vadd.f32 %v1716, %v2111
        %v2182 = vadd.f32 %v1717, %v2113
        %v2183 = vadd.f32 %v1718, %v2115
        %v2184 = vadd.f32 %v1719, %v2117
        %v2185 = vadd.f32 %v1720, %v2121
        %v2186 = vadd.f32 %v1721, %v2123
        %v2187 = vadd.f32 %v1722, %v2125
        %v2188 = vadd.f32 %v1723, %v2127
        %v2189 = vadd.f32 %v1724, %v2131
        %v2190 = vadd.f32 %v1725, %v2133
        %v2191 = vadd.f32 %v1726, %v2135
        %v2192 = vadd.f32 %v1727, %v2137
        %v2193 = vadd.f32 %v1728, %v2141
        %v2194 = vadd.f32 %v1729, %v2143
        %v2195 = vadd.f32 %v1730, %v2145
        %v2196 = vadd.f32 %v1731, %v2147
        %vm2197 = vcmask 1041408
        %vm2198 = vcmask 1045508
        %vm2199 = vmor %vm2197, %vm2198
        %v2200 = vrot.slane %v499, 6
        %v2201 = vrot.slane %v2200, 4
        %v2202 = vrot.slane %v500, 6
        %v2203 = vsel %vm2199, %v2201, %v2202
        %v2204 = vrot.slane %v2202, 4
        %v2205 = vrot.slane %v501, 6
        %v2206 = vsel %vm2199, %v2204, %v2205
        %v2207 = vrot.slane %v2205, 4
        %v2208 = vrot.slane %v502, 6
        %v2209 = vsel %vm2199, %v2207, %v2208
        %v2210 = vrot.slane %v503, 6
        %v2211 = vrot.slane %v2210, 4
        %v2212 = vrot.slane %v504, 6
        %v2213 = vsel %vm2199, %v2211, %v2212
        %v2214 = vrot.slane %v2212, 4
        %v2215 = vrot.slane %v505, 6
        %v2216 = vsel %vm2199, %v2214, %v2215
        %v2217 = vrot.slane %v2215, 4
        %v2218 = vrot.slane %v506, 6
        %v2219 = vsel %vm2199, %v2217, %v2218
        %v2220 = vrot.slane %v507, 6
        %v2221 = vrot.slane %v2220, 4
        %v2222 = vrot.slane %v508, 6
        %v2223 = vsel %vm2199, %v2221, %v2222
        %v2224 = vrot.slane %v2222, 4
        %v2225 = vrot.slane %v509, 6
        %v2226 = vsel %vm2199, %v2224, %v2225
        %v2227 = vrot.slane %v2225, 4
        %v2228 = vrot.slane %v510, 6
        %v2229 = vsel %vm2199, %v2227, %v2228
        %v2230 = vrot.slane %v511, 6
        %v2231 = vrot.slane %v2230, 4
        %v2232 = vrot.slane %v512, 6
        %v2233 = vsel %vm2199, %v2231, %v2232
        %v2234 = vrot.slane %v2232, 4
        %v2235 = vrot.slane %v513, 6
        %v2236 = vsel %vm2199, %v2234, %v2235
        %v2237 = vrot.slane %v2235, 4
        %v2238 = vrot.slane %v514, 6
        %v2239 = vsel %vm2199, %v2237, %v2238
        %v2240 = vrot.slane %v515, 6
        %v2241 = vrot.slane %v2240, 4
        %v2242 = vrot.slane %v516, 6
        %v2243 = vsel %vm2199, %v2241, %v2242
        %v2244 = vrot.slane %v2242, 4
        %v2245 = vrot.slane %v517, 6
        %v2246 = vsel %vm2199, %v2244, %v2245
        %v2247 = vrot.slane %v2245, 4
        %v2248 = vrot.slane %v518, 6
        %v2249 = vsel %vm2199, %v2247, %v2248
        %v2250 = vrot.slane %v519, 6
        %v2251 = vrot.slane %v2250, 4
        %v2252 = vrot.slane %v520, 6
        %v2253 = vsel %vm2199, %v2251, %v2252
        %v2254 = vrot.slane %v2252, 4
        %v2255 = vrot.slane %v521, 6
        %v2256 = vsel %vm2199, %v2254, %v2255
        %v2257 = vrot.slane %v2255, 4
        %v2258 = vrot.slane %v522, 6
        %v2259 = vsel %vm2199, %v2257, %v2258
        %v2260 = vrot.slane %v523, 6
        %v2261 = vrot.slane %v2260, 4
        %v2262 = vrot.slane %v524, 6
        %v2263 = vsel %vm2199, %v2261, %v2262
        %v2264 = vrot.slane %v2262, 4
        %v2265 = vrot.slane %v525, 6
        %v2266 = vsel %vm2199, %v2264, %v2265
        %v2267 = vrot.slane %v2265, 4
        %v2268 = vrot.slane %v526, 6
        %v2269 = vsel %vm2199, %v2267, %v2268
        %v2270 = vrot.slane %v527, 6
        %v2271 = vrot.slane %v2270, 4
        %v2272 = vrot.slane %v528, 6
        %v2273 = vsel %vm2199, %v2271, %v2272
        %v2274 = vrot.slane %v2272, 4
        %v2275 = vrot.slane %v529, 6
        %v2276 = vsel %vm2199, %v2274, %v2275
        %v2277 = vrot.slane %v2275, 4
        %v2278 = vrot.slane %v530, 6
        %v2279 = vsel %vm2199, %v2277, %v2278
        %s2280 = scalar_lea.vmem %s1, 128
        %v2281 = vld [vmem:[%s2280] sm:$0xff]
        %v2282 = vld [vmem:[%s2280 + $0x8] sm:$0xff]
        %v2283 = vld [vmem:[%s2280 + $0x10] sm:$0xff]
        %v2284 = vld [vmem:[%s2280 + $0x18] sm:$0x33]
        %v2285 = vunpack.c.l.b16 %v2203
        %v2286 = vunpack.c.l.b16 %v2206
        %v2287 = vunpack.c.l.b16 %v2209
        %v2288 = vunpack.c.l.b16 %v2213
        %v2289 = vunpack.c.l.b16 %v2216
        %v2290 = vunpack.c.l.b16 %v2219
        %v2291 = vunpack.c.l.b16 %v2223
        %v2292 = vunpack.c.l.b16 %v2226
        %v2293 = vunpack.c.l.b16 %v2229
        %v2294 = vunpack.c.l.b16 %v2233
        %v2295 = vunpack.c.l.b16 %v2236
        %v2296 = vunpack.c.l.b16 %v2239
        %v2297 = vunpack.c.l.b16 %v2243
        %v2298 = vunpack.c.l.b16 %v2246
        %v2299 = vunpack.c.l.b16 %v2249
        %v2300 = vunpack.c.l.b16 %v2253
        %v2301 = vunpack.c.l.b16 %v2256
        %v2302 = vunpack.c.l.b16 %v2259
        %v2303 = vunpack.c.l.b16 %v2263
        %v2304 = vunpack.c.l.b16 %v2266
        %v2305 = vunpack.c.l.b16 %v2269
        %v2306 = vunpack.c.l.b16 %v2273
        %v2307 = vunpack.c.l.b16 %v2276
        %v2308 = vunpack.c.l.b16 %v2279
        %v2309 = vpack.c.b16 %v2286, %v2285
        %v2310 = vpack.c.b16 %v2288, %v2287
        %v2311 = vpack.c.b16 %v2290, %v2289
        %v2312 = vpack.c.b16 %v2292, %v2291
        %v2313 = vpack.c.b16 %v2294, %v2293
        %v2314 = vpack.c.b16 %v2296, %v2295
        %v2315 = vpack.c.b16 %v2298, %v2297
        %v2316 = vpack.c.b16 %v2300, %v2299
        %v2317 = vpack.c.b16 %v2302, %v2301
        %v2318 = vpack.c.b16 %v2304, %v2303
        %v2319 = vpack.c.b16 %v2306, %v2305
        %v2320 = vpack.c.b16 %v2308, %v2307
        %v2325 = vunpack.c.l.b16 %v2281
        %v2326 = vunpack.c.h.b16 %v2281
        %v2327 = vunpack.c.l.b16 %v2282
        %v2328 = vunpack.c.h.b16 %v2282
        %v2329 = vunpack.c.l.b16 %v2283
        %v2330 = vunpack.c.h.b16 %v2283
        %v2331 = vunpack.c.l.b16 %v2284
        %v2332 = vunpack.c.h.b16 %v2284
        %v2333 = vpack.c.b16 %v2327, %v2325
        %v2334 = vpack.c.b16 %v2328, %v2326
        %v2335 = vpack.c.b16 %v2331, %v2329
        %v2336 = vpack.c.b16 %v2332, %v2330
        %v2340 = vsel %vm869, %v2309, 0
        %v2343 = vsel %vm869, %v2310, 0
        %v2346 = vsel %vm869, %v2311, 0
        %v2349 = vsel %vm869, %v2312, 0
        %v2352 = vsel %vm869, %v2313, 0
        %v2355 = vsel %vm869, %v2314, 0
        %v2358 = vsel %vm869, %v2315, 0
        %v2361 = vsel %vm869, %v2316, 0
        %v2364 = vsel %vm869, %v2317, 0
        %v2367 = vsel %vm869, %v2318, 0
        %v2370 = vsel %vm869, %v2319, 0
        %v2373 = vsel %vm869, %v2320, 0
        %v2376 = vsel %vm906, %v2335, 0
        %v2379 = vsel %vm906, %v2336, 0
        %2381 = vmatprep.subr.bf16.mxu0 %v2334
        %2382 = vmatpush1.bf16.msra.mxu0 %v2333
        %2383 = vmatprep.subr.bf16.mxu0 %v2379
        %2384 = vmatpush1.bf16.msra.mxu0 %v2376
        %2385 = vmatprep.subr.bf16.mxu0 0
        %2386 = vmatpush1.bf16.msra.mxu0 0
        %2387 = vmatprep.subr.bf16.mxu0 0
        %2388 = vmatpush1.bf16.msra.mxu0 0
        %2389 = vmatprep.subr.bf16.mxu0 0
        %2390 = vmatpush1.bf16.msra.mxu0 0
        %2391 = vmatprep.subr.bf16.mxu0 0
        %2392 = vmatpush1.bf16.msra.mxu0 0
        %2393 = vmatprep.subr.bf16.mxu0 0
        %2394 = vmatpush1.bf16.msra.mxu0 0
        %2395 = vmatprep.subr.bf16.mxu0 0
        %2396 = vmatpush1.bf16.msra.mxu0 0
        %2397 = vmatprep.subr.bf16.mxu0 0
        %2398 = vmatpush1.bf16.msra.mxu0 0
        %2399 = vmatprep.subr.bf16.mxu0 0
        %2400 = vmatpush1.bf16.msra.mxu0 0
        %2401 = vmatprep.subr.bf16.mxu0 0
        %2402 = vmatpush1.bf16.msra.mxu0 0
        %2403 = vmatprep.subr.bf16.mxu0 0
        %2404 = vmatpush1.bf16.msra.mxu0 0
        %2405 = vmatprep.subr.bf16.mxu0 0
        %2406 = vmatpush1.bf16.msra.mxu0 0
        %2407 = vmatprep.subr.bf16.mxu0 0
        %2408 = vmatpush1.bf16.msra.mxu0 0
        %2409 = vmatprep.subr.bf16.mxu0 0
        %2410 = vmatpush1.bf16.msra.mxu0 0
        %2411 = vmatprep.subr.bf16.mxu0 0
        %2412 = vmatpush1.bf16.msra.mxu0 0
        %2413 = vmatprep.mubr.bf16.mxu0 0
        %2414 = vmatmul.mubr.bf16.gmra.mrb[0].mxu0 %v2340
        %v2415 = vpop.f32.mrb[0].mxu0
        %v2416 = vadd.f32 0.0, %v2415
        %v2417 = vpop.f32.mrb[0].mxu0
        %v2418 = vadd.f32 0.0, %v2417
        %v2419 = vpop.f32.mrb[0].mxu0
        %v2420 = vadd.f32 0.0, %v2419
        %v2421 = vpop.f32.mrb[0].mxu0
        %v2422 = vadd.f32 0.0, %v2421
        %2423 = vmatprep.mubr.bf16.mxu0 0
        %2424 = vmatmul.mubr.bf16.gmra.mrb[0].mxu0 %v2343
        %v2425 = vpop.f32.mrb[0].mxu0
        %v2426 = vadd.f32 0.0, %v2425
        %v2427 = vpop.f32.mrb[0].mxu0
        %v2428 = vadd.f32 0.0, %v2427
        %v2429 = vpop.f32.mrb[0].mxu0
        %v2430 = vadd.f32 0.0, %v2429
        %v2431 = vpop.f32.mrb[0].mxu0
        %v2432 = vadd.f32 0.0, %v2431
        %2433 = vmatprep.mubr.bf16.mxu0 0
        %2434 = vmatmul.mubr.bf16.gmra.mrb[0].mxu0 %v2346
        %v2435 = vpop.f32.mrb[0].mxu0
        %v2436 = vadd.f32 0.0, %v2435
        %v2437 = vpop.f32.mrb[0].mxu0
        %v2438 = vadd.f32 0.0, %v2437
        %v2439 = vpop.f32.mrb[0].mxu0
        %v2440 = vadd.f32 0.0, %v2439
        %v2441 = vpop.f32.mrb[0].mxu0
        %v2442 = vadd.f32 0.0, %v2441
        %2443 = vmatprep.mubr.bf16.mxu0 0
        %2444 = vmatmul.mubr.bf16.gmra.mrb[0].mxu0 %v2349
        %v2445 = vpop.f32.mrb[0].mxu0
        %v2446 = vadd.f32 0.0, %v2445
        %v2447 = vpop.f32.mrb[0].mxu0
        %v2448 = vadd.f32 0.0, %v2447
        %v2449 = vpop.f32.mrb[0].mxu0
        %v2450 = vadd.f32 0.0, %v2449
        %v2451 = vpop.f32.mrb[0].mxu0
        %v2452 = vadd.f32 0.0, %v2451
        %2453 = vmatprep.mubr.bf16.mxu0 0
        %2454 = vmatmul.mubr.bf16.gmra.mrb[0].mxu0 %v2352
        %v2455 = vpop.f32.mrb[0].mxu0
        %v2456 = vadd.f32 0.0, %v2455
        %v2457 = vpop.f32.mrb[0].mxu0
        %v2458 = vadd.f32 0.0, %v2457
        %v2459 = vpop.f32.mrb[0].mxu0
        %v2460 = vadd.f32 0.0, %v2459
        %v2461 = vpop.f32.mrb[0].mxu0
        %v2462 = vadd.f32 0.0, %v2461
        %2463 = vmatprep.mubr.bf16.mxu0 0
        %2464 = vmatmul.mubr.bf16.gmra.mrb[0].mxu0 %v2355
        %v2465 = vpop.f32.mrb[0].mxu0
        %v2466 = vadd.f32 0.0, %v2465
        %v2467 = vpop.f32.mrb[0].mxu0
        %v2468 = vadd.f32 0.0, %v2467
        %v2469 = vpop.f32.mrb[0].mxu0
        %v2470 = vadd.f32 0.0, %v2469
        %v2471 = vpop.f32.mrb[0].mxu0
        %v2472 = vadd.f32 0.0, %v2471
        %2473 = vmatprep.mubr.bf16.mxu0 0
        %2474 = vmatmul.mubr.bf16.gmra.mrb[0].mxu0 %v2358
        %v2475 = vpop.f32.mrb[0].mxu0
        %v2476 = vadd.f32 0.0, %v2475
        %v2477 = vpop.f32.mrb[0].mxu0
        %v2478 = vadd.f32 0.0, %v2477
        %v2479 = vpop.f32.mrb[0].mxu0
        %v2480 = vadd.f32 0.0, %v2479
        %v2481 = vpop.f32.mrb[0].mxu0
        %v2482 = vadd.f32 0.0, %v2481
        %2483 = vmatprep.mubr.bf16.mxu0 0
        %2484 = vmatmul.mubr.bf16.gmra.mrb[0].mxu0 %v2361
        %v2485 = vpop.f32.mrb[0].mxu0
        %v2486 = vadd.f32 0.0, %v2485
        %v2487 = vpop.f32.mrb[0].mxu0
        %v2488 = vadd.f32 0.0, %v2487
        %v2489 = vpop.f32.mrb[0].mxu0
        %v2490 = vadd.f32 0.0, %v2489
        %v2491 = vpop.f32.mrb[0].mxu0
        %v2492 = vadd.f32 0.0, %v2491
        %2493 = vmatprep.mubr.bf16.mxu0 0
        %2494 = vmatmul.mubr.bf16.gmra.mrb[0].mxu0 %v2364
        %v2495 = vpop.f32.mrb[0].mxu0
        %v2496 = vadd.f32 0.0, %v2495
        %v2497 = vpop.f32.mrb[0].mxu0
        %v2498 = vadd.f32 0.0, %v2497
        %v2499 = vpop.f32.mrb[0].mxu0
        %v2500 = vadd.f32 0.0, %v2499
        %v2501 = vpop.f32.mrb[0].mxu0
        %v2502 = vadd.f32 0.0, %v2501
        %2503 = vmatprep.mubr.bf16.mxu0 0
        %2504 = vmatmul.mubr.bf16.gmra.mrb[0].mxu0 %v2367
        %v2505 = vpop.f32.mrb[0].mxu0
        %v2506 = vadd.f32 0.0, %v2505
        %v2507 = vpop.f32.mrb[0].mxu0
        %v2508 = vadd.f32 0.0, %v2507
        %v2509 = vpop.f32.mrb[0].mxu0
        %v2510 = vadd.f32 0.0, %v2509
        %v2511 = vpop.f32.mrb[0].mxu0
        %v2512 = vadd.f32 0.0, %v2511
        %2513 = vmatprep.mubr.bf16.mxu0 0
        %2514 = vmatmul.mubr.bf16.gmra.mrb[0].mxu0 %v2370
        %v2515 = vpop.f32.mrb[0].mxu0
        %v2516 = vadd.f32 0.0, %v2515
        %v2517 = vpop.f32.mrb[0].mxu0
        %v2518 = vadd.f32 0.0, %v2517
        %v2519 = vpop.f32.mrb[0].mxu0
        %v2520 = vadd.f32 0.0, %v2519
        %v2521 = vpop.f32.mrb[0].mxu0
        %v2522 = vadd.f32 0.0, %v2521
        %2523 = vmatprep.mubr.bf16.mxu0 0
        %2524 = vmatmul.mubr.bf16.gmra.mrb[0].mxu0 %v2373
        %v2525 = vpop.f32.mrb[0].mxu0
        %v2526 = vadd.f32 0.0, %v2525
        %v2527 = vpop.f32.mrb[0].mxu0
        %v2528 = vadd.f32 0.0, %v2527
        %v2529 = vpop.f32.mrb[0].mxu0
        %v2530 = vadd.f32 0.0, %v2529
        %v2531 = vpop.f32.mrb[0].mxu0
        %v2532 = vadd.f32 0.0, %v2531
        %2533 = vdwg.mxu0
        %v2534 = vadd.f32 %v2149, %v2416
        %v2535 = vadd.f32 %v2150, %v2418
        %v2536 = vadd.f32 %v2151, %v2420
        %v2537 = vadd.f32 %v2152, %v2422
        %v2538 = vadd.f32 %v2153, %v2426
        %v2539 = vadd.f32 %v2154, %v2428
        %v2540 = vadd.f32 %v2155, %v2430
        %v2541 = vadd.f32 %v2156, %v2432
        %v2542 = vadd.f32 %v2157, %v2436
        %v2543 = vadd.f32 %v2158, %v2438
        %v2544 = vadd.f32 %v2159, %v2440
        %v2545 = vadd.f32 %v2160, %v2442
        %v2546 = vadd.f32 %v2161, %v2446
        %v2547 = vadd.f32 %v2162, %v2448
        %v2548 = vadd.f32 %v2163, %v2450
        %v2549 = vadd.f32 %v2164, %v2452
        %v2550 = vadd.f32 %v2165, %v2456
        %v2551 = vadd.f32 %v2166, %v2458
        %v2552 = vadd.f32 %v2167, %v2460
        %v2553 = vadd.f32 %v2168, %v2462
        %v2554 = vadd.f32 %v2169, %v2466
        %v2555 = vadd.f32 %v2170, %v2468
        %v2556 = vadd.f32 %v2171, %v2470
        %v2557 = vadd.f32 %v2172, %v2472
        %v2558 = vadd.f32 %v2173, %v2476
        %v2559 = vadd.f32 %v2174, %v2478
        %v2560 = vadd.f32 %v2175, %v2480
        %v2561 = vadd.f32 %v2176, %v2482
        %v2562 = vadd.f32 %v2177, %v2486
        %v2563 = vadd.f32 %v2178, %v2488
        %v2564 = vadd.f32 %v2179, %v2490
        %v2565 = vadd.f32 %v2180, %v2492
        %v2566 = vadd.f32 %v2181, %v2496
        %v2567 = vadd.f32 %v2182, %v2498
        %v2568 = vadd.f32 %v2183, %v2500
        %v2569 = vadd.f32 %v2184, %v2502
        %v2570 = vadd.f32 %v2185, %v2506
        %v2571 = vadd.f32 %v2186, %v2508
        %v2572 = vadd.f32 %v2187, %v2510
        %v2573 = vadd.f32 %v2188, %v2512
        %v2574 = vadd.f32 %v2189, %v2516
        %v2575 = vadd.f32 %v2190, %v2518
        %v2576 = vadd.f32 %v2191, %v2520
        %v2577 = vadd.f32 %v2192, %v2522
        %v2578 = vadd.f32 %v2193, %v2526
        %v2579 = vadd.f32 %v2194, %v2528
        %v2580 = vadd.f32 %v2195, %v2530
        %v2581 = vadd.f32 %v2196, %v2532
        %v2582 = vld [vmem:[%s2] sm:$0x3]
        %v2584 = vlaneseq
        %v2585 = vshrl.u32 %v2584, 7
        %v2586 = vsub.s32 0, %v2585
        %v2587 = vrot.slane %v2582, %v2586
        %v2588 = vlaneseq
        %v2589 = vshrl.u32 %v2588, 7
        %v2590 = vsub.s32 1, %v2589
        %v2591 = vrot.slane %v2582, %v2590
        %v2594 = vadd.f32 %v2534, %v2587
        %v2595 = vadd.f32 %v2535, %v2591
        %v2596 = vadd.f32 %v2536, %v2587
        %v2597 = vadd.f32 %v2537, %v2591
        %v2598 = vadd.f32 %v2538, %v2587
        %v2599 = vadd.f32 %v2539, %v2591
        %v2600 = vadd.f32 %v2540, %v2587
        %v2601 = vadd.f32 %v2541, %v2591
        %v2602 = vadd.f32 %v2542, %v2587
        %v2603 = vadd.f32 %v2543, %v2591
        %v2604 = vadd.f32 %v2544, %v2587
        %v2605 = vadd.f32 %v2545, %v2591
        %v2606 = vadd.f32 %v2546, %v2587
        %v2607 = vadd.f32 %v2547, %v2591
        %v2608 = vadd.f32 %v2548, %v2587
        %v2609 = vadd.f32 %v2549, %v2591
        %v2610 = vadd.f32 %v2550, %v2587
        %v2611 = vadd.f32 %v2551, %v2591
        %v2612 = vadd.f32 %v2552, %v2587
        %v2613 = vadd.f32 %v2553, %v2591
        %v2614 = vadd.f32 %v2554, %v2587
        %v2615 = vadd.f32 %v2555, %v2591
        %v2616 = vadd.f32 %v2556, %v2587
        %v2617 = vadd.f32 %v2557, %v2591
        %v2618 = vadd.f32 %v2558, %v2587
        %v2619 = vadd.f32 %v2559, %v2591
        %v2620 = vadd.f32 %v2560, %v2587
        %v2621 = vadd.f32 %v2561, %v2591
        %v2622 = vadd.f32 %v2562, %v2587
        %v2623 = vadd.f32 %v2563, %v2591
        %v2624 = vadd.f32 %v2564, %v2587
        %v2625 = vadd.f32 %v2565, %v2591
        %v2626 = vadd.f32 %v2566, %v2587
        %v2627 = vadd.f32 %v2567, %v2591
        %v2628 = vadd.f32 %v2568, %v2587
        %v2629 = vadd.f32 %v2569, %v2591
        %v2630 = vadd.f32 %v2570, %v2587
        %v2631 = vadd.f32 %v2571, %v2591
        %v2632 = vadd.f32 %v2572, %v2587
        %v2633 = vadd.f32 %v2573, %v2591
        %v2634 = vadd.f32 %v2574, %v2587
        %v2635 = vadd.f32 %v2575, %v2591
        %v2636 = vadd.f32 %v2576, %v2587
        %v2637 = vadd.f32 %v2577, %v2591
        %v2638 = vadd.f32 %v2578, %v2587
        %v2639 = vadd.f32 %v2579, %v2591
        %v2640 = vadd.f32 %v2580, %v2587
        %v2641 = vadd.f32 %v2581, %v2591
        %v2642 = vmax.f32 %v2594, 0.0
        %v2643 = vmax.f32 %v2595, 0.0
        %v2644 = vmax.f32 %v2596, 0.0
        %v2645 = vmax.f32 %v2597, 0.0
        %v2646 = vmax.f32 %v2598, 0.0
        %v2647 = vmax.f32 %v2599, 0.0
        %v2648 = vmax.f32 %v2600, 0.0
        %v2649 = vmax.f32 %v2601, 0.0
        %v2650 = vmax.f32 %v2602, 0.0
        %v2651 = vmax.f32 %v2603, 0.0
        %v2652 = vmax.f32 %v2604, 0.0
        %v2653 = vmax.f32 %v2605, 0.0
        %v2654 = vmax.f32 %v2606, 0.0
        %v2655 = vmax.f32 %v2607, 0.0
        %v2656 = vmax.f32 %v2608, 0.0
        %v2657 = vmax.f32 %v2609, 0.0
        %v2658 = vmax.f32 %v2610, 0.0
        %v2659 = vmax.f32 %v2611, 0.0
        %v2660 = vmax.f32 %v2612, 0.0
        %v2661 = vmax.f32 %v2613, 0.0
        %v2662 = vmax.f32 %v2614, 0.0
        %v2663 = vmax.f32 %v2615, 0.0
        %v2664 = vmax.f32 %v2616, 0.0
        %v2665 = vmax.f32 %v2617, 0.0
        %v2666 = vmax.f32 %v2618, 0.0
        %v2667 = vmax.f32 %v2619, 0.0
        %v2668 = vmax.f32 %v2620, 0.0
        %v2669 = vmax.f32 %v2621, 0.0
        %v2670 = vmax.f32 %v2622, 0.0
        %v2671 = vmax.f32 %v2623, 0.0
        %v2672 = vmax.f32 %v2624, 0.0
        %v2673 = vmax.f32 %v2625, 0.0
        %v2674 = vmax.f32 %v2626, 0.0
        %v2675 = vmax.f32 %v2627, 0.0
        %v2676 = vmax.f32 %v2628, 0.0
        %v2677 = vmax.f32 %v2629, 0.0
        %v2678 = vmax.f32 %v2630, 0.0
        %v2679 = vmax.f32 %v2631, 0.0
        %v2680 = vmax.f32 %v2632, 0.0
        %v2681 = vmax.f32 %v2633, 0.0
        %v2682 = vmax.f32 %v2634, 0.0
        %v2683 = vmax.f32 %v2635, 0.0
        %v2684 = vmax.f32 %v2636, 0.0
        %v2685 = vmax.f32 %v2637, 0.0
        %v2686 = vmax.f32 %v2638, 0.0
        %v2687 = vmax.f32 %v2639, 0.0
        %v2688 = vmax.f32 %v2640, 0.0
        %v2689 = vmax.f32 %v2641, 0.0
        %v2690 = vpack.c.bf16 %v2644, %v2642
        %v2691 = vpack.c.bf16 %v2645, %v2643
        %v2692 = vpack.c.bf16 %v2648, %v2646
        %v2693 = vpack.c.bf16 %v2649, %v2647
        %v2694 = vpack.c.bf16 %v2652, %v2650
        %v2695 = vpack.c.bf16 %v2653, %v2651
        %v2696 = vpack.c.bf16 %v2656, %v2654
        %v2697 = vpack.c.bf16 %v2657, %v2655
        %v2698 = vpack.c.bf16 %v2660, %v2658
        %v2699 = vpack.c.bf16 %v2661, %v2659
        %v2700 = vpack.c.bf16 %v2664, %v2662
        %v2701 = vpack.c.bf16 %v2665, %v2663
        %v2702 = vpack.c.bf16 %v2668, %v2666
        %v2703 = vpack.c.bf16 %v2669, %v2667
        %v2704 = vpack.c.bf16 %v2672, %v2670
        %v2705 = vpack.c.bf16 %v2673, %v2671
        %v2706 = vpack.c.bf16 %v2676, %v2674
        %v2707 = vpack.c.bf16 %v2677, %v2675
        %v2708 = vpack.c.bf16 %v2680, %v2678
        %v2709 = vpack.c.bf16 %v2681, %v2679
        %v2710 = vpack.c.bf16 %v2684, %v2682
        %v2711 = vpack.c.bf16 %v2685, %v2683
        %v2712 = vpack.c.bf16 %v2688, %v2686
        %v2713 = vpack.c.bf16 %v2689, %v2687
        %v2714 = vld [vmem:[%s3] sm:$0xf]
        %v2715 = vld [vmem:[%s3 + $0x4] sm:$0xf]
        %v2716 = vld [vmem:[%s3 + $0x8] sm:$0xf]
        %v2717 = vld [vmem:[%s3 + $0xc] sm:$0xf]
        %v2718 = vld [vmem:[%s3 + $0x10] sm:$0xf]
        %v2719 = vld [vmem:[%s3 + $0x14] sm:$0xf]
        %v2720 = vld [vmem:[%s3 + $0x18] sm:$0xf]
        %v2721 = vld [vmem:[%s3 + $0x1c] sm:$0xf]
        %v2722 = vld [vmem:[%s3 + $0x20] sm:$0xf]
        %v2723 = vld [vmem:[%s3 + $0x24] sm:$0xf]
        %v2724 = vld [vmem:[%s3 + $0x28] sm:$0xf]
        %v2725 = vld [vmem:[%s3 + $0x2c] sm:$0xf]
        %v2726 = vld [vmem:[%s3 + $0x30] sm:$0xf]
        %v2727 = vld [vmem:[%s3 + $0x34] sm:$0xf]
        %v2728 = vld [vmem:[%s3 + $0x38] sm:$0xf]
        %v2729 = vld [vmem:[%s3 + $0x3c] sm:$0xf]
        %v2730 = vld [vmem:[%s3 + $0x40] sm:$0xf]
        %v2731 = vld [vmem:[%s3 + $0x44] sm:$0xf]
        %v2750 = vunpack.c.l.b16 %v2714
        %v2751 = vunpack.c.l.b16 %v2715
        %v2752 = vunpack.c.l.b16 %v2716
        %v2753 = vunpack.c.l.b16 %v2717
        %v2754 = vunpack.c.l.b16 %v2718
        %v2755 = vunpack.c.l.b16 %v2719
        %v2756 = vunpack.c.l.b16 %v2720
        %v2757 = vunpack.c.l.b16 %v2721
        %v2758 = vunpack.c.l.b16 %v2722
        %v2759 = vunpack.c.l.b16 %v2723
        %v2760 = vunpack.c.l.b16 %v2724
        %v2761 = vunpack.c.l.b16 %v2725
        %v2762 = vunpack.c.l.b16 %v2726
        %v2763 = vunpack.c.l.b16 %v2727
        %v2764 = vunpack.c.l.b16 %v2728
        %v2765 = vunpack.c.l.b16 %v2729
        %v2766 = vunpack.c.l.b16 %v2730
        %v2767 = vunpack.c.l.b16 %v2731
        %v2768 = vpack.c.b16 %v2751, %v2750
        %v2769 = vpack.c.b16 %v2753, %v2752
        %v2770 = vpack.c.b16 %v2755, %v2754
        %v2771 = vpack.c.b16 %v2757, %v2756
        %v2772 = vpack.c.b16 %v2759, %v2758
        %v2773 = vpack.c.b16 %v2761, %v2760
        %v2774 = vpack.c.b16 %v2763, %v2762
        %v2775 = vpack.c.b16 %v2765, %v2764
        %v2776 = vpack.c.b16 %v2767, %v2766
        %vm2786 = vcmask 130048
        %v2788 = vsel %vm2786, %v2691, 0
        %v2791 = vsel %vm2786, %v2693, 0
        %v2794 = vsel %vm2786, %v2695, 0
        %v2797 = vsel %vm2786, %v2697, 0
        %v2800 = vsel %vm2786, %v2699, 0
        %v2803 = vsel %vm2786, %v2701, 0
        %v2806 = vsel %vm2786, %v2703, 0
        %v2809 = vsel %vm2786, %v2705, 0
        %v2812 = vsel %vm2786, %v2707, 0
        %v2815 = vsel %vm2786, %v2709, 0
        %v2818 = vsel %vm2786, %v2711, 0
        %v2821 = vsel %vm2786, %v2713, 0
        %2823 = vmatprep.subr.bf16.mxu0 0
        %2824 = vmatpush1.bf16.msra.mxu0 %v2768
        %2825 = vmatprep.subr.bf16.mxu0 0
        %2826 = vmatpush1.bf16.msra.mxu0 %v2769
        %2827 = vmatprep.subr.bf16.mxu0 0
        %2828 = vmatpush1.bf16.msra.mxu0 %v2770
        %2829 = vmatprep.subr.bf16.mxu0 0
        %2830 = vmatpush1.bf16.msra.mxu0 %v2771
        %2831 = vmatprep.subr.bf16.mxu0 0
        %2832 = vmatpush1.bf16.msra.mxu0 %v2772
        %2833 = vmatprep.subr.bf16.mxu0 0
        %2834 = vmatpush1.bf16.msra.mxu0 %v2773
        %2835 = vmatprep.subr.bf16.mxu0 0
        %2836 = vmatpush1.bf16.msra.mxu0 %v2774
        %2837 = vmatprep.subr.bf16.mxu0 0
        %2838 = vmatpush1.bf16.msra.mxu0 %v2775
        %2839 = vmatprep.subr.bf16.mxu0 0
        %2840 = vmatpush1.bf16.msra.mxu0 %v2776
        %2841 = vmatprep.subr.bf16.mxu0 0
        %2842 = vmatpush1.bf16.msra.mxu0 0
        %2843 = vmatprep.subr.bf16.mxu0 0
        %2844 = vmatpush1.bf16.msra.mxu0 0
        %2845 = vmatprep.subr.bf16.mxu0 0
        %2846 = vmatpush1.bf16.msra.mxu0 0
        %2847 = vmatprep.subr.bf16.mxu0 0
        %2848 = vmatpush1.bf16.msra.mxu0 0
        %2849 = vmatprep.subr.bf16.mxu0 0
        %2850 = vmatpush1.bf16.msra.mxu0 0
        %2851 = vmatprep.subr.bf16.mxu0 0
        %2852 = vmatpush1.bf16.msra.mxu0 0
        %2853 = vmatprep.subr.bf16.mxu0 0
        %2854 = vmatpush1.bf16.msra.mxu0 0
        %2855 = vmatprep.mubr.bf16.mxu0 %v2788
        %2856 = vmatmul.mubr.bf16.gmra.mrb[0].mxu0 %v2690
        %v2857 = vpop.f32.mrb[0].mxu0
        %v2858 = vadd.f32 0.0, %v2857
        %v2859 = vpop.f32.mrb[0].mxu0
        %v2860 = vpop.f32.mrb[0].mxu0
        %v2861 = vadd.f32 0.0, %v2860
        %v2862 = vpop.f32.mrb[0].mxu0
        %2863 = vmatprep.mubr.bf16.mxu0 %v2791
        %2864 = vmatmul.mubr.bf16.gmra.mrb[0].mxu0 %v2692
        %v2865 = vpop.f32.mrb[0].mxu0
        %v2866 = vadd.f32 0.0, %v2865
        %v2867 = vpop.f32.mrb[0].mxu0
        %v2868 = vpop.f32.mrb[0].mxu0
        %v2869 = vadd.f32 0.0, %v2868
        %v2870 = vpop.f32.mrb[0].mxu0
        %2871 = vmatprep.mubr.bf16.mxu0 %v2794
        %2872 = vmatmul.mubr.bf16.gmra.mrb[0].mxu0 %v2694
        %v2873 = vpop.f32.mrb[0].mxu0
        %v2874 = vadd.f32 0.0, %v2873
        %v2875 = vpop.f32.mrb[0].mxu0
        %v2876 = vpop.f32.mrb[0].mxu0
        %v2877 = vadd.f32 0.0, %v2876
        %v2878 = vpop.f32.mrb[0].mxu0
        %2879 = vmatprep.mubr.bf16.mxu0 %v2797
        %2880 = vmatmul.mubr.bf16.gmra.mrb[0].mxu0 %v2696
        %v2881 = vpop.f32.mrb[0].mxu0
        %v2882 = vadd.f32 0.0, %v2881
        %v2883 = vpop.f32.mrb[0].mxu0
        %v2884 = vpop.f32.mrb[0].mxu0
        %v2885 = vadd.f32 0.0, %v2884
        %v2886 = vpop.f32.mrb[0].mxu0
        %2887 = vmatprep.mubr.bf16.mxu0 %v2800
        %2888 = vmatmul.mubr.bf16.gmra.mrb[0].mxu0 %v2698
        %v2889 = vpop.f32.mrb[0].mxu0
        %v2890 = vadd.f32 0.0, %v2889
        %v2891 = vpop.f32.mrb[0].mxu0
        %v2892 = vpop.f32.mrb[0].mxu0
        %v2893 = vadd.f32 0.0, %v2892
        %v2894 = vpop.f32.mrb[0].mxu0
        %2895 = vmatprep.mubr.bf16.mxu0 %v2803
        %2896 = vmatmul.mubr.bf16.gmra.mrb[0].mxu0 %v2700
        %v2897 = vpop.f32.mrb[0].mxu0
        %v2898 = vadd.f32 0.0, %v2897
        %v2899 = vpop.f32.mrb[0].mxu0
        %v2900 = vpop.f32.mrb[0].mxu0
        %v2901 = vadd.f32 0.0, %v2900
        %v2902 = vpop.f32.mrb[0].mxu0
        %2903 = vmatprep.mubr.bf16.mxu0 %v2806
        %2904 = vmatmul.mubr.bf16.gmra.mrb[0].mxu0 %v2702
        %v2905 = vpop.f32.mrb[0].mxu0
        %v2906 = vadd.f32 0.0, %v2905
        %v2907 = vpop.f32.mrb[0].mxu0
        %v2908 = vpop.f32.mrb[0].mxu0
        %v2909 = vadd.f32 0.0, %v2908
        %v2910 = vpop.f32.mrb[0].mxu0
        %2911 = vmatprep.mubr.bf16.mxu0 %v2809
        %2912 = vmatmul.mubr.bf16.gmra.mrb[0].mxu0 %v2704
        %v2913 = vpop.f32.mrb[0].mxu0
        %v2914 = vadd.f32 0.0, %v2913
        %v2915 = vpop.f32.mrb[0].mxu0
        %v2916 = vpop.f32.mrb[0].mxu0
        %v2917 = vadd.f32 0.0, %v2916
        %v2918 = vpop.f32.mrb[0].mxu0
        %2919 = vmatprep.mubr.bf16.mxu0 %v2812
        %2920 = vmatmul.mubr.bf16.gmra.mrb[0].mxu0 %v2706
        %v2921 = vpop.f32.mrb[0].mxu0
        %v2922 = vadd.f32 0.0, %v2921
        %v2923 = vpop.f32.mrb[0].mxu0
        %v2924 = vpop.f32.mrb[0].mxu0
        %v2925 = vadd.f32 0.0, %v2924
        %v2926 = vpop.f32.mrb[0].mxu0
        %2927 = vmatprep.mubr.bf16.mxu0 %v2815
        %2928 = vmatmul.mubr.bf16.gmra.mrb[0].mxu0 %v2708
        %v2929 = vpop.f32.mrb[0].mxu0
        %v2930 = vadd.f32 0.0, %v2929
        %v2931 = vpop.f32.mrb[0].mxu0
        %v2932 = vpop.f32.mrb[0].mxu0
        %v2933 = vadd.f32 0.0, %v2932
        %v2934 = vpop.f32.mrb[0].mxu0
        %2935 = vmatprep.mubr.bf16.mxu0 %v2818
        %2936 = vmatmul.mubr.bf16.gmra.mrb[0].mxu0 %v2710
        %v2937 = vpop.f32.mrb[0].mxu0
        %v2938 = vadd.f32 0.0, %v2937
        %v2939 = vpop.f32.mrb[0].mxu0
        %v2940 = vpop.f32.mrb[0].mxu0
        %v2941 = vadd.f32 0.0, %v2940
        %v2942 = vpop.f32.mrb[0].mxu0
        %2943 = vmatprep.mubr.bf16.mxu0 %v2821
        %2944 = vmatmul.mubr.bf16.gmra.mrb[0].mxu0 %v2712
        %v2945 = vpop.f32.mrb[0].mxu0
        %v2946 = vadd.f32 0.0, %v2945
        %v2947 = vpop.f32.mrb[0].mxu0
        %v2948 = vpop.f32.mrb[0].mxu0
        %v2949 = vadd.f32 0.0, %v2948
        %v2950 = vpop.f32.mrb[0].mxu0
        %2951 = vdwg.mxu0
        %v2952 = vld [vmem:[%s4] sm:$0xf]
        %v2953 = vld [vmem:[%s4 + $0x4] sm:$0xf]
        %v2954 = vld [vmem:[%s4 + $0x8] sm:$0xf]
        %v2955 = vld [vmem:[%s4 + $0xc] sm:$0xf]
        %v2956 = vld [vmem:[%s4 + $0x10] sm:$0xf]
        %v2957 = vld [vmem:[%s4 + $0x14] sm:$0xf]
        %v2958 = vld [vmem:[%s4 + $0x18] sm:$0xf]
        %v2959 = vld [vmem:[%s4 + $0x1c] sm:$0xf]
        %v2960 = vld [vmem:[%s4 + $0x20] sm:$0xf]
        %v2961 = vld [vmem:[%s4 + $0x24] sm:$0xf]
        %v2962 = vld [vmem:[%s4 + $0x28] sm:$0xf]
        %v2963 = vld [vmem:[%s4 + $0x2c] sm:$0xf]
        %v2964 = vld [vmem:[%s4 + $0x30] sm:$0xf]
        %v2965 = vld [vmem:[%s4 + $0x34] sm:$0xf]
        %v2966 = vld [vmem:[%s4 + $0x38] sm:$0xf]
        %v2967 = vld [vmem:[%s4 + $0x3c] sm:$0xf]
        %v2968 = vld [vmem:[%s4 + $0x40] sm:$0xf]
        %v2969 = vld [vmem:[%s4 + $0x44] sm:$0xf]
        %v2988 = vunpack.c.l.b16 %v2952
        %v2989 = vunpack.c.l.b16 %v2953
        %v2990 = vunpack.c.l.b16 %v2954
        %v2991 = vunpack.c.l.b16 %v2955
        %v2992 = vunpack.c.l.b16 %v2956
        %v2993 = vunpack.c.l.b16 %v2957
        %v2994 = vunpack.c.l.b16 %v2958
        %v2995 = vunpack.c.l.b16 %v2959
        %v2996 = vunpack.c.l.b16 %v2960
        %v2997 = vunpack.c.l.b16 %v2961
        %v2998 = vunpack.c.l.b16 %v2962
        %v2999 = vunpack.c.l.b16 %v2963
        %v3000 = vunpack.c.l.b16 %v2964
        %v3001 = vunpack.c.l.b16 %v2965
        %v3002 = vunpack.c.l.b16 %v2966
        %v3003 = vunpack.c.l.b16 %v2967
        %v3004 = vunpack.c.l.b16 %v2968
        %v3005 = vunpack.c.l.b16 %v2969
        %v3006 = vpack.c.b16 %v2989, %v2988
        %v3007 = vpack.c.b16 %v2991, %v2990
        %v3008 = vpack.c.b16 %v2993, %v2992
        %v3009 = vpack.c.b16 %v2995, %v2994
        %v3010 = vpack.c.b16 %v2997, %v2996
        %v3011 = vpack.c.b16 %v2999, %v2998
        %v3012 = vpack.c.b16 %v3001, %v3000
        %v3013 = vpack.c.b16 %v3003, %v3002
        %v3014 = vpack.c.b16 %v3005, %v3004
        %3024 = vmatprep.subr.bf16.mxu0 0
        %3025 = vmatpush1.bf16.msra.mxu0 %v3006
        %3026 = vmatprep.subr.bf16.mxu0 0
        %3027 = vmatpush1.bf16.msra.mxu0 %v3007
        %3028 = vmatprep.subr.bf16.mxu0 0
        %3029 = vmatpush1.bf16.msra.mxu0 %v3008
        %3030 = vmatprep.subr.bf16.mxu0 0
        %3031 = vmatpush1.bf16.msra.mxu0 %v3009
        %3032 = vmatprep.subr.bf16.mxu0 0
        %3033 = vmatpush1.bf16.msra.mxu0 %v3010
        %3034 = vmatprep.subr.bf16.mxu0 0
        %3035 = vmatpush1.bf16.msra.mxu0 %v3011
        %3036 = vmatprep.subr.bf16.mxu0 0
        %3037 = vmatpush1.bf16.msra.mxu0 %v3012
        %3038 = vmatprep.subr.bf16.mxu0 0
        %3039 = vmatpush1.bf16.msra.mxu0 %v3013
        %3040 = vmatprep.subr.bf16.mxu0 0
        %3041 = vmatpush1.bf16.msra.mxu0 %v3014
        %3042 = vmatprep.subr.bf16.mxu0 0
        %3043 = vmatpush1.bf16.msra.mxu0 0
        %3044 = vmatprep.subr.bf16.mxu0 0
        %3045 = vmatpush1.bf16.msra.mxu0 0
        %3046 = vmatprep.subr.bf16.mxu0 0
        %3047 = vmatpush1.bf16.msra.mxu0 0
        %3048 = vmatprep.subr.bf16.mxu0 0
        %3049 = vmatpush1.bf16.msra.mxu0 0
        %3050 = vmatprep.subr.bf16.mxu0 0
        %3051 = vmatpush1.bf16.msra.mxu0 0
        %3052 = vmatprep.subr.bf16.mxu0 0
        %3053 = vmatpush1.bf16.msra.mxu0 0
        %3054 = vmatprep.subr.bf16.mxu0 0
        %3055 = vmatpush1.bf16.msra.mxu0 0
        %3056 = vmatprep.mubr.bf16.mxu0 %v2788
        %3057 = vmatmul.mubr.bf16.gmra.mrb[0].mxu0 %v2690
        %v3058 = vpop.f32.mrb[0].mxu0
        %v3059 = vadd.f32 0.0, %v3058
        %v3060 = vpop.f32.mrb[0].mxu0
        %v3061 = vpop.f32.mrb[0].mxu0
        %v3062 = vadd.f32 0.0, %v3061
        %v3063 = vpop.f32.mrb[0].mxu0
        %3064 = vmatprep.mubr.bf16.mxu0 %v2791
        %3065 = vmatmul.mubr.bf16.gmra.mrb[0].mxu0 %v2692
        %v3066 = vpop.f32.mrb[0].mxu0
        %v3067 = vadd.f32 0.0, %v3066
        %v3068 = vpop.f32.mrb[0].mxu0
        %v3069 = vpop.f32.mrb[0].mxu0
        %v3070 = vadd.f32 0.0, %v3069
        %v3071 = vpop.f32.mrb[0].mxu0
        %3072 = vmatprep.mubr.bf16.mxu0 %v2794
        %3073 = vmatmul.mubr.bf16.gmra.mrb[0].mxu0 %v2694
        %v3074 = vpop.f32.mrb[0].mxu0
        %v3075 = vadd.f32 0.0, %v3074
        %v3076 = vpop.f32.mrb[0].mxu0
        %v3077 = vpop.f32.mrb[0].mxu0
        %v3078 = vadd.f32 0.0, %v3077
        %v3079 = vpop.f32.mrb[0].mxu0
        %3080 = vmatprep.mubr.bf16.mxu0 %v2797
        %3081 = vmatmul.mubr.bf16.gmra.mrb[0].mxu0 %v2696
        %v3082 = vpop.f32.mrb[0].mxu0
        %v3083 = vadd.f32 0.0, %v3082
        %v3084 = vpop.f32.mrb[0].mxu0
        %v3085 = vpop.f32.mrb[0].mxu0
        %v3086 = vadd.f32 0.0, %v3085
        %v3087 = vpop.f32.mrb[0].mxu0
        %3088 = vmatprep.mubr.bf16.mxu0 %v2800
        %3089 = vmatmul.mubr.bf16.gmra.mrb[0].mxu0 %v2698
        %v3090 = vpop.f32.mrb[0].mxu0
        %v3091 = vadd.f32 0.0, %v3090
        %v3092 = vpop.f32.mrb[0].mxu0
        %v3093 = vpop.f32.mrb[0].mxu0
        %v3094 = vadd.f32 0.0, %v3093
        %v3095 = vpop.f32.mrb[0].mxu0
        %3096 = vmatprep.mubr.bf16.mxu0 %v2803
        %3097 = vmatmul.mubr.bf16.gmra.mrb[0].mxu0 %v2700
        %v3098 = vpop.f32.mrb[0].mxu0
        %v3099 = vadd.f32 0.0, %v3098
        %v3100 = vpop.f32.mrb[0].mxu0
        %v3101 = vpop.f32.mrb[0].mxu0
        %v3102 = vadd.f32 0.0, %v3101
        %v3103 = vpop.f32.mrb[0].mxu0
        %3104 = vmatprep.mubr.bf16.mxu0 %v2806
        %3105 = vmatmul.mubr.bf16.gmra.mrb[0].mxu0 %v2702
        %v3106 = vpop.f32.mrb[0].mxu0
        %v3107 = vadd.f32 0.0, %v3106
        %v3108 = vpop.f32.mrb[0].mxu0
        %v3109 = vpop.f32.mrb[0].mxu0
        %v3110 = vadd.f32 0.0, %v3109
        %v3111 = vpop.f32.mrb[0].mxu0
        %3112 = vmatprep.mubr.bf16.mxu0 %v2809
        %3113 = vmatmul.mubr.bf16.gmra.mrb[0].mxu0 %v2704
        %v3114 = vpop.f32.mrb[0].mxu0
        %v3115 = vadd.f32 0.0, %v3114
        %v3116 = vpop.f32.mrb[0].mxu0
        %v3117 = vpop.f32.mrb[0].mxu0
        %v3118 = vadd.f32 0.0, %v3117
        %v3119 = vpop.f32.mrb[0].mxu0
        %3120 = vmatprep.mubr.bf16.mxu0 %v2812
        %3121 = vmatmul.mubr.bf16.gmra.mrb[0].mxu0 %v2706
        %v3122 = vpop.f32.mrb[0].mxu0
        %v3123 = vadd.f32 0.0, %v3122
        %v3124 = vpop.f32.mrb[0].mxu0
        %v3125 = vpop.f32.mrb[0].mxu0
        %v3126 = vadd.f32 0.0, %v3125
        %v3127 = vpop.f32.mrb[0].mxu0
        %3128 = vmatprep.mubr.bf16.mxu0 %v2815
        %3129 = vmatmul.mubr.bf16.gmra.mrb[0].mxu0 %v2708
        %v3130 = vpop.f32.mrb[0].mxu0
        %v3131 = vadd.f32 0.0, %v3130
        %v3132 = vpop.f32.mrb[0].mxu0
        %v3133 = vpop.f32.mrb[0].mxu0
        %v3134 = vadd.f32 0.0, %v3133
        %v3135 = vpop.f32.mrb[0].mxu0
        %3136 = vmatprep.mubr.bf16.mxu0 %v2818
        %3137 = vmatmul.mubr.bf16.gmra.mrb[0].mxu0 %v2710
        %v3138 = vpop.f32.mrb[0].mxu0
        %v3139 = vadd.f32 0.0, %v3138
        %v3140 = vpop.f32.mrb[0].mxu0
        %v3141 = vpop.f32.mrb[0].mxu0
        %v3142 = vadd.f32 0.0, %v3141
        %v3143 = vpop.f32.mrb[0].mxu0
        %3144 = vmatprep.mubr.bf16.mxu0 %v2821
        %3145 = vmatmul.mubr.bf16.gmra.mrb[0].mxu0 %v2712
        %v3146 = vpop.f32.mrb[0].mxu0
        %v3147 = vadd.f32 0.0, %v3146
        %v3148 = vpop.f32.mrb[0].mxu0
        %v3149 = vpop.f32.mrb[0].mxu0
        %v3150 = vadd.f32 0.0, %v3149
        %v3151 = vpop.f32.mrb[0].mxu0
        %3152 = vdwg.mxu0
        %v3153 = vmax.f32 %v2858, %v3059
        %v3154 = vmax.f32 %v2861, %v3062
        %v3155 = vmax.f32 %v2866, %v3067
        %v3156 = vmax.f32 %v2869, %v3070
        %v3157 = vmax.f32 %v2874, %v3075
        %v3158 = vmax.f32 %v2877, %v3078
        %v3159 = vmax.f32 %v2882, %v3083
        %v3160 = vmax.f32 %v2885, %v3086
        %v3161 = vmax.f32 %v2890, %v3091
        %v3162 = vmax.f32 %v2893, %v3094
        %v3163 = vmax.f32 %v2898, %v3099
        %v3164 = vmax.f32 %v2901, %v3102
        %v3165 = vmax.f32 %v2906, %v3107
        %v3166 = vmax.f32 %v2909, %v3110
        %v3167 = vmax.f32 %v2914, %v3115
        %v3168 = vmax.f32 %v2917, %v3118
        %v3169 = vmax.f32 %v2922, %v3123
        %v3170 = vmax.f32 %v2925, %v3126
        %v3171 = vmax.f32 %v2930, %v3131
        %v3172 = vmax.f32 %v2933, %v3134
        %v3173 = vmax.f32 %v2938, %v3139
        %v3174 = vmax.f32 %v2941, %v3142
        %v3175 = vmax.f32 %v2946, %v3147
        %v3176 = vmax.f32 %v2949, %v3150
        %v3201 = vcombine.high %v3153, %v3153
        %v3203 = vunpack.c.l.s4 1983009808
        %v3204 = vunpack.c.0.s8 %v3203
        %v3205 = vlaneseq
        %v3206 = vshrl.u32 %v3205, 7
        %v3207 = vsub.s32 %v3204, %v3206
        %v3208 = vrot.slane %v3153, %v3207
        %v3210 = vunpack.c.l.s4 1983009808
        %v3211 = vunpack.c.0.s8 %v3210
        %v3212 = vlaneseq
        %v3213 = vshrl.u32 %v3212, 7
        %v3214 = vsub.s32 %v3211, %v3213
        %v3215 = vrot.slane %v3201, %v3214
        %v3216 = vcombine.high %v3208, %v3208
        %v3217 = vcombine.high %v3215, %v3215
        %v3218 = vcombine.high %v3154, %v3154
        %v3220 = vunpack.c.l.s4 1983009808
        %v3221 = vunpack.c.0.s8 %v3220
        %v3222 = vlaneseq
        %v3223 = vshrl.u32 %v3222, 7
        %v3224 = vsub.s32 %v3221, %v3223
        %v3225 = vrot.slane %v3154, %v3224
        %v3227 = vunpack.c.l.s4 1983009808
        %v3228 = vunpack.c.0.s8 %v3227
        %v3229 = vlaneseq
        %v3230 = vshrl.u32 %v3229, 7
        %v3231 = vsub.s32 %v3228, %v3230
        %v3232 = vrot.slane %v3218, %v3231
        %v3233 = vcombine.high %v3225, %v3225
        %v3234 = vcombine.high %v3232, %v3232
        %v3235 = vcombine.high %v3155, %v3155
        %v3237 = vunpack.c.l.s4 1983009808
        %v3238 = vunpack.c.0.s8 %v3237
        %v3239 = vlaneseq
        %v3240 = vshrl.u32 %v3239, 7
        %v3241 = vsub.s32 %v3238, %v3240
        %v3242 = vrot.slane %v3155, %v3241
        %v3244 = vunpack.c.l.s4 1983009808
        %v3245 = vunpack.c.0.s8 %v3244
        %v3246 = vlaneseq
        %v3247 = vshrl.u32 %v3246, 7
        %v3248 = vsub.s32 %v3245, %v3247
        %v3249 = vrot.slane %v3235, %v3248
        %v3250 = vcombine.high %v3242, %v3242
        %v3251 = vcombine.high %v3249, %v3249
        %v3252 = vcombine.high %v3156, %v3156
        %v3254 = vunpack.c.l.s4 1983009808
        %v3255 = vunpack.c.0.s8 %v3254
        %v3256 = vlaneseq
        %v3257 = vshrl.u32 %v3256, 7
        %v3258 = vsub.s32 %v3255, %v3257
        %v3259 = vrot.slane %v3156, %v3258
        %v3261 = vunpack.c.l.s4 1983009808
        %v3262 = vunpack.c.0.s8 %v3261
        %v3263 = vlaneseq
        %v3264 = vshrl.u32 %v3263, 7
        %v3265 = vsub.s32 %v3262, %v3264
        %v3266 = vrot.slane %v3252, %v3265
        %v3267 = vcombine.high %v3259, %v3259
        %v3268 = vcombine.high %v3266, %v3266
        %v3269 = vcombine.high %v3157, %v3157
        %v3271 = vunpack.c.l.s4 1983009808
        %v3272 = vunpack.c.0.s8 %v3271
        %v3273 = vlaneseq
        %v3274 = vshrl.u32 %v3273, 7
        %v3275 = vsub.s32 %v3272, %v3274
        %v3276 = vrot.slane %v3157, %v3275
        %v3278 = vunpack.c.l.s4 1983009808
        %v3279 = vunpack.c.0.s8 %v3278
        %v3280 = vlaneseq
        %v3281 = vshrl.u32 %v3280, 7
        %v3282 = vsub.s32 %v3279, %v3281
        %v3283 = vrot.slane %v3269, %v3282
        %v3284 = vcombine.high %v3276, %v3276
        %v3285 = vcombine.high %v3283, %v3283
        %v3286 = vcombine.high %v3158, %v3158
        %v3288 = vunpack.c.l.s4 1983009808
        %v3289 = vunpack.c.0.s8 %v3288
        %v3290 = vlaneseq
        %v3291 = vshrl.u32 %v3290, 7
        %v3292 = vsub.s32 %v3289, %v3291
        %v3293 = vrot.slane %v3158, %v3292
        %v3295 = vunpack.c.l.s4 1983009808
        %v3296 = vunpack.c.0.s8 %v3295
        %v3297 = vlaneseq
        %v3298 = vshrl.u32 %v3297, 7
        %v3299 = vsub.s32 %v3296, %v3298
        %v3300 = vrot.slane %v3286, %v3299
        %v3301 = vcombine.high %v3293, %v3293
        %v3302 = vcombine.high %v3300, %v3300
        %v3303 = vcombine.high %v3159, %v3159
        %v3305 = vunpack.c.l.s4 1983009808
        %v3306 = vunpack.c.0.s8 %v3305
        %v3307 = vlaneseq
        %v3308 = vshrl.u32 %v3307, 7
        %v3309 = vsub.s32 %v3306, %v3308
        %v3310 = vrot.slane %v3159, %v3309
        %v3312 = vunpack.c.l.s4 1983009808
        %v3313 = vunpack.c.0.s8 %v3312
        %v3314 = vlaneseq
        %v3315 = vshrl.u32 %v3314, 7
        %v3316 = vsub.s32 %v3313, %v3315
        %v3317 = vrot.slane %v3303, %v3316
        %v3318 = vcombine.high %v3310, %v3310
        %v3319 = vcombine.high %v3317, %v3317
        %v3320 = vcombine.high %v3160, %v3160
        %v3322 = vunpack.c.l.s4 1983009808
        %v3323 = vunpack.c.0.s8 %v3322
        %v3324 = vlaneseq
        %v3325 = vshrl.u32 %v3324, 7
        %v3326 = vsub.s32 %v3323, %v3325
        %v3327 = vrot.slane %v3160, %v3326
        %v3329 = vunpack.c.l.s4 1983009808
        %v3330 = vunpack.c.0.s8 %v3329
        %v3331 = vlaneseq
        %v3332 = vshrl.u32 %v3331, 7
        %v3333 = vsub.s32 %v3330, %v3332
        %v3334 = vrot.slane %v3320, %v3333
        %v3335 = vcombine.high %v3327, %v3327
        %v3336 = vcombine.high %v3334, %v3334
        %v3337 = vcombine.high %v3161, %v3161
        %v3339 = vunpack.c.l.s4 1983009808
        %v3340 = vunpack.c.0.s8 %v3339
        %v3341 = vlaneseq
        %v3342 = vshrl.u32 %v3341, 7
        %v3343 = vsub.s32 %v3340, %v3342
        %v3344 = vrot.slane %v3161, %v3343
        %v3346 = vunpack.c.l.s4 1983009808
        %v3347 = vunpack.c.0.s8 %v3346
        %v3348 = vlaneseq
        %v3349 = vshrl.u32 %v3348, 7
        %v3350 = vsub.s32 %v3347, %v3349
        %v3351 = vrot.slane %v3337, %v3350
        %v3352 = vcombine.high %v3344, %v3344
        %v3353 = vcombine.high %v3351, %v3351
        %v3354 = vcombine.high %v3162, %v3162
        %v3356 = vunpack.c.l.s4 1983009808
        %v3357 = vunpack.c.0.s8 %v3356
        %v3358 = vlaneseq
        %v3359 = vshrl.u32 %v3358, 7
        %v3360 = vsub.s32 %v3357, %v3359
        %v3361 = vrot.slane %v3162, %v3360
        %v3363 = vunpack.c.l.s4 1983009808
        %v3364 = vunpack.c.0.s8 %v3363
        %v3365 = vlaneseq
        %v3366 = vshrl.u32 %v3365, 7
        %v3367 = vsub.s32 %v3364, %v3366
        %v3368 = vrot.slane %v3354, %v3367
        %v3369 = vcombine.high %v3361, %v3361
        %v3370 = vcombine.high %v3368, %v3368
        %v3371 = vcombine.high %v3163, %v3163
        %v3373 = vunpack.c.l.s4 1983009808
        %v3374 = vunpack.c.0.s8 %v3373
        %v3375 = vlaneseq
        %v3376 = vshrl.u32 %v3375, 7
        %v3377 = vsub.s32 %v3374, %v3376
        %v3378 = vrot.slane %v3163, %v3377
        %v3380 = vunpack.c.l.s4 1983009808
        %v3381 = vunpack.c.0.s8 %v3380
        %v3382 = vlaneseq
        %v3383 = vshrl.u32 %v3382, 7
        %v3384 = vsub.s32 %v3381, %v3383
        %v3385 = vrot.slane %v3371, %v3384
        %v3386 = vcombine.high %v3378, %v3378
        %v3387 = vcombine.high %v3385, %v3385
        %v3388 = vcombine.high %v3164, %v3164
        %v3390 = vunpack.c.l.s4 1983009808
        %v3391 = vunpack.c.0.s8 %v3390
        %v3392 = vlaneseq
        %v3393 = vshrl.u32 %v3392, 7
        %v3394 = vsub.s32 %v3391, %v3393
        %v3395 = vrot.slane %v3164, %v3394
        %v3397 = vunpack.c.l.s4 1983009808
        %v3398 = vunpack.c.0.s8 %v3397
        %v3399 = vlaneseq
        %v3400 = vshrl.u32 %v3399, 7
        %v3401 = vsub.s32 %v3398, %v3400
        %v3402 = vrot.slane %v3388, %v3401
        %v3403 = vcombine.high %v3395, %v3395
        %v3404 = vcombine.high %v3402, %v3402
        %v3405 = vcombine.high %v3165, %v3165
        %v3407 = vunpack.c.l.s4 1983009808
        %v3408 = vunpack.c.0.s8 %v3407
        %v3409 = vlaneseq
        %v3410 = vshrl.u32 %v3409, 7
        %v3411 = vsub.s32 %v3408, %v3410
        %v3412 = vrot.slane %v3165, %v3411
        %v3414 = vunpack.c.l.s4 1983009808
        %v3415 = vunpack.c.0.s8 %v3414
        %v3416 = vlaneseq
        %v3417 = vshrl.u32 %v3416, 7
        %v3418 = vsub.s32 %v3415, %v3417
        %v3419 = vrot.slane %v3405, %v3418
        %v3420 = vcombine.high %v3412, %v3412
        %v3421 = vcombine.high %v3419, %v3419
        %v3422 = vcombine.high %v3166, %v3166
        %v3424 = vunpack.c.l.s4 1983009808
        %v3425 = vunpack.c.0.s8 %v3424
        %v3426 = vlaneseq
        %v3427 = vshrl.u32 %v3426, 7
        %v3428 = vsub.s32 %v3425, %v3427
        %v3429 = vrot.slane %v3166, %v3428
        %v3431 = vunpack.c.l.s4 1983009808
        %v3432 = vunpack.c.0.s8 %v3431
        %v3433 = vlaneseq
        %v3434 = vshrl.u32 %v3433, 7
        %v3435 = vsub.s32 %v3432, %v3434
        %v3436 = vrot.slane %v3422, %v3435
        %v3437 = vcombine.high %v3429, %v3429
        %v3438 = vcombine.high %v3436, %v3436
        %v3439 = vcombine.high %v3167, %v3167
        %v3441 = vunpack.c.l.s4 1983009808
        %v3442 = vunpack.c.0.s8 %v3441
        %v3443 = vlaneseq
        %v3444 = vshrl.u32 %v3443, 7
        %v3445 = vsub.s32 %v3442, %v3444
        %v3446 = vrot.slane %v3167, %v3445
        %v3448 = vunpack.c.l.s4 1983009808
        %v3449 = vunpack.c.0.s8 %v3448
        %v3450 = vlaneseq
        %v3451 = vshrl.u32 %v3450, 7
        %v3452 = vsub.s32 %v3449, %v3451
        %v3453 = vrot.slane %v3439, %v3452
        %v3454 = vcombine.high %v3446, %v3446
        %v3455 = vcombine.high %v3453, %v3453
        %v3456 = vcombine.high %v3168, %v3168
        %v3458 = vunpack.c.l.s4 1983009808
        %v3459 = vunpack.c.0.s8 %v3458
        %v3460 = vlaneseq
        %v3461 = vshrl.u32 %v3460, 7
        %v3462 = vsub.s32 %v3459, %v3461
        %v3463 = vrot.slane %v3168, %v3462
        %v3465 = vunpack.c.l.s4 1983009808
        %v3466 = vunpack.c.0.s8 %v3465
        %v3467 = vlaneseq
        %v3468 = vshrl.u32 %v3467, 7
        %v3469 = vsub.s32 %v3466, %v3468
        %v3470 = vrot.slane %v3456, %v3469
        %v3471 = vcombine.high %v3463, %v3463
        %v3472 = vcombine.high %v3470, %v3470
        %v3473 = vcombine.high %v3169, %v3169
        %v3475 = vunpack.c.l.s4 1983009808
        %v3476 = vunpack.c.0.s8 %v3475
        %v3477 = vlaneseq
        %v3478 = vshrl.u32 %v3477, 7
        %v3479 = vsub.s32 %v3476, %v3478
        %v3480 = vrot.slane %v3169, %v3479
        %v3482 = vunpack.c.l.s4 1983009808
        %v3483 = vunpack.c.0.s8 %v3482
        %v3484 = vlaneseq
        %v3485 = vshrl.u32 %v3484, 7
        %v3486 = vsub.s32 %v3483, %v3485
        %v3487 = vrot.slane %v3473, %v3486
        %v3488 = vcombine.high %v3480, %v3480
        %v3489 = vcombine.high %v3487, %v3487
        %v3490 = vcombine.high %v3170, %v3170
        %v3492 = vunpack.c.l.s4 1983009808
        %v3493 = vunpack.c.0.s8 %v3492
        %v3494 = vlaneseq
        %v3495 = vshrl.u32 %v3494, 7
        %v3496 = vsub.s32 %v3493, %v3495
        %v3497 = vrot.slane %v3170, %v3496
        %v3499 = vunpack.c.l.s4 1983009808
        %v3500 = vunpack.c.0.s8 %v3499
        %v3501 = vlaneseq
        %v3502 = vshrl.u32 %v3501, 7
        %v3503 = vsub.s32 %v3500, %v3502
        %v3504 = vrot.slane %v3490, %v3503
        %v3505 = vcombine.high %v3497, %v3497
        %v3506 = vcombine.high %v3504, %v3504
        %v3507 = vcombine.high %v3171, %v3171
        %v3509 = vunpack.c.l.s4 1983009808
        %v3510 = vunpack.c.0.s8 %v3509
        %v3511 = vlaneseq
        %v3512 = vshrl.u32 %v3511, 7
        %v3513 = vsub.s32 %v3510, %v3512
        %v3514 = vrot.slane %v3171, %v3513
        %v3516 = vunpack.c.l.s4 1983009808
        %v3517 = vunpack.c.0.s8 %v3516
        %v3518 = vlaneseq
        %v3519 = vshrl.u32 %v3518, 7
        %v3520 = vsub.s32 %v3517, %v3519
        %v3521 = vrot.slane %v3507, %v3520
        %v3522 = vcombine.high %v3514, %v3514
        %v3523 = vcombine.high %v3521, %v3521
        %v3524 = vcombine.high %v3172, %v3172
        %v3526 = vunpack.c.l.s4 1983009808
        %v3527 = vunpack.c.0.s8 %v3526
        %v3528 = vlaneseq
        %v3529 = vshrl.u32 %v3528, 7
        %v3530 = vsub.s32 %v3527, %v3529
        %v3531 = vrot.slane %v3172, %v3530
        %v3533 = vunpack.c.l.s4 1983009808
        %v3534 = vunpack.c.0.s8 %v3533
        %v3535 = vlaneseq
        %v3536 = vshrl.u32 %v3535, 7
        %v3537 = vsub.s32 %v3534, %v3536
        %v3538 = vrot.slane %v3524, %v3537
        %v3539 = vcombine.high %v3531, %v3531
        %v3540 = vcombine.high %v3538, %v3538
        %v3541 = vcombine.high %v3173, %v3173
        %v3543 = vunpack.c.l.s4 1983009808
        %v3544 = vunpack.c.0.s8 %v3543
        %v3545 = vlaneseq
        %v3546 = vshrl.u32 %v3545, 7
        %v3547 = vsub.s32 %v3544, %v3546
        %v3548 = vrot.slane %v3173, %v3547
        %v3550 = vunpack.c.l.s4 1983009808
        %v3551 = vunpack.c.0.s8 %v3550
        %v3552 = vlaneseq
        %v3553 = vshrl.u32 %v3552, 7
        %v3554 = vsub.s32 %v3551, %v3553
        %v3555 = vrot.slane %v3541, %v3554
        %v3556 = vcombine.high %v3548, %v3548
        %v3557 = vcombine.high %v3555, %v3555
        %v3558 = vcombine.high %v3174, %v3174
        %v3560 = vunpack.c.l.s4 1983009808
        %v3561 = vunpack.c.0.s8 %v3560
        %v3562 = vlaneseq
        %v3563 = vshrl.u32 %v3562, 7
        %v3564 = vsub.s32 %v3561, %v3563
        %v3565 = vrot.slane %v3174, %v3564
        %v3567 = vunpack.c.l.s4 1983009808
        %v3568 = vunpack.c.0.s8 %v3567
        %v3569 = vlaneseq
        %v3570 = vshrl.u32 %v3569, 7
        %v3571 = vsub.s32 %v3568, %v3570
        %v3572 = vrot.slane %v3558, %v3571
        %v3573 = vcombine.high %v3565, %v3565
        %v3574 = vcombine.high %v3572, %v3572
        %v3575 = vcombine.high %v3175, %v3175
        %v3577 = vunpack.c.l.s4 1983009808
        %v3578 = vunpack.c.0.s8 %v3577
        %v3579 = vlaneseq
        %v3580 = vshrl.u32 %v3579, 7
        %v3581 = vsub.s32 %v3578, %v3580
        %v3582 = vrot.slane %v3175, %v3581
        %v3584 = vunpack.c.l.s4 1983009808
        %v3585 = vunpack.c.0.s8 %v3584
        %v3586 = vlaneseq
        %v3587 = vshrl.u32 %v3586, 7
        %v3588 = vsub.s32 %v3585, %v3587
        %v3589 = vrot.slane %v3575, %v3588
        %v3590 = vcombine.high %v3582, %v3582
        %v3591 = vcombine.high %v3589, %v3589
        %v3592 = vcombine.high %v3176, %v3176
        %v3594 = vunpack.c.l.s4 1983009808
        %v3595 = vunpack.c.0.s8 %v3594
        %v3596 = vlaneseq
        %v3597 = vshrl.u32 %v3596, 7
        %v3598 = vsub.s32 %v3595, %v3597
        %v3599 = vrot.slane %v3176, %v3598
        %v3601 = vunpack.c.l.s4 1983009808
        %v3602 = vunpack.c.0.s8 %v3601
        %v3603 = vlaneseq
        %v3604 = vshrl.u32 %v3603, 7
        %v3605 = vsub.s32 %v3602, %v3604
        %v3606 = vrot.slane %v3592, %v3605
        %v3607 = vcombine.high %v3599, %v3599
        %v3608 = vcombine.high %v3606, %v3606
        %vm3705 = vcmask 582656
        %v3706 = vsel %vm3705, %v3208, -inf
        %v3707 = vrot.slane %v3706, 4
        %v3708 = vmax.f32 %v3706, %v3707
        %v3709 = vrot.slane %v3708, 2
        %v3710 = vmax.f32 %v3708, %v3709
        %v3711 = vrot.slane %v3710, 1
        %v3712 = vmax.f32 %v3710, %v3711
        %v3713 = vsel %vm3705, %v3216, -inf
        %v3714 = vrot.slane %v3713, 4
        %v3715 = vmax.f32 %v3713, %v3714
        %v3716 = vrot.slane %v3715, 2
        %v3717 = vmax.f32 %v3715, %v3716
        %v3718 = vrot.slane %v3717, 1
        %v3719 = vmax.f32 %v3717, %v3718
        %v3720 = vsel %vm3705, %v3215, -inf
        %v3721 = vrot.slane %v3720, 4
        %v3722 = vmax.f32 %v3720, %v3721
        %v3723 = vrot.slane %v3722, 2
        %v3724 = vmax.f32 %v3722, %v3723
        %v3725 = vrot.slane %v3724, 1
        %v3726 = vmax.f32 %v3724, %v3725
        %v3727 = vsel %vm3705, %v3217, -inf
        %v3728 = vrot.slane %v3727, 4
        %v3729 = vmax.f32 %v3727, %v3728
        %v3730 = vrot.slane %v3729, 2
        %v3731 = vmax.f32 %v3729, %v3730
        %v3732 = vrot.slane %v3731, 1
        %v3733 = vmax.f32 %v3731, %v3732
        %v3734 = vsel %vm3705, %v3225, -inf
        %v3735 = vrot.slane %v3734, 4
        %v3736 = vmax.f32 %v3734, %v3735
        %v3737 = vrot.slane %v3736, 2
        %v3738 = vmax.f32 %v3736, %v3737
        %v3739 = vrot.slane %v3738, 1
        %v3740 = vmax.f32 %v3738, %v3739
        %v3741 = vsel %vm3705, %v3233, -inf
        %v3742 = vrot.slane %v3741, 4
        %v3743 = vmax.f32 %v3741, %v3742
        %v3744 = vrot.slane %v3743, 2
        %v3745 = vmax.f32 %v3743, %v3744
        %v3746 = vrot.slane %v3745, 1
        %v3747 = vmax.f32 %v3745, %v3746
        %v3748 = vsel %vm3705, %v3232, -inf
        %v3749 = vrot.slane %v3748, 4
        %v3750 = vmax.f32 %v3748, %v3749
        %v3751 = vrot.slane %v3750, 2
        %v3752 = vmax.f32 %v3750, %v3751
        %v3753 = vrot.slane %v3752, 1
        %v3754 = vmax.f32 %v3752, %v3753
        %v3755 = vsel %vm3705, %v3234, -inf
        %v3756 = vrot.slane %v3755, 4
        %v3757 = vmax.f32 %v3755, %v3756
        %v3758 = vrot.slane %v3757, 2
        %v3759 = vmax.f32 %v3757, %v3758
        %v3760 = vrot.slane %v3759, 1
        %v3761 = vmax.f32 %v3759, %v3760
        %v3762 = vsel %vm3705, %v3242, -inf
        %v3763 = vrot.slane %v3762, 4
        %v3764 = vmax.f32 %v3762, %v3763
        %v3765 = vrot.slane %v3764, 2
        %v3766 = vmax.f32 %v3764, %v3765
        %v3767 = vrot.slane %v3766, 1
        %v3768 = vmax.f32 %v3766, %v3767
        %v3769 = vsel %vm3705, %v3250, -inf
        %v3770 = vrot.slane %v3769, 4
        %v3771 = vmax.f32 %v3769, %v3770
        %v3772 = vrot.slane %v3771, 2
        %v3773 = vmax.f32 %v3771, %v3772
        %v3774 = vrot.slane %v3773, 1
        %v3775 = vmax.f32 %v3773, %v3774
        %v3776 = vsel %vm3705, %v3249, -inf
        %v3777 = vrot.slane %v3776, 4
        %v3778 = vmax.f32 %v3776, %v3777
        %v3779 = vrot.slane %v3778, 2
        %v3780 = vmax.f32 %v3778, %v3779
        %v3781 = vrot.slane %v3780, 1
        %v3782 = vmax.f32 %v3780, %v3781
        %v3783 = vsel %vm3705, %v3251, -inf
        %v3784 = vrot.slane %v3783, 4
        %v3785 = vmax.f32 %v3783, %v3784
        %v3786 = vrot.slane %v3785, 2
        %v3787 = vmax.f32 %v3785, %v3786
        %v3788 = vrot.slane %v3787, 1
        %v3789 = vmax.f32 %v3787, %v3788
        %v3790 = vsel %vm3705, %v3259, -inf
        %v3791 = vrot.slane %v3790, 4
        %v3792 = vmax.f32 %v3790, %v3791
        %v3793 = vrot.slane %v3792, 2
        %v3794 = vmax.f32 %v3792, %v3793
        %v3795 = vrot.slane %v3794, 1
        %v3796 = vmax.f32 %v3794, %v3795
        %v3797 = vsel %vm3705, %v3267, -inf
        %v3798 = vrot.slane %v3797, 4
        %v3799 = vmax.f32 %v3797, %v3798
        %v3800 = vrot.slane %v3799, 2
        %v3801 = vmax.f32 %v3799, %v3800
        %v3802 = vrot.slane %v3801, 1
        %v3803 = vmax.f32 %v3801, %v3802
        %v3804 = vsel %vm3705, %v3266, -inf
        %v3805 = vrot.slane %v3804, 4
        %v3806 = vmax.f32 %v3804, %v3805
        %v3807 = vrot.slane %v3806, 2
        %v3808 = vmax.f32 %v3806, %v3807
        %v3809 = vrot.slane %v3808, 1
        %v3810 = vmax.f32 %v3808, %v3809
        %v3811 = vsel %vm3705, %v3268, -inf
        %v3812 = vrot.slane %v3811, 4
        %v3813 = vmax.f32 %v3811, %v3812
        %v3814 = vrot.slane %v3813, 2
        %v3815 = vmax.f32 %v3813, %v3814
        %v3816 = vrot.slane %v3815, 1
        %v3817 = vmax.f32 %v3815, %v3816
        %v3818 = vsel %vm3705, %v3276, -inf
        %v3819 = vrot.slane %v3818, 4
        %v3820 = vmax.f32 %v3818, %v3819
        %v3821 = vrot.slane %v3820, 2
        %v3822 = vmax.f32 %v3820, %v3821
        %v3823 = vrot.slane %v3822, 1
        %v3824 = vmax.f32 %v3822, %v3823
        %v3825 = vsel %vm3705, %v3284, -inf
        %v3826 = vrot.slane %v3825, 4
        %v3827 = vmax.f32 %v3825, %v3826
        %v3828 = vrot.slane %v3827, 2
        %v3829 = vmax.f32 %v3827, %v3828
        %v3830 = vrot.slane %v3829, 1
        %v3831 = vmax.f32 %v3829, %v3830
        %v3832 = vsel %vm3705, %v3283, -inf
        %v3833 = vrot.slane %v3832, 4
        %v3834 = vmax.f32 %v3832, %v3833
        %v3835 = vrot.slane %v3834, 2
        %v3836 = vmax.f32 %v3834, %v3835
        %v3837 = vrot.slane %v3836, 1
        %v3838 = vmax.f32 %v3836, %v3837
        %v3839 = vsel %vm3705, %v3285, -inf
        %v3840 = vrot.slane %v3839, 4
        %v3841 = vmax.f32 %v3839, %v3840
        %v3842 = vrot.slane %v3841, 2
        %v3843 = vmax.f32 %v3841, %v3842
        %v3844 = vrot.slane %v3843, 1
        %v3845 = vmax.f32 %v3843, %v3844
        %v3846 = vsel %vm3705, %v3293, -inf
        %v3847 = vrot.slane %v3846, 4
        %v3848 = vmax.f32 %v3846, %v3847
        %v3849 = vrot.slane %v3848, 2
        %v3850 = vmax.f32 %v3848, %v3849
        %v3851 = vrot.slane %v3850, 1
        %v3852 = vmax.f32 %v3850, %v3851
        %v3853 = vsel %vm3705, %v3301, -inf
        %v3854 = vrot.slane %v3853, 4
        %v3855 = vmax.f32 %v3853, %v3854
        %v3856 = vrot.slane %v3855, 2
        %v3857 = vmax.f32 %v3855, %v3856
        %v3858 = vrot.slane %v3857, 1
        %v3859 = vmax.f32 %v3857, %v3858
        %v3860 = vsel %vm3705, %v3300, -inf
        %v3861 = vrot.slane %v3860, 4
        %v3862 = vmax.f32 %v3860, %v3861
        %v3863 = vrot.slane %v3862, 2
        %v3864 = vmax.f32 %v3862, %v3863
        %v3865 = vrot.slane %v3864, 1
        %v3866 = vmax.f32 %v3864, %v3865
        %v3867 = vsel %vm3705, %v3302, -inf
        %v3868 = vrot.slane %v3867, 4
        %v3869 = vmax.f32 %v3867, %v3868
        %v3870 = vrot.slane %v3869, 2
        %v3871 = vmax.f32 %v3869, %v3870
        %v3872 = vrot.slane %v3871, 1
        %v3873 = vmax.f32 %v3871, %v3872
        %v3874 = vsel %vm3705, %v3310, -inf
        %v3875 = vrot.slane %v3874, 4
        %v3876 = vmax.f32 %v3874, %v3875
        %v3877 = vrot.slane %v3876, 2
        %v3878 = vmax.f32 %v3876, %v3877
        %v3879 = vrot.slane %v3878, 1
        %v3880 = vmax.f32 %v3878, %v3879
        %v3881 = vsel %vm3705, %v3318, -inf
        %v3882 = vrot.slane %v3881, 4
        %v3883 = vmax.f32 %v3881, %v3882
        %v3884 = vrot.slane %v3883, 2
        %v3885 = vmax.f32 %v3883, %v3884
        %v3886 = vrot.slane %v3885, 1
        %v3887 = vmax.f32 %v3885, %v3886
        %v3888 = vsel %vm3705, %v3317, -inf
        %v3889 = vrot.slane %v3888, 4
        %v3890 = vmax.f32 %v3888, %v3889
        %v3891 = vrot.slane %v3890, 2
        %v3892 = vmax.f32 %v3890, %v3891
        %v3893 = vrot.slane %v3892, 1
        %v3894 = vmax.f32 %v3892, %v3893
        %v3895 = vsel %vm3705, %v3319, -inf
        %v3896 = vrot.slane %v3895, 4
        %v3897 = vmax.f32 %v3895, %v3896
        %v3898 = vrot.slane %v3897, 2
        %v3899 = vmax.f32 %v3897, %v3898
        %v3900 = vrot.slane %v3899, 1
        %v3901 = vmax.f32 %v3899, %v3900
        %v3902 = vsel %vm3705, %v3327, -inf
        %v3903 = vrot.slane %v3902, 4
        %v3904 = vmax.f32 %v3902, %v3903
        %v3905 = vrot.slane %v3904, 2
        %v3906 = vmax.f32 %v3904, %v3905
        %v3907 = vrot.slane %v3906, 1
        %v3908 = vmax.f32 %v3906, %v3907
        %v3909 = vsel %vm3705, %v3335, -inf
        %v3910 = vrot.slane %v3909, 4
        %v3911 = vmax.f32 %v3909, %v3910
        %v3912 = vrot.slane %v3911, 2
        %v3913 = vmax.f32 %v3911, %v3912
        %v3914 = vrot.slane %v3913, 1
        %v3915 = vmax.f32 %v3913, %v3914
        %v3916 = vsel %vm3705, %v3334, -inf
        %v3917 = vrot.slane %v3916, 4
        %v3918 = vmax.f32 %v3916, %v3917
        %v3919 = vrot.slane %v3918, 2
        %v3920 = vmax.f32 %v3918, %v3919
        %v3921 = vrot.slane %v3920, 1
        %v3922 = vmax.f32 %v3920, %v3921
        %v3923 = vsel %vm3705, %v3336, -inf
        %v3924 = vrot.slane %v3923, 4
        %v3925 = vmax.f32 %v3923, %v3924
        %v3926 = vrot.slane %v3925, 2
        %v3927 = vmax.f32 %v3925, %v3926
        %v3928 = vrot.slane %v3927, 1
        %v3929 = vmax.f32 %v3927, %v3928
        %v3930 = vsel %vm3705, %v3344, -inf
        %v3931 = vrot.slane %v3930, 4
        %v3932 = vmax.f32 %v3930, %v3931
        %v3933 = vrot.slane %v3932, 2
        %v3934 = vmax.f32 %v3932, %v3933
        %v3935 = vrot.slane %v3934, 1
        %v3936 = vmax.f32 %v3934, %v3935
        %v3937 = vsel %vm3705, %v3352, -inf
        %v3938 = vrot.slane %v3937, 4
        %v3939 = vmax.f32 %v3937, %v3938
        %v3940 = vrot.slane %v3939, 2
        %v3941 = vmax.f32 %v3939, %v3940
        %v3942 = vrot.slane %v3941, 1
        %v3943 = vmax.f32 %v3941, %v3942
        %v3944 = vsel %vm3705, %v3351, -inf
        %v3945 = vrot.slane %v3944, 4
        %v3946 = vmax.f32 %v3944, %v3945
        %v3947 = vrot.slane %v3946, 2
        %v3948 = vmax.f32 %v3946, %v3947
        %v3949 = vrot.slane %v3948, 1
        %v3950 = vmax.f32 %v3948, %v3949
        %v3951 = vsel %vm3705, %v3353, -inf
        %v3952 = vrot.slane %v3951, 4
        %v3953 = vmax.f32 %v3951, %v3952
        %v3954 = vrot.slane %v3953, 2
        %v3955 = vmax.f32 %v3953, %v3954
        %v3956 = vrot.slane %v3955, 1
        %v3957 = vmax.f32 %v3955, %v3956
        %v3958 = vsel %vm3705, %v3361, -inf
        %v3959 = vrot.slane %v3958, 4
        %v3960 = vmax.f32 %v3958, %v3959
        %v3961 = vrot.slane %v3960, 2
        %v3962 = vmax.f32 %v3960, %v3961
        %v3963 = vrot.slane %v3962, 1
        %v3964 = vmax.f32 %v3962, %v3963
        %v3965 = vsel %vm3705, %v3369, -inf
        %v3966 = vrot.slane %v3965, 4
        %v3967 = vmax.f32 %v3965, %v3966
        %v3968 = vrot.slane %v3967, 2
        %v3969 = vmax.f32 %v3967, %v3968
        %v3970 = vrot.slane %v3969, 1
        %v3971 = vmax.f32 %v3969, %v3970
        %v3972 = vsel %vm3705, %v3368, -inf
        %v3973 = vrot.slane %v3972, 4
        %v3974 = vmax.f32 %v3972, %v3973
        %v3975 = vrot.slane %v3974, 2
        %v3976 = vmax.f32 %v3974, %v3975
        %v3977 = vrot.slane %v3976, 1
        %v3978 = vmax.f32 %v3976, %v3977
        %v3979 = vsel %vm3705, %v3370, -inf
        %v3980 = vrot.slane %v3979, 4
        %v3981 = vmax.f32 %v3979, %v3980
        %v3982 = vrot.slane %v3981, 2
        %v3983 = vmax.f32 %v3981, %v3982
        %v3984 = vrot.slane %v3983, 1
        %v3985 = vmax.f32 %v3983, %v3984
        %v3986 = vsel %vm3705, %v3378, -inf
        %v3987 = vrot.slane %v3986, 4
        %v3988 = vmax.f32 %v3986, %v3987
        %v3989 = vrot.slane %v3988, 2
        %v3990 = vmax.f32 %v3988, %v3989
        %v3991 = vrot.slane %v3990, 1
        %v3992 = vmax.f32 %v3990, %v3991
        %v3993 = vsel %vm3705, %v3386, -inf
        %v3994 = vrot.slane %v3993, 4
        %v3995 = vmax.f32 %v3993, %v3994
        %v3996 = vrot.slane %v3995, 2
        %v3997 = vmax.f32 %v3995, %v3996
        %v3998 = vrot.slane %v3997, 1
        %v3999 = vmax.f32 %v3997, %v3998
        %v4000 = vsel %vm3705, %v3385, -inf
        %v4001 = vrot.slane %v4000, 4
        %v4002 = vmax.f32 %v4000, %v4001
        %v4003 = vrot.slane %v4002, 2
        %v4004 = vmax.f32 %v4002, %v4003
        %v4005 = vrot.slane %v4004, 1
        %v4006 = vmax.f32 %v4004, %v4005
        %v4007 = vsel %vm3705, %v3387, -inf
        %v4008 = vrot.slane %v4007, 4
        %v4009 = vmax.f32 %v4007, %v4008
        %v4010 = vrot.slane %v4009, 2
        %v4011 = vmax.f32 %v4009, %v4010
        %v4012 = vrot.slane %v4011, 1
        %v4013 = vmax.f32 %v4011, %v4012
        %v4014 = vsel %vm3705, %v3395, -inf
        %v4015 = vrot.slane %v4014, 4
        %v4016 = vmax.f32 %v4014, %v4015
        %v4017 = vrot.slane %v4016, 2
        %v4018 = vmax.f32 %v4016, %v4017
        %v4019 = vrot.slane %v4018, 1
        %v4020 = vmax.f32 %v4018, %v4019
        %v4021 = vsel %vm3705, %v3403, -inf
        %v4022 = vrot.slane %v4021, 4
        %v4023 = vmax.f32 %v4021, %v4022
        %v4024 = vrot.slane %v4023, 2
        %v4025 = vmax.f32 %v4023, %v4024
        %v4026 = vrot.slane %v4025, 1
        %v4027 = vmax.f32 %v4025, %v4026
        %v4028 = vsel %vm3705, %v3402, -inf
        %v4029 = vrot.slane %v4028, 4
        %v4030 = vmax.f32 %v4028, %v4029
        %v4031 = vrot.slane %v4030, 2
        %v4032 = vmax.f32 %v4030, %v4031
        %v4033 = vrot.slane %v4032, 1
        %v4034 = vmax.f32 %v4032, %v4033
        %v4035 = vsel %vm3705, %v3404, -inf
        %v4036 = vrot.slane %v4035, 4
        %v4037 = vmax.f32 %v4035, %v4036
        %v4038 = vrot.slane %v4037, 2
        %v4039 = vmax.f32 %v4037, %v4038
        %v4040 = vrot.slane %v4039, 1
        %v4041 = vmax.f32 %v4039, %v4040
        %v4042 = vsel %vm3705, %v3412, -inf
        %v4043 = vrot.slane %v4042, 4
        %v4044 = vmax.f32 %v4042, %v4043
        %v4045 = vrot.slane %v4044, 2
        %v4046 = vmax.f32 %v4044, %v4045
        %v4047 = vrot.slane %v4046, 1
        %v4048 = vmax.f32 %v4046, %v4047
        %v4049 = vsel %vm3705, %v3420, -inf
        %v4050 = vrot.slane %v4049, 4
        %v4051 = vmax.f32 %v4049, %v4050
        %v4052 = vrot.slane %v4051, 2
        %v4053 = vmax.f32 %v4051, %v4052
        %v4054 = vrot.slane %v4053, 1
        %v4055 = vmax.f32 %v4053, %v4054
        %v4056 = vsel %vm3705, %v3419, -inf
        %v4057 = vrot.slane %v4056, 4
        %v4058 = vmax.f32 %v4056, %v4057
        %v4059 = vrot.slane %v4058, 2
        %v4060 = vmax.f32 %v4058, %v4059
        %v4061 = vrot.slane %v4060, 1
        %v4062 = vmax.f32 %v4060, %v4061
        %v4063 = vsel %vm3705, %v3421, -inf
        %v4064 = vrot.slane %v4063, 4
        %v4065 = vmax.f32 %v4063, %v4064
        %v4066 = vrot.slane %v4065, 2
        %v4067 = vmax.f32 %v4065, %v4066
        %v4068 = vrot.slane %v4067, 1
        %v4069 = vmax.f32 %v4067, %v4068
        %v4070 = vsel %vm3705, %v3429, -inf
        %v4071 = vrot.slane %v4070, 4
        %v4072 = vmax.f32 %v4070, %v4071
        %v4073 = vrot.slane %v4072, 2
        %v4074 = vmax.f32 %v4072, %v4073
        %v4075 = vrot.slane %v4074, 1
        %v4076 = vmax.f32 %v4074, %v4075
        %v4077 = vsel %vm3705, %v3437, -inf
        %v4078 = vrot.slane %v4077, 4
        %v4079 = vmax.f32 %v4077, %v4078
        %v4080 = vrot.slane %v4079, 2
        %v4081 = vmax.f32 %v4079, %v4080
        %v4082 = vrot.slane %v4081, 1
        %v4083 = vmax.f32 %v4081, %v4082
        %v4084 = vsel %vm3705, %v3436, -inf
        %v4085 = vrot.slane %v4084, 4
        %v4086 = vmax.f32 %v4084, %v4085
        %v4087 = vrot.slane %v4086, 2
        %v4088 = vmax.f32 %v4086, %v4087
        %v4089 = vrot.slane %v4088, 1
        %v4090 = vmax.f32 %v4088, %v4089
        %v4091 = vsel %vm3705, %v3438, -inf
        %v4092 = vrot.slane %v4091, 4
        %v4093 = vmax.f32 %v4091, %v4092
        %v4094 = vrot.slane %v4093, 2
        %v4095 = vmax.f32 %v4093, %v4094
        %v4096 = vrot.slane %v4095, 1
        %v4097 = vmax.f32 %v4095, %v4096
        %v4098 = vsel %vm3705, %v3446, -inf
        %v4099 = vrot.slane %v4098, 4
        %v4100 = vmax.f32 %v4098, %v4099
        %v4101 = vrot.slane %v4100, 2
        %v4102 = vmax.f32 %v4100, %v4101
        %v4103 = vrot.slane %v4102, 1
        %v4104 = vmax.f32 %v4102, %v4103
        %v4105 = vsel %vm3705, %v3454, -inf
        %v4106 = vrot.slane %v4105, 4
        %v4107 = vmax.f32 %v4105, %v4106
        %v4108 = vrot.slane %v4107, 2
        %v4109 = vmax.f32 %v4107, %v4108
        %v4110 = vrot.slane %v4109, 1
        %v4111 = vmax.f32 %v4109, %v4110
        %v4112 = vsel %vm3705, %v3453, -inf
        %v4113 = vrot.slane %v4112, 4
        %v4114 = vmax.f32 %v4112, %v4113
        %v4115 = vrot.slane %v4114, 2
        %v4116 = vmax.f32 %v4114, %v4115
        %v4117 = vrot.slane %v4116, 1
        %v4118 = vmax.f32 %v4116, %v4117
        %v4119 = vsel %vm3705, %v3455, -inf
        %v4120 = vrot.slane %v4119, 4
        %v4121 = vmax.f32 %v4119, %v4120
        %v4122 = vrot.slane %v4121, 2
        %v4123 = vmax.f32 %v4121, %v4122
        %v4124 = vrot.slane %v4123, 1
        %v4125 = vmax.f32 %v4123, %v4124
        %v4126 = vsel %vm3705, %v3463, -inf
        %v4127 = vrot.slane %v4126, 4
        %v4128 = vmax.f32 %v4126, %v4127
        %v4129 = vrot.slane %v4128, 2
        %v4130 = vmax.f32 %v4128, %v4129
        %v4131 = vrot.slane %v4130, 1
        %v4132 = vmax.f32 %v4130, %v4131
        %v4133 = vsel %vm3705, %v3471, -inf
        %v4134 = vrot.slane %v4133, 4
        %v4135 = vmax.f32 %v4133, %v4134
        %v4136 = vrot.slane %v4135, 2
        %v4137 = vmax.f32 %v4135, %v4136
        %v4138 = vrot.slane %v4137, 1
        %v4139 = vmax.f32 %v4137, %v4138
        %v4140 = vsel %vm3705, %v3470, -inf
        %v4141 = vrot.slane %v4140, 4
        %v4142 = vmax.f32 %v4140, %v4141
        %v4143 = vrot.slane %v4142, 2
        %v4144 = vmax.f32 %v4142, %v4143
        %v4145 = vrot.slane %v4144, 1
        %v4146 = vmax.f32 %v4144, %v4145
        %v4147 = vsel %vm3705, %v3472, -inf
        %v4148 = vrot.slane %v4147, 4
        %v4149 = vmax.f32 %v4147, %v4148
        %v4150 = vrot.slane %v4149, 2
        %v4151 = vmax.f32 %v4149, %v4150
        %v4152 = vrot.slane %v4151, 1
        %v4153 = vmax.f32 %v4151, %v4152
        %v4154 = vsel %vm3705, %v3480, -inf
        %v4155 = vrot.slane %v4154, 4
        %v4156 = vmax.f32 %v4154, %v4155
        %v4157 = vrot.slane %v4156, 2
        %v4158 = vmax.f32 %v4156, %v4157
        %v4159 = vrot.slane %v4158, 1
        %v4160 = vmax.f32 %v4158, %v4159
        %v4161 = vsel %vm3705, %v3488, -inf
        %v4162 = vrot.slane %v4161, 4
        %v4163 = vmax.f32 %v4161, %v4162
        %v4164 = vrot.slane %v4163, 2
        %v4165 = vmax.f32 %v4163, %v4164
        %v4166 = vrot.slane %v4165, 1
        %v4167 = vmax.f32 %v4165, %v4166
        %v4168 = vsel %vm3705, %v3487, -inf
        %v4169 = vrot.slane %v4168, 4
        %v4170 = vmax.f32 %v4168, %v4169
        %v4171 = vrot.slane %v4170, 2
        %v4172 = vmax.f32 %v4170, %v4171
        %v4173 = vrot.slane %v4172, 1
        %v4174 = vmax.f32 %v4172, %v4173
        %v4175 = vsel %vm3705, %v3489, -inf
        %v4176 = vrot.slane %v4175, 4
        %v4177 = vmax.f32 %v4175, %v4176
        %v4178 = vrot.slane %v4177, 2
        %v4179 = vmax.f32 %v4177, %v4178
        %v4180 = vrot.slane %v4179, 1
        %v4181 = vmax.f32 %v4179, %v4180
        %v4182 = vsel %vm3705, %v3497, -inf
        %v4183 = vrot.slane %v4182, 4
        %v4184 = vmax.f32 %v4182, %v4183
        %v4185 = vrot.slane %v4184, 2
        %v4186 = vmax.f32 %v4184, %v4185
        %v4187 = vrot.slane %v4186, 1
        %v4188 = vmax.f32 %v4186, %v4187
        %v4189 = vsel %vm3705, %v3505, -inf
        %v4190 = vrot.slane %v4189, 4
        %v4191 = vmax.f32 %v4189, %v4190
        %v4192 = vrot.slane %v4191, 2
        %v4193 = vmax.f32 %v4191, %v4192
        %v4194 = vrot.slane %v4193, 1
        %v4195 = vmax.f32 %v4193, %v4194
        %v4196 = vsel %vm3705, %v3504, -inf
        %v4197 = vrot.slane %v4196, 4
        %v4198 = vmax.f32 %v4196, %v4197
        %v4199 = vrot.slane %v4198, 2
        %v4200 = vmax.f32 %v4198, %v4199
        %v4201 = vrot.slane %v4200, 1
        %v4202 = vmax.f32 %v4200, %v4201
        %v4203 = vsel %vm3705, %v3506, -inf
        %v4204 = vrot.slane %v4203, 4
        %v4205 = vmax.f32 %v4203, %v4204
        %v4206 = vrot.slane %v4205, 2
        %v4207 = vmax.f32 %v4205, %v4206
        %v4208 = vrot.slane %v4207, 1
        %v4209 = vmax.f32 %v4207, %v4208
        %v4210 = vsel %vm3705, %v3514, -inf
        %v4211 = vrot.slane %v4210, 4
        %v4212 = vmax.f32 %v4210, %v4211
        %v4213 = vrot.slane %v4212, 2
        %v4214 = vmax.f32 %v4212, %v4213
        %v4215 = vrot.slane %v4214, 1
        %v4216 = vmax.f32 %v4214, %v4215
        %v4217 = vsel %vm3705, %v3522, -inf
        %v4218 = vrot.slane %v4217, 4
        %v4219 = vmax.f32 %v4217, %v4218
        %v4220 = vrot.slane %v4219, 2
        %v4221 = vmax.f32 %v4219, %v4220
        %v4222 = vrot.slane %v4221, 1
        %v4223 = vmax.f32 %v4221, %v4222
        %v4224 = vsel %vm3705, %v3521, -inf
        %v4225 = vrot.slane %v4224, 4
        %v4226 = vmax.f32 %v4224, %v4225
        %v4227 = vrot.slane %v4226, 2
        %v4228 = vmax.f32 %v4226, %v4227
        %v4229 = vrot.slane %v4228, 1
        %v4230 = vmax.f32 %v4228, %v4229
        %v4231 = vsel %vm3705, %v3523, -inf
        %v4232 = vrot.slane %v4231, 4
        %v4233 = vmax.f32 %v4231, %v4232
        %v4234 = vrot.slane %v4233, 2
        %v4235 = vmax.f32 %v4233, %v4234
        %v4236 = vrot.slane %v4235, 1
        %v4237 = vmax.f32 %v4235, %v4236
        %v4238 = vsel %vm3705, %v3531, -inf
        %v4239 = vrot.slane %v4238, 4
        %v4240 = vmax.f32 %v4238, %v4239
        %v4241 = vrot.slane %v4240, 2
        %v4242 = vmax.f32 %v4240, %v4241
        %v4243 = vrot.slane %v4242, 1
        %v4244 = vmax.f32 %v4242, %v4243
        %v4245 = vsel %vm3705, %v3539, -inf
        %v4246 = vrot.slane %v4245, 4
        %v4247 = vmax.f32 %v4245, %v4246
        %v4248 = vrot.slane %v4247, 2
        %v4249 = vmax.f32 %v4247, %v4248
        %v4250 = vrot.slane %v4249, 1
        %v4251 = vmax.f32 %v4249, %v4250
        %v4252 = vsel %vm3705, %v3538, -inf
        %v4253 = vrot.slane %v4252, 4
        %v4254 = vmax.f32 %v4252, %v4253
        %v4255 = vrot.slane %v4254, 2
        %v4256 = vmax.f32 %v4254, %v4255
        %v4257 = vrot.slane %v4256, 1
        %v4258 = vmax.f32 %v4256, %v4257
        %v4259 = vsel %vm3705, %v3540, -inf
        %v4260 = vrot.slane %v4259, 4
        %v4261 = vmax.f32 %v4259, %v4260
        %v4262 = vrot.slane %v4261, 2
        %v4263 = vmax.f32 %v4261, %v4262
        %v4264 = vrot.slane %v4263, 1
        %v4265 = vmax.f32 %v4263, %v4264
        %v4266 = vsel %vm3705, %v3548, -inf
        %v4267 = vrot.slane %v4266, 4
        %v4268 = vmax.f32 %v4266, %v4267
        %v4269 = vrot.slane %v4268, 2
        %v4270 = vmax.f32 %v4268, %v4269
        %v4271 = vrot.slane %v4270, 1
        %v4272 = vmax.f32 %v4270, %v4271
        %v4273 = vsel %vm3705, %v3556, -inf
        %v4274 = vrot.slane %v4273, 4
        %v4275 = vmax.f32 %v4273, %v4274
        %v4276 = vrot.slane %v4275, 2
        %v4277 = vmax.f32 %v4275, %v4276
        %v4278 = vrot.slane %v4277, 1
        %v4279 = vmax.f32 %v4277, %v4278
        %v4280 = vsel %vm3705, %v3555, -inf
        %v4281 = vrot.slane %v4280, 4
        %v4282 = vmax.f32 %v4280, %v4281
        %v4283 = vrot.slane %v4282, 2
        %v4284 = vmax.f32 %v4282, %v4283
        %v4285 = vrot.slane %v4284, 1
        %v4286 = vmax.f32 %v4284, %v4285
        %v4287 = vsel %vm3705, %v3557, -inf
        %v4288 = vrot.slane %v4287, 4
        %v4289 = vmax.f32 %v4287, %v4288
        %v4290 = vrot.slane %v4289, 2
        %v4291 = vmax.f32 %v4289, %v4290
        %v4292 = vrot.slane %v4291, 1
        %v4293 = vmax.f32 %v4291, %v4292
        %v4294 = vsel %vm3705, %v3565, -inf
        %v4295 = vrot.slane %v4294, 4
        %v4296 = vmax.f32 %v4294, %v4295
        %v4297 = vrot.slane %v4296, 2
        %v4298 = vmax.f32 %v4296, %v4297
        %v4299 = vrot.slane %v4298, 1
        %v4300 = vmax.f32 %v4298, %v4299
        %v4301 = vsel %vm3705, %v3573, -inf
        %v4302 = vrot.slane %v4301, 4
        %v4303 = vmax.f32 %v4301, %v4302
        %v4304 = vrot.slane %v4303, 2
        %v4305 = vmax.f32 %v4303, %v4304
        %v4306 = vrot.slane %v4305, 1
        %v4307 = vmax.f32 %v4305, %v4306
        %v4308 = vsel %vm3705, %v3572, -inf
        %v4309 = vrot.slane %v4308, 4
        %v4310 = vmax.f32 %v4308, %v4309
        %v4311 = vrot.slane %v4310, 2
        %v4312 = vmax.f32 %v4310, %v4311
        %v4313 = vrot.slane %v4312, 1
        %v4314 = vmax.f32 %v4312, %v4313
        %v4315 = vsel %vm3705, %v3574, -inf
        %v4316 = vrot.slane %v4315, 4
        %v4317 = vmax.f32 %v4315, %v4316
        %v4318 = vrot.slane %v4317, 2
        %v4319 = vmax.f32 %v4317, %v4318
        %v4320 = vrot.slane %v4319, 1
        %v4321 = vmax.f32 %v4319, %v4320
        %v4322 = vsel %vm3705, %v3582, -inf
        %v4323 = vrot.slane %v4322, 4
        %v4324 = vmax.f32 %v4322, %v4323
        %v4325 = vrot.slane %v4324, 2
        %v4326 = vmax.f32 %v4324, %v4325
        %v4327 = vrot.slane %v4326, 1
        %v4328 = vmax.f32 %v4326, %v4327
        %v4329 = vsel %vm3705, %v3590, -inf
        %v4330 = vrot.slane %v4329, 4
        %v4331 = vmax.f32 %v4329, %v4330
        %v4332 = vrot.slane %v4331, 2
        %v4333 = vmax.f32 %v4331, %v4332
        %v4334 = vrot.slane %v4333, 1
        %v4335 = vmax.f32 %v4333, %v4334
        %v4336 = vsel %vm3705, %v3589, -inf
        %v4337 = vrot.slane %v4336, 4
        %v4338 = vmax.f32 %v4336, %v4337
        %v4339 = vrot.slane %v4338, 2
        %v4340 = vmax.f32 %v4338, %v4339
        %v4341 = vrot.slane %v4340, 1
        %v4342 = vmax.f32 %v4340, %v4341
        %v4343 = vsel %vm3705, %v3591, -inf
        %v4344 = vrot.slane %v4343, 4
        %v4345 = vmax.f32 %v4343, %v4344
        %v4346 = vrot.slane %v4345, 2
        %v4347 = vmax.f32 %v4345, %v4346
        %v4348 = vrot.slane %v4347, 1
        %v4349 = vmax.f32 %v4347, %v4348
        %v4350 = vsel %vm3705, %v3599, -inf
        %v4351 = vrot.slane %v4350, 4
        %v4352 = vmax.f32 %v4350, %v4351
        %v4353 = vrot.slane %v4352, 2
        %v4354 = vmax.f32 %v4352, %v4353
        %v4355 = vrot.slane %v4354, 1
        %v4356 = vmax.f32 %v4354, %v4355
        %v4357 = vsel %vm3705, %v3607, -inf
        %v4358 = vrot.slane %v4357, 4
        %v4359 = vmax.f32 %v4357, %v4358
        %v4360 = vrot.slane %v4359, 2
        %v4361 = vmax.f32 %v4359, %v4360
        %v4362 = vrot.slane %v4361, 1
        %v4363 = vmax.f32 %v4361, %v4362
        %v4364 = vsel %vm3705, %v3606, -inf
        %v4365 = vrot.slane %v4364, 4
        %v4366 = vmax.f32 %v4364, %v4365
        %v4367 = vrot.slane %v4366, 2
        %v4368 = vmax.f32 %v4366, %v4367
        %v4369 = vrot.slane %v4368, 1
        %v4370 = vmax.f32 %v4368, %v4369
        %v4371 = vsel %vm3705, %v3608, -inf
        %v4372 = vrot.slane %v4371, 4
        %v4373 = vmax.f32 %v4371, %v4372
        %v4374 = vrot.slane %v4373, 2
        %v4375 = vmax.f32 %v4373, %v4374
        %v4376 = vrot.slane %v4375, 1
        %v4377 = vmax.f32 %v4375, %v4376
        %v4378 = vpack.c.bf16 %v3712, %v3712
        %v4379 = vpack.c.bf16 %v3719, %v3719
        %v4380 = vpack.c.bf16 %v3726, %v3726
        %v4381 = vpack.c.bf16 %v3733, %v3733
        %v4382 = vpack.c.bf16 %v3740, %v3740
        %v4383 = vpack.c.bf16 %v3747, %v3747
        %v4384 = vpack.c.bf16 %v3754, %v3754
        %v4385 = vpack.c.bf16 %v3761, %v3761
        %v4386 = vpack.c.bf16 %v3768, %v3768
        %v4387 = vpack.c.bf16 %v3775, %v3775
        %v4388 = vpack.c.bf16 %v3782, %v3782
        %v4389 = vpack.c.bf16 %v3789, %v3789
        %v4390 = vpack.c.bf16 %v3796, %v3796
        %v4391 = vpack.c.bf16 %v3803, %v3803
        %v4392 = vpack.c.bf16 %v3810, %v3810
        %v4393 = vpack.c.bf16 %v3817, %v3817
        %v4394 = vpack.c.bf16 %v3824, %v3824
        %v4395 = vpack.c.bf16 %v3831, %v3831
        %v4396 = vpack.c.bf16 %v3838, %v3838
        %v4397 = vpack.c.bf16 %v3845, %v3845
        %v4398 = vpack.c.bf16 %v3852, %v3852
        %v4399 = vpack.c.bf16 %v3859, %v3859
        %v4400 = vpack.c.bf16 %v3866, %v3866
        %v4401 = vpack.c.bf16 %v3873, %v3873
        %v4402 = vpack.c.bf16 %v3880, %v3880
        %v4403 = vpack.c.bf16 %v3887, %v3887
        %v4404 = vpack.c.bf16 %v3894, %v3894
        %v4405 = vpack.c.bf16 %v3901, %v3901
        %v4406 = vpack.c.bf16 %v3908, %v3908
        %v4407 = vpack.c.bf16 %v3915, %v3915
        %v4408 = vpack.c.bf16 %v3922, %v3922
        %v4409 = vpack.c.bf16 %v3929, %v3929
        %v4410 = vpack.c.bf16 %v3936, %v3936
        %v4411 = vpack.c.bf16 %v3943, %v3943
        %v4412 = vpack.c.bf16 %v3950, %v3950
        %v4413 = vpack.c.bf16 %v3957, %v3957
        %v4414 = vpack.c.bf16 %v3964, %v3964
        %v4415 = vpack.c.bf16 %v3971, %v3971
        %v4416 = vpack.c.bf16 %v3978, %v3978
        %v4417 = vpack.c.bf16 %v3985, %v3985
        %v4418 = vpack.c.bf16 %v3992, %v3992
        %v4419 = vpack.c.bf16 %v3999, %v3999
        %v4420 = vpack.c.bf16 %v4006, %v4006
        %v4421 = vpack.c.bf16 %v4013, %v4013
        %v4422 = vpack.c.bf16 %v4020, %v4020
        %v4423 = vpack.c.bf16 %v4027, %v4027
        %v4424 = vpack.c.bf16 %v4034, %v4034
        %v4425 = vpack.c.bf16 %v4041, %v4041
        %v4426 = vpack.c.bf16 %v4048, %v4048
        %v4427 = vpack.c.bf16 %v4055, %v4055
        %v4428 = vpack.c.bf16 %v4062, %v4062
        %v4429 = vpack.c.bf16 %v4069, %v4069
        %v4430 = vpack.c.bf16 %v4076, %v4076
        %v4431 = vpack.c.bf16 %v4083, %v4083
        %v4432 = vpack.c.bf16 %v4090, %v4090
        %v4433 = vpack.c.bf16 %v4097, %v4097
        %v4434 = vpack.c.bf16 %v4104, %v4104
        %v4435 = vpack.c.bf16 %v4111, %v4111
        %v4436 = vpack.c.bf16 %v4118, %v4118
        %v4437 = vpack.c.bf16 %v4125, %v4125
        %v4438 = vpack.c.bf16 %v4132, %v4132
        %v4439 = vpack.c.bf16 %v4139, %v4139
        %v4440 = vpack.c.bf16 %v4146, %v4146
        %v4441 = vpack.c.bf16 %v4153, %v4153
        %v4442 = vpack.c.bf16 %v4160, %v4160
        %v4443 = vpack.c.bf16 %v4167, %v4167
        %v4444 = vpack.c.bf16 %v4174, %v4174
        %v4445 = vpack.c.bf16 %v4181, %v4181
        %v4446 = vpack.c.bf16 %v4188, %v4188
        %v4447 = vpack.c.bf16 %v4195, %v4195
        %v4448 = vpack.c.bf16 %v4202, %v4202
        %v4449 = vpack.c.bf16 %v4209, %v4209
        %v4450 = vpack.c.bf16 %v4216, %v4216
        %v4451 = vpack.c.bf16 %v4223, %v4223
        %v4452 = vpack.c.bf16 %v4230, %v4230
        %v4453 = vpack.c.bf16 %v4237, %v4237
        %v4454 = vpack.c.bf16 %v4244, %v4244
        %v4455 = vpack.c.bf16 %v4251, %v4251
        %v4456 = vpack.c.bf16 %v4258, %v4258
        %v4457 = vpack.c.bf16 %v4265, %v4265
        %v4458 = vpack.c.bf16 %v4272, %v4272
        %v4459 = vpack.c.bf16 %v4279, %v4279
        %v4460 = vpack.c.bf16 %v4286, %v4286
        %v4461 = vpack.c.bf16 %v4293, %v4293
        %v4462 = vpack.c.bf16 %v4300, %v4300
        %v4463 = vpack.c.bf16 %v4307, %v4307
        %v4464 = vpack.c.bf16 %v4314, %v4314
        %v4465 = vpack.c.bf16 %v4321, %v4321
        %v4466 = vpack.c.bf16 %v4328, %v4328
        %v4467 = vpack.c.bf16 %v4335, %v4335
        %v4468 = vpack.c.bf16 %v4342, %v4342
        %v4469 = vpack.c.bf16 %v4349, %v4349
        %v4470 = vpack.c.bf16 %v4356, %v4356
        %v4471 = vpack.c.bf16 %v4363, %v4363
        %v4472 = vpack.c.bf16 %v4370, %v4370
        %v4473 = vpack.c.bf16 %v4377, %v4377
        %v4474 = vld [vmem:[%s5] sm:$0xf]
        %v4475 = vld [vmem:[%s5 + $0x4] sm:$0xf]
        %v4476 = vld [vmem:[%s5 + $0x8] sm:$0xf]
        %v4477 = vld [vmem:[%s5 + $0xc] sm:$0xf]
        %v4478 = vld [vmem:[%s5 + $0x10] sm:$0xf]
        %v4479 = vld [vmem:[%s5 + $0x14] sm:$0xf]
        %v4480 = vld [vmem:[%s5 + $0x18] sm:$0xf]
        %v4481 = vld [vmem:[%s5 + $0x1c] sm:$0xf]
        %v4482 = vld [vmem:[%s5 + $0x20] sm:$0xf]
        %s4483 = scalar_lea.vmem %s5, 36
        %v4484 = vld [vmem:[%s4483] sm:$0xf]
        %v4485 = vld [vmem:[%s4483 + $0x4] sm:$0xf]
        %v4486 = vld [vmem:[%s4483 + $0x8] sm:$0xf]
        %v4487 = vld [vmem:[%s4483 + $0xc] sm:$0xf]
        %v4488 = vld [vmem:[%s4483 + $0x10] sm:$0xf]
        %v4489 = vld [vmem:[%s4483 + $0x14] sm:$0xf]
        %v4490 = vld [vmem:[%s4483 + $0x18] sm:$0xf]
        %v4491 = vld [vmem:[%s4483 + $0x1c] sm:$0xf]
        %v4492 = vld [vmem:[%s4483 + $0x20] sm:$0xf]
        %v4557 = vunpack.c.l.b16 %v4379
        %v4558 = vunpack.c.l.b16 %v4380
        %v4559 = vunpack.c.l.b16 %v4381
        %v4560 = vunpack.c.l.b16 %v4382
        %v4561 = vunpack.c.l.b16 %v4383
        %v4562 = vunpack.c.l.b16 %v4384
        %v4563 = vunpack.c.l.b16 %v4385
        %v4564 = vunpack.c.l.b16 %v4386
        %v4565 = vunpack.c.l.b16 %v4391
        %v4566 = vunpack.c.l.b16 %v4392
        %v4567 = vunpack.c.l.b16 %v4393
        %v4568 = vunpack.c.l.b16 %v4394
        %v4569 = vunpack.c.l.b16 %v4395
        %v4570 = vunpack.c.l.b16 %v4396
        %v4571 = vunpack.c.l.b16 %v4397
        %v4572 = vunpack.c.l.b16 %v4398
        %v4573 = vunpack.c.l.b16 %v4403
        %v4574 = vunpack.c.l.b16 %v4404
        %v4575 = vunpack.c.l.b16 %v4405
        %v4576 = vunpack.c.l.b16 %v4406
        %v4577 = vunpack.c.l.b16 %v4407
        %v4578 = vunpack.c.l.b16 %v4408
        %v4579 = vunpack.c.l.b16 %v4409
        %v4580 = vunpack.c.l.b16 %v4410
        %v4581 = vunpack.c.l.b16 %v4415
        %v4582 = vunpack.c.l.b16 %v4416
        %v4583 = vunpack.c.l.b16 %v4417
        %v4584 = vunpack.c.l.b16 %v4418
        %v4585 = vunpack.c.l.b16 %v4419
        %v4586 = vunpack.c.l.b16 %v4420
        %v4587 = vunpack.c.l.b16 %v4421
        %v4588 = vunpack.c.l.b16 %v4422
        %v4589 = vunpack.c.l.b16 %v4427
        %v4590 = vunpack.c.l.b16 %v4428
        %v4591 = vunpack.c.l.b16 %v4429
        %v4592 = vunpack.c.l.b16 %v4430
        %v4593 = vunpack.c.l.b16 %v4431
        %v4594 = vunpack.c.l.b16 %v4432
        %v4595 = vunpack.c.l.b16 %v4433
        %v4596 = vunpack.c.l.b16 %v4434
        %v4597 = vunpack.c.l.b16 %v4439
        %v4598 = vunpack.c.l.b16 %v4440
        %v4599 = vunpack.c.l.b16 %v4441
        %v4600 = vunpack.c.l.b16 %v4442
        %v4601 = vunpack.c.l.b16 %v4443
        %v4602 = vunpack.c.l.b16 %v4444
        %v4603 = vunpack.c.l.b16 %v4445
        %v4604 = vunpack.c.l.b16 %v4446
        %v4605 = vunpack.c.l.b16 %v4451
        %v4606 = vunpack.c.l.b16 %v4452
        %v4607 = vunpack.c.l.b16 %v4453
        %v4608 = vunpack.c.l.b16 %v4454
        %v4609 = vunpack.c.l.b16 %v4455
        %v4610 = vunpack.c.l.b16 %v4456
        %v4611 = vunpack.c.l.b16 %v4457
        %v4612 = vunpack.c.l.b16 %v4458
        %v4613 = vunpack.c.l.b16 %v4463
        %v4614 = vunpack.c.l.b16 %v4464
        %v4615 = vunpack.c.l.b16 %v4465
        %v4616 = vunpack.c.l.b16 %v4466
        %v4617 = vunpack.c.l.b16 %v4467
        %v4618 = vunpack.c.l.b16 %v4468
        %v4619 = vunpack.c.l.b16 %v4469
        %v4620 = vunpack.c.l.b16 %v4470
        %vm4621 = vcmask 1041409
        %v4622 = vsel %vm4621, %v4558, %v4557
        %vm4623 = vcmask 1042434
        %v4624 = vsel %vm4623, %v4559, %v4622
        %vm4625 = vcmask 1043459
        %v4626 = vsel %vm4625, %v4560, %v4624
        %vm4627 = vcmask 1044484
        %v4628 = vsel %vm4627, %v4561, %v4626
        %vm4629 = vcmask 1045509
        %v4630 = vsel %vm4629, %v4562, %v4628
        %vm4631 = vcmask 1046534
        %v4632 = vsel %vm4631, %v4563, %v4630
        %vm4633 = vcmask 1047559
        %v4634 = vsel %vm4633, %v4564, %v4632
        %v4635 = vsel %vm4621, %v4566, %v4565
        %v4636 = vsel %vm4623, %v4567, %v4635
        %v4637 = vsel %vm4625, %v4568, %v4636
        %v4638 = vsel %vm4627, %v4569, %v4637
        %v4639 = vsel %vm4629, %v4570, %v4638
        %v4640 = vsel %vm4631, %v4571, %v4639
        %v4641 = vsel %vm4633, %v4572, %v4640
        %v4642 = vsel %vm4621, %v4574, %v4573
        %v4643 = vsel %vm4623, %v4575, %v4642
        %v4644 = vsel %vm4625, %v4576, %v4643
        %v4645 = vsel %vm4627, %v4577, %v4644
        %v4646 = vsel %vm4629, %v4578, %v4645
        %v4647 = vsel %vm4631, %v4579, %v4646
        %v4648 = vsel %vm4633, %v4580, %v4647
        %v4649 = vsel %vm4621, %v4582, %v4581
        %v4650 = vsel %vm4623, %v4583, %v4649
        %v4651 = vsel %vm4625, %v4584, %v4650
        %v4652 = vsel %vm4627, %v4585, %v4651
        %v4653 = vsel %vm4629, %v4586, %v4652
        %v4654 = vsel %vm4631, %v4587, %v4653
        %v4655 = vsel %vm4633, %v4588, %v4654
        %v4656 = vsel %vm4621, %v4590, %v4589
        %v4657 = vsel %vm4623, %v4591, %v4656
        %v4658 = vsel %vm4625, %v4592, %v4657
        %v4659 = vsel %vm4627, %v4593, %v4658
        %v4660 = vsel %vm4629, %v4594, %v4659
        %v4661 = vsel %vm4631, %v4595, %v4660
        %v4662 = vsel %vm4633, %v4596, %v4661
        %v4663 = vsel %vm4621, %v4598, %v4597
        %v4664 = vsel %vm4623, %v4599, %v4663
        %v4665 = vsel %vm4625, %v4600, %v4664
        %v4666 = vsel %vm4627, %v4601, %v4665
        %v4667 = vsel %vm4629, %v4602, %v4666
        %v4668 = vsel %vm4631, %v4603, %v4667
        %v4669 = vsel %vm4633, %v4604, %v4668
        %v4670 = vsel %vm4621, %v4606, %v4605
        %v4671 = vsel %vm4623, %v4607, %v4670
        %v4672 = vsel %vm4625, %v4608, %v4671
        %v4673 = vsel %vm4627, %v4609, %v4672
        %v4674 = vsel %vm4629, %v4610, %v4673
        %v4675 = vsel %vm4631, %v4611, %v4674
        %v4676 = vsel %vm4633, %v4612, %v4675
        %v4677 = vsel %vm4621, %v4614, %v4613
        %v4678 = vsel %vm4623, %v4615, %v4677
        %v4679 = vsel %vm4625, %v4616, %v4678
        %v4680 = vsel %vm4627, %v4617, %v4679
        %v4681 = vsel %vm4629, %v4618, %v4680
        %v4682 = vsel %vm4631, %v4619, %v4681
        %v4683 = vsel %vm4633, %v4620, %v4682
        %v4684 = vpack.c.b16 %v4641, %v4634
        %v4685 = vpack.c.b16 %v4655, %v4648
        %v4686 = vpack.c.b16 %v4669, %v4662
        %v4687 = vpack.c.b16 %v4683, %v4676
        %v4697 = vunpack.c.l.b16 %v4484
        %v4698 = vunpack.c.l.b16 %v4485
        %v4699 = vunpack.c.l.b16 %v4486
        %v4700 = vunpack.c.l.b16 %v4487
        %v4701 = vunpack.c.l.b16 %v4488
        %v4702 = vunpack.c.l.b16 %v4489
        %v4703 = vunpack.c.l.b16 %v4490
        %v4704 = vunpack.c.l.b16 %v4491
        %v4705 = vunpack.c.l.b16 %v4492
        %v4706 = vpack.c.b16 %v4698, %v4697
        %v4707 = vpack.c.b16 %v4700, %v4699
        %v4708 = vpack.c.b16 %v4702, %v4701
        %v4709 = vpack.c.b16 %v4704, %v4703
        %v4710 = vpack.c.b16 %v4705, %v4705
        %vm4715 = vcmask 588800
        %v4717 = vsel %vm4715, %v4684, 0
        %v4720 = vsel %vm4715, %v4685, 0
        %v4723 = vsel %vm4715, %v4686, 0
        %v4726 = vsel %vm4715, %v4687, 0
        %vm4728 = vcmask 1043456
        %v4730 = vsel %vm4728, %v4710, 0
        %4732 = vmatprep.subr.bf16.mxu0 0
        %4733 = vmatpush1.bf16.msra.mxu0 %v4706
        %4734 = vmatprep.subr.bf16.mxu0 0
        %4735 = vmatpush1.bf16.msra.mxu0 %v4707
        %4736 = vmatprep.subr.bf16.mxu0 0
        %4737 = vmatpush1.bf16.msra.mxu0 %v4708
        %4738 = vmatprep.subr.bf16.mxu0 0
        %4739 = vmatpush1.bf16.msra.mxu0 %v4709
        %4740 = vmatprep.subr.bf16.mxu0 0
        %4741 = vmatpush1.bf16.msra.mxu0 %v4730
        %4742 = vmatprep.subr.bf16.mxu0 0
        %4743 = vmatpush1.bf16.msra.mxu0 0
        %4744 = vmatprep.subr.bf16.mxu0 0
        %4745 = vmatpush1.bf16.msra.mxu0 0
        %4746 = vmatprep.subr.bf16.mxu0 0
        %4747 = vmatpush1.bf16.msra.mxu0 0
        %4748 = vmatprep.subr.bf16.mxu0 0
        %4749 = vmatpush1.bf16.msra.mxu0 0
        %4750 = vmatprep.subr.bf16.mxu0 0
        %4751 = vmatpush1.bf16.msra.mxu0 0
        %4752 = vmatprep.subr.bf16.mxu0 0
        %4753 = vmatpush1.bf16.msra.mxu0 0
        %4754 = vmatprep.subr.bf16.mxu0 0
        %4755 = vmatpush1.bf16.msra.mxu0 0
        %4756 = vmatprep.subr.bf16.mxu0 0
        %4757 = vmatpush1.bf16.msra.mxu0 0
        %4758 = vmatprep.subr.bf16.mxu0 0
        %4759 = vmatpush1.bf16.msra.mxu0 0
        %4760 = vmatprep.subr.bf16.mxu0 0
        %4761 = vmatpush1.bf16.msra.mxu0 0
        %4762 = vmatprep.subr.bf16.mxu0 0
        %4763 = vmatpush1.bf16.msra.mxu0 0
        %4764 = vmatprep.mubr.bf16.mxu0 0
        %4765 = vmatmul.mubr.bf16.gmra.mrb[0].mxu0 %v4717
        %v4766 = vpop.f32.mrb[0].mxu0
        %v4767 = vadd.f32 0.0, %v4766
        %v4768 = vpop.f32.mrb[0].mxu0
        %v4769 = vpop.f32.mrb[0].mxu0
        %v4770 = vadd.f32 0.0, %v4769
        %v4771 = vpop.f32.mrb[0].mxu0
        %4772 = vmatprep.mubr.bf16.mxu0 0
        %4773 = vmatmul.mubr.bf16.gmra.mrb[0].mxu0 %v4720
        %v4774 = vpop.f32.mrb[0].mxu0
        %v4775 = vadd.f32 0.0, %v4774
        %v4776 = vpop.f32.mrb[0].mxu0
        %v4777 = vpop.f32.mrb[0].mxu0
        %v4778 = vadd.f32 0.0, %v4777
        %v4779 = vpop.f32.mrb[0].mxu0
        %4780 = vmatprep.mubr.bf16.mxu0 0
        %4781 = vmatmul.mubr.bf16.gmra.mrb[0].mxu0 %v4723
        %v4782 = vpop.f32.mrb[0].mxu0
        %v4783 = vadd.f32 0.0, %v4782
        %v4784 = vpop.f32.mrb[0].mxu0
        %v4785 = vpop.f32.mrb[0].mxu0
        %v4786 = vadd.f32 0.0, %v4785
        %v4787 = vpop.f32.mrb[0].mxu0
        %4788 = vmatprep.mubr.bf16.mxu0 0
        %4789 = vmatmul.mubr.bf16.gmra.mrb[0].mxu0 %v4726
        %v4790 = vpop.f32.mrb[0].mxu0
        %v4791 = vadd.f32 0.0, %v4790
        %v4792 = vpop.f32.mrb[0].mxu0
        %v4793 = vpop.f32.mrb[0].mxu0
        %v4794 = vadd.f32 0.0, %v4793
        %v4795 = vpop.f32.mrb[0].mxu0
        %4796 = vdwg.mxu0
        %v4805 = vunpack.c.l.b16 %v4378
        %v4806 = vunpack.c.l.b16 %v4390
        %v4807 = vunpack.c.l.b16 %v4402
        %v4808 = vunpack.c.l.b16 %v4414
        %v4809 = vunpack.c.l.b16 %v4426
        %v4810 = vunpack.c.l.b16 %v4438
        %v4811 = vunpack.c.l.b16 %v4450
        %v4812 = vunpack.c.l.b16 %v4462
        %v4813 = vsel %vm4621, %v4557, %v4805
        %v4814 = vsel %vm4623, %v4558, %v4813
        %v4815 = vsel %vm4625, %v4559, %v4814
        %v4816 = vsel %vm4627, %v4560, %v4815
        %v4817 = vsel %vm4629, %v4561, %v4816
        %v4818 = vsel %vm4631, %v4562, %v4817
        %v4819 = vsel %vm4633, %v4563, %v4818
        %v4820 = vsel %vm4621, %v4565, %v4806
        %v4821 = vsel %vm4623, %v4566, %v4820
        %v4822 = vsel %vm4625, %v4567, %v4821
        %v4823 = vsel %vm4627, %v4568, %v4822
        %v4824 = vsel %vm4629, %v4569, %v4823
        %v4825 = vsel %vm4631, %v4570, %v4824
        %v4826 = vsel %vm4633, %v4571, %v4825
        %v4827 = vsel %vm4621, %v4573, %v4807
        %v4828 = vsel %vm4623, %v4574, %v4827
        %v4829 = vsel %vm4625, %v4575, %v4828
        %v4830 = vsel %vm4627, %v4576, %v4829
        %v4831 = vsel %vm4629, %v4577, %v4830
        %v4832 = vsel %vm4631, %v4578, %v4831
        %v4833 = vsel %vm4633, %v4579, %v4832
        %v4834 = vsel %vm4621, %v4581, %v4808
        %v4835 = vsel %vm4623, %v4582, %v4834
        %v4836 = vsel %vm4625, %v4583, %v4835
        %v4837 = vsel %vm4627, %v4584, %v4836
        %v4838 = vsel %vm4629, %v4585, %v4837
        %v4839 = vsel %vm4631, %v4586, %v4838
        %v4840 = vsel %vm4633, %v4587, %v4839
        %v4841 = vsel %vm4621, %v4589, %v4809
        %v4842 = vsel %vm4623, %v4590, %v4841
        %v4843 = vsel %vm4625, %v4591, %v4842
        %v4844 = vsel %vm4627, %v4592, %v4843
        %v4845 = vsel %vm4629, %v4593, %v4844
        %v4846 = vsel %vm4631, %v4594, %v4845
        %v4847 = vsel %vm4633, %v4595, %v4846
        %v4848 = vsel %vm4621, %v4597, %v4810
        %v4849 = vsel %vm4623, %v4598, %v4848
        %v4850 = vsel %vm4625, %v4599, %v4849
        %v4851 = vsel %vm4627, %v4600, %v4850
        %v4852 = vsel %vm4629, %v4601, %v4851
        %v4853 = vsel %vm4631, %v4602, %v4852
        %v4854 = vsel %vm4633, %v4603, %v4853
        %v4855 = vsel %vm4621, %v4605, %v4811
        %v4856 = vsel %vm4623, %v4606, %v4855
        %v4857 = vsel %vm4625, %v4607, %v4856
        %v4858 = vsel %vm4627, %v4608, %v4857
        %v4859 = vsel %vm4629, %v4609, %v4858
        %v4860 = vsel %vm4631, %v4610, %v4859
        %v4861 = vsel %vm4633, %v4611, %v4860
        %v4862 = vsel %vm4621, %v4613, %v4812
        %v4863 = vsel %vm4623, %v4614, %v4862
        %v4864 = vsel %vm4625, %v4615, %v4863
        %v4865 = vsel %vm4627, %v4616, %v4864
        %v4866 = vsel %vm4629, %v4617, %v4865
        %v4867 = vsel %vm4631, %v4618, %v4866
        %v4868 = vsel %vm4633, %v4619, %v4867
        %v4869 = vpack.c.b16 %v4826, %v4819
        %v4870 = vpack.c.b16 %v4840, %v4833
        %v4871 = vpack.c.b16 %v4854, %v4847
        %v4872 = vpack.c.b16 %v4868, %v4861
        %v4882 = vunpack.c.l.b16 %v4474
        %v4883 = vunpack.c.l.b16 %v4475
        %v4884 = vunpack.c.l.b16 %v4476
        %v4885 = vunpack.c.l.b16 %v4477
        %v4886 = vunpack.c.l.b16 %v4478
        %v4887 = vunpack.c.l.b16 %v4479
        %v4888 = vunpack.c.l.b16 %v4480
        %v4889 = vunpack.c.l.b16 %v4481
        %v4890 = vunpack.c.l.b16 %v4482
        %v4891 = vpack.c.b16 %v4883, %v4882
        %v4892 = vpack.c.b16 %v4885, %v4884
        %v4893 = vpack.c.b16 %v4887, %v4886
        %v4894 = vpack.c.b16 %v4889, %v4888
        %v4895 = vpack.c.b16 %v4890, %v4890
        %v4901 = vsel %vm4715, %v4869, 0
        %v4904 = vsel %vm4715, %v4870, 0
        %v4907 = vsel %vm4715, %v4871, 0
        %v4910 = vsel %vm4715, %v4872, 0
        %v4913 = vsel %vm4728, %v4895, 0
        %4915 = vmatprep.subr.bf16.mxu0 0
        %4916 = vmatpush1.bf16.msra.mxu0 %v4891
        %4917 = vmatprep.subr.bf16.mxu0 0
        %4918 = vmatpush1.bf16.msra.mxu0 %v4892
        %4919 = vmatprep.subr.bf16.mxu0 0
        %4920 = vmatpush1.bf16.msra.mxu0 %v4893
        %4921 = vmatprep.subr.bf16.mxu0 0
        %4922 = vmatpush1.bf16.msra.mxu0 %v4894
        %4923 = vmatprep.subr.bf16.mxu0 0
        %4924 = vmatpush1.bf16.msra.mxu0 %v4913
        %4925 = vmatprep.subr.bf16.mxu0 0
        %4926 = vmatpush1.bf16.msra.mxu0 0
        %4927 = vmatprep.subr.bf16.mxu0 0
        %4928 = vmatpush1.bf16.msra.mxu0 0
        %4929 = vmatprep.subr.bf16.mxu0 0
        %4930 = vmatpush1.bf16.msra.mxu0 0
        %4931 = vmatprep.subr.bf16.mxu0 0
        %4932 = vmatpush1.bf16.msra.mxu0 0
        %4933 = vmatprep.subr.bf16.mxu0 0
        %4934 = vmatpush1.bf16.msra.mxu0 0
        %4935 = vmatprep.subr.bf16.mxu0 0
        %4936 = vmatpush1.bf16.msra.mxu0 0
        %4937 = vmatprep.subr.bf16.mxu0 0
        %4938 = vmatpush1.bf16.msra.mxu0 0
        %4939 = vmatprep.subr.bf16.mxu0 0
        %4940 = vmatpush1.bf16.msra.mxu0 0
        %4941 = vmatprep.subr.bf16.mxu0 0
        %4942 = vmatpush1.bf16.msra.mxu0 0
        %4943 = vmatprep.subr.bf16.mxu0 0
        %4944 = vmatpush1.bf16.msra.mxu0 0
        %4945 = vmatprep.subr.bf16.mxu0 0
        %4946 = vmatpush1.bf16.msra.mxu0 0
        %4947 = vmatprep.mubr.bf16.mxu0 0
        %4948 = vmatmul.mubr.bf16.gmra.mrb[0].mxu0 %v4901
        %v4949 = vpop.f32.mrb[0].mxu0
        %v4950 = vadd.f32 %v4767, %v4949
        %v4951 = vpop.f32.mrb[0].mxu0
        %v4952 = vpop.f32.mrb[0].mxu0
        %v4953 = vadd.f32 %v4770, %v4952
        %v4954 = vpop.f32.mrb[0].mxu0
        %4955 = vmatprep.mubr.bf16.mxu0 0
        %4956 = vmatmul.mubr.bf16.gmra.mrb[0].mxu0 %v4904
        %v4957 = vpop.f32.mrb[0].mxu0
        %v4958 = vadd.f32 %v4775, %v4957
        %v4959 = vpop.f32.mrb[0].mxu0
        %v4960 = vpop.f32.mrb[0].mxu0
        %v4961 = vadd.f32 %v4778, %v4960
        %v4962 = vpop.f32.mrb[0].mxu0
        %4963 = vmatprep.mubr.bf16.mxu0 0
        %4964 = vmatmul.mubr.bf16.gmra.mrb[0].mxu0 %v4907
        %v4965 = vpop.f32.mrb[0].mxu0
        %v4966 = vadd.f32 %v4783, %v4965
        %v4967 = vpop.f32.mrb[0].mxu0
        %v4968 = vpop.f32.mrb[0].mxu0
        %v4969 = vadd.f32 %v4786, %v4968
        %v4970 = vpop.f32.mrb[0].mxu0
        %4971 = vmatprep.mubr.bf16.mxu0 0
        %4972 = vmatmul.mubr.bf16.gmra.mrb[0].mxu0 %v4910
        %v4973 = vpop.f32.mrb[0].mxu0
        %v4974 = vadd.f32 %v4791, %v4973
        %v4975 = vpop.f32.mrb[0].mxu0
        %v4976 = vpop.f32.mrb[0].mxu0
        %v4977 = vadd.f32 %v4794, %v4976
        %v4978 = vpop.f32.mrb[0].mxu0
        %4979 = vdwg.mxu0
        %s4980 = scalar_lea.vmem %s5, 72
        %v4981 = vld [vmem:[%s4980] sm:$0xf]
        %v4982 = vld [vmem:[%s4980 + $0x4] sm:$0xf]
        %v4983 = vld [vmem:[%s4980 + $0x8] sm:$0xf]
        %v4984 = vld [vmem:[%s4980 + $0xc] sm:$0xf]
        %v4985 = vld [vmem:[%s4980 + $0x10] sm:$0xf]
        %v4986 = vld [vmem:[%s4980 + $0x14] sm:$0xf]
        %v4987 = vld [vmem:[%s4980 + $0x18] sm:$0xf]
        %v4988 = vld [vmem:[%s4980 + $0x1c] sm:$0xf]
        %v4989 = vld [vmem:[%s4980 + $0x20] sm:$0xf]
        %v4998 = vunpack.c.l.b16 %v4387
        %v4999 = vunpack.c.l.b16 %v4399
        %v5000 = vunpack.c.l.b16 %v4411
        %v5001 = vunpack.c.l.b16 %v4423
        %v5002 = vunpack.c.l.b16 %v4435
        %v5003 = vunpack.c.l.b16 %v4447
        %v5004 = vunpack.c.l.b16 %v4459
        %v5005 = vunpack.c.l.b16 %v4471
        %v5006 = vsel %vm4621, %v4559, %v4558
        %v5007 = vsel %vm4623, %v4560, %v5006
        %v5008 = vsel %vm4625, %v4561, %v5007
        %v5009 = vsel %vm4627, %v4562, %v5008
        %v5010 = vsel %vm4629, %v4563, %v5009
        %v5011 = vsel %vm4631, %v4564, %v5010
        %v5012 = vsel %vm4633, %v4998, %v5011
        %v5013 = vsel %vm4621, %v4567, %v4566
        %v5014 = vsel %vm4623, %v4568, %v5013
        %v5015 = vsel %vm4625, %v4569, %v5014
        %v5016 = vsel %vm4627, %v4570, %v5015
        %v5017 = vsel %vm4629, %v4571, %v5016
        %v5018 = vsel %vm4631, %v4572, %v5017
        %v5019 = vsel %vm4633, %v4999, %v5018
        %v5020 = vsel %vm4621, %v4575, %v4574
        %v5021 = vsel %vm4623, %v4576, %v5020
        %v5022 = vsel %vm4625, %v4577, %v5021
        %v5023 = vsel %vm4627, %v4578, %v5022
        %v5024 = vsel %vm4629, %v4579, %v5023
        %v5025 = vsel %vm4631, %v4580, %v5024
        %v5026 = vsel %vm4633, %v5000, %v5025
        %v5027 = vsel %vm4621, %v4583, %v4582
        %v5028 = vsel %vm4623, %v4584, %v5027
        %v5029 = vsel %vm4625, %v4585, %v5028
        %v5030 = vsel %vm4627, %v4586, %v5029
        %v5031 = vsel %vm4629, %v4587, %v5030
        %v5032 = vsel %vm4631, %v4588, %v5031
        %v5033 = vsel %vm4633, %v5001, %v5032
        %v5034 = vsel %vm4621, %v4591, %v4590
        %v5035 = vsel %vm4623, %v4592, %v5034
        %v5036 = vsel %vm4625, %v4593, %v5035
        %v5037 = vsel %vm4627, %v4594, %v5036
        %v5038 = vsel %vm4629, %v4595, %v5037
        %v5039 = vsel %vm4631, %v4596, %v5038
        %v5040 = vsel %vm4633, %v5002, %v5039
        %v5041 = vsel %vm4621, %v4599, %v4598
        %v5042 = vsel %vm4623, %v4600, %v5041
        %v5043 = vsel %vm4625, %v4601, %v5042
        %v5044 = vsel %vm4627, %v4602, %v5043
        %v5045 = vsel %vm4629, %v4603, %v5044
        %v5046 = vsel %vm4631, %v4604, %v5045
        %v5047 = vsel %vm4633, %v5003, %v5046
        %v5048 = vsel %vm4621, %v4607, %v4606
        %v5049 = vsel %vm4623, %v4608, %v5048
        %v5050 = vsel %vm4625, %v4609, %v5049
        %v5051 = vsel %vm4627, %v4610, %v5050
        %v5052 = vsel %vm4629, %v4611, %v5051
        %v5053 = vsel %vm4631, %v4612, %v5052
        %v5054 = vsel %vm4633, %v5004, %v5053
        %v5055 = vsel %vm4621, %v4615, %v4614
        %v5056 = vsel %vm4623, %v4616, %v5055
        %v5057 = vsel %vm4625, %v4617, %v5056
        %v5058 = vsel %vm4627, %v4618, %v5057
        %v5059 = vsel %vm4629, %v4619, %v5058
        %v5060 = vsel %vm4631, %v4620, %v5059
        %v5061 = vsel %vm4633, %v5005, %v5060
        %v5062 = vpack.c.b16 %v5019, %v5012
        %v5063 = vpack.c.b16 %v5033, %v5026
        %v5064 = vpack.c.b16 %v5047, %v5040
        %v5065 = vpack.c.b16 %v5061, %v5054
        %v5075 = vunpack.c.l.b16 %v4981
        %v5076 = vunpack.c.l.b16 %v4982
        %v5077 = vunpack.c.l.b16 %v4983
        %v5078 = vunpack.c.l.b16 %v4984
        %v5079 = vunpack.c.l.b16 %v4985
        %v5080 = vunpack.c.l.b16 %v4986
        %v5081 = vunpack.c.l.b16 %v4987
        %v5082 = vunpack.c.l.b16 %v4988
        %v5083 = vunpack.c.l.b16 %v4989
        %v5084 = vpack.c.b16 %v5076, %v5075
        %v5085 = vpack.c.b16 %v5078, %v5077
        %v5086 = vpack.c.b16 %v5080, %v5079
        %v5087 = vpack.c.b16 %v5082, %v5081
        %v5088 = vpack.c.b16 %v5083, %v5083
        %v5094 = vsel %vm4715, %v5062, 0
        %v5097 = vsel %vm4715, %v5063, 0
        %v5100 = vsel %vm4715, %v5064, 0
        %v5103 = vsel %vm4715, %v5065, 0
        %v5106 = vsel %vm4728, %v5088, 0
        %5108 = vmatprep.subr.bf16.mxu0 0
        %5109 = vmatpush1.bf16.msra.mxu0 %v5084
        %5110 = vmatprep.subr.bf16.mxu0 0
        %5111 = vmatpush1.bf16.msra.mxu0 %v5085
        %5112 = vmatprep.subr.bf16.mxu0 0
        %5113 = vmatpush1.bf16.msra.mxu0 %v5086
        %5114 = vmatprep.subr.bf16.mxu0 0
        %5115 = vmatpush1.bf16.msra.mxu0 %v5087
        %5116 = vmatprep.subr.bf16.mxu0 0
        %5117 = vmatpush1.bf16.msra.mxu0 %v5106
        %5118 = vmatprep.subr.bf16.mxu0 0
        %5119 = vmatpush1.bf16.msra.mxu0 0
        %5120 = vmatprep.subr.bf16.mxu0 0
        %5121 = vmatpush1.bf16.msra.mxu0 0
        %5122 = vmatprep.subr.bf16.mxu0 0
        %5123 = vmatpush1.bf16.msra.mxu0 0
        %5124 = vmatprep.subr.bf16.mxu0 0
        %5125 = vmatpush1.bf16.msra.mxu0 0
        %5126 = vmatprep.subr.bf16.mxu0 0
        %5127 = vmatpush1.bf16.msra.mxu0 0
        %5128 = vmatprep.subr.bf16.mxu0 0
        %5129 = vmatpush1.bf16.msra.mxu0 0
        %5130 = vmatprep.subr.bf16.mxu0 0
        %5131 = vmatpush1.bf16.msra.mxu0 0
        %5132 = vmatprep.subr.bf16.mxu0 0
        %5133 = vmatpush1.bf16.msra.mxu0 0
        %5134 = vmatprep.subr.bf16.mxu0 0
        %5135 = vmatpush1.bf16.msra.mxu0 0
        %5136 = vmatprep.subr.bf16.mxu0 0
        %5137 = vmatpush1.bf16.msra.mxu0 0
        %5138 = vmatprep.subr.bf16.mxu0 0
        %5139 = vmatpush1.bf16.msra.mxu0 0
        %5140 = vmatprep.mubr.bf16.mxu0 0
        %5141 = vmatmul.mubr.bf16.gmra.mrb[0].mxu0 %v5094
        %v5142 = vpop.f32.mrb[0].mxu0
        %v5143 = vadd.f32 0.0, %v5142
        %v5144 = vpop.f32.mrb[0].mxu0
        %v5145 = vpop.f32.mrb[0].mxu0
        %v5146 = vadd.f32 0.0, %v5145
        %v5147 = vpop.f32.mrb[0].mxu0
        %5148 = vmatprep.mubr.bf16.mxu0 0
        %5149 = vmatmul.mubr.bf16.gmra.mrb[0].mxu0 %v5097
        %v5150 = vpop.f32.mrb[0].mxu0
        %v5151 = vadd.f32 0.0, %v5150
        %v5152 = vpop.f32.mrb[0].mxu0
        %v5153 = vpop.f32.mrb[0].mxu0
        %v5154 = vadd.f32 0.0, %v5153
        %v5155 = vpop.f32.mrb[0].mxu0
        %5156 = vmatprep.mubr.bf16.mxu0 0
        %5157 = vmatmul.mubr.bf16.gmra.mrb[0].mxu0 %v5100
        %v5158 = vpop.f32.mrb[0].mxu0
        %v5159 = vadd.f32 0.0, %v5158
        %v5160 = vpop.f32.mrb[0].mxu0
        %v5161 = vpop.f32.mrb[0].mxu0
        %v5162 = vadd.f32 0.0, %v5161
        %v5163 = vpop.f32.mrb[0].mxu0
        %5164 = vmatprep.mubr.bf16.mxu0 0
        %5165 = vmatmul.mubr.bf16.gmra.mrb[0].mxu0 %v5103
        %v5166 = vpop.f32.mrb[0].mxu0
        %v5167 = vadd.f32 0.0, %v5166
        %v5168 = vpop.f32.mrb[0].mxu0
        %v5169 = vpop.f32.mrb[0].mxu0
        %v5170 = vadd.f32 0.0, %v5169
        %v5171 = vpop.f32.mrb[0].mxu0
        %5172 = vdwg.mxu0
        %v5173 = vadd.f32 %v4950, %v5143
        %v5174 = vadd.f32 %v4953, %v5146
        %v5175 = vadd.f32 %v4958, %v5151
        %v5176 = vadd.f32 %v4961, %v5154
        %v5177 = vadd.f32 %v4966, %v5159
        %v5178 = vadd.f32 %v4969, %v5162
        %v5179 = vadd.f32 %v4974, %v5167
        %v5180 = vadd.f32 %v4977, %v5170
        %s5181 = scalar_lea.vmem %s5, 108
        %v5182 = vld [vmem:[%s5181] sm:$0xf]
        %v5183 = vld [vmem:[%s5181 + $0x4] sm:$0xf]
        %v5184 = vld [vmem:[%s5181 + $0x8] sm:$0xf]
        %v5185 = vld [vmem:[%s5181 + $0xc] sm:$0xf]
        %v5186 = vld [vmem:[%s5181 + $0x10] sm:$0xf]
        %v5187 = vld [vmem:[%s5181 + $0x14] sm:$0xf]
        %v5188 = vld [vmem:[%s5181 + $0x18] sm:$0xf]
        %v5189 = vld [vmem:[%s5181 + $0x1c] sm:$0xf]
        %v5190 = vld [vmem:[%s5181 + $0x20] sm:$0xf]
        %v5199 = vunpack.c.l.b16 %v4388
        %v5200 = vunpack.c.l.b16 %v4400
        %v5201 = vunpack.c.l.b16 %v4412
        %v5202 = vunpack.c.l.b16 %v4424
        %v5203 = vunpack.c.l.b16 %v4436
        %v5204 = vunpack.c.l.b16 %v4448
        %v5205 = vunpack.c.l.b16 %v4460
        %v5206 = vunpack.c.l.b16 %v4472
        %v5207 = vsel %vm4621, %v4560, %v4559
        %v5208 = vsel %vm4623, %v4561, %v5207
        %v5209 = vsel %vm4625, %v4562, %v5208
        %v5210 = vsel %vm4627, %v4563, %v5209
        %v5211 = vsel %vm4629, %v4564, %v5210
        %v5212 = vsel %vm4631, %v4998, %v5211
        %v5213 = vsel %vm4633, %v5199, %v5212
        %v5214 = vsel %vm4621, %v4568, %v4567
        %v5215 = vsel %vm4623, %v4569, %v5214
        %v5216 = vsel %vm4625, %v4570, %v5215
        %v5217 = vsel %vm4627, %v4571, %v5216
        %v5218 = vsel %vm4629, %v4572, %v5217
        %v5219 = vsel %vm4631, %v4999, %v5218
        %v5220 = vsel %vm4633, %v5200, %v5219
        %v5221 = vsel %vm4621, %v4576, %v4575
        %v5222 = vsel %vm4623, %v4577, %v5221
        %v5223 = vsel %vm4625, %v4578, %v5222
        %v5224 = vsel %vm4627, %v4579, %v5223
        %v5225 = vsel %vm4629, %v4580, %v5224
        %v5226 = vsel %vm4631, %v5000, %v5225
        %v5227 = vsel %vm4633, %v5201, %v5226
        %v5228 = vsel %vm4621, %v4584, %v4583
        %v5229 = vsel %vm4623, %v4585, %v5228
        %v5230 = vsel %vm4625, %v4586, %v5229
        %v5231 = vsel %vm4627, %v4587, %v5230
        %v5232 = vsel %vm4629, %v4588, %v5231
        %v5233 = vsel %vm4631, %v5001, %v5232
        %v5234 = vsel %vm4633, %v5202, %v5233
        %v5235 = vsel %vm4621, %v4592, %v4591
        %v5236 = vsel %vm4623, %v4593, %v5235
        %v5237 = vsel %vm4625, %v4594, %v5236
        %v5238 = vsel %vm4627, %v4595, %v5237
        %v5239 = vsel %vm4629, %v4596, %v5238
        %v5240 = vsel %vm4631, %v5002, %v5239
        %v5241 = vsel %vm4633, %v5203, %v5240
        %v5242 = vsel %vm4621, %v4600, %v4599
        %v5243 = vsel %vm4623, %v4601, %v5242
        %v5244 = vsel %vm4625, %v4602, %v5243
        %v5245 = vsel %vm4627, %v4603, %v5244
        %v5246 = vsel %vm4629, %v4604, %v5245
        %v5247 = vsel %vm4631, %v5003, %v5246
        %v5248 = vsel %vm4633, %v5204, %v5247
        %v5249 = vsel %vm4621, %v4608, %v4607
        %v5250 = vsel %vm4623, %v4609, %v5249
        %v5251 = vsel %vm4625, %v4610, %v5250
        %v5252 = vsel %vm4627, %v4611, %v5251
        %v5253 = vsel %vm4629, %v4612, %v5252
        %v5254 = vsel %vm4631, %v5004, %v5253
        %v5255 = vsel %vm4633, %v5205, %v5254
        %v5256 = vsel %vm4621, %v4616, %v4615
        %v5257 = vsel %vm4623, %v4617, %v5256
        %v5258 = vsel %vm4625, %v4618, %v5257
        %v5259 = vsel %vm4627, %v4619, %v5258
        %v5260 = vsel %vm4629, %v4620, %v5259
        %v5261 = vsel %vm4631, %v5005, %v5260
        %v5262 = vsel %vm4633, %v5206, %v5261
        %v5263 = vpack.c.b16 %v5220, %v5213
        %v5264 = vpack.c.b16 %v5234, %v5227
        %v5265 = vpack.c.b16 %v5248, %v5241
        %v5266 = vpack.c.b16 %v5262, %v5255
        %v5276 = vunpack.c.l.b16 %v5182
        %v5277 = vunpack.c.l.b16 %v5183
        %v5278 = vunpack.c.l.b16 %v5184
        %v5279 = vunpack.c.l.b16 %v5185
        %v5280 = vunpack.c.l.b16 %v5186
        %v5281 = vunpack.c.l.b16 %v5187
        %v5282 = vunpack.c.l.b16 %v5188
        %v5283 = vunpack.c.l.b16 %v5189
        %v5284 = vunpack.c.l.b16 %v5190
        %v5285 = vpack.c.b16 %v5277, %v5276
        %v5286 = vpack.c.b16 %v5279, %v5278
        %v5287 = vpack.c.b16 %v5281, %v5280
        %v5288 = vpack.c.b16 %v5283, %v5282
        %v5289 = vpack.c.b16 %v5284, %v5284
        %v5295 = vsel %vm4715, %v5263, 0
        %v5298 = vsel %vm4715, %v5264, 0
        %v5301 = vsel %vm4715, %v5265, 0
        %v5304 = vsel %vm4715, %v5266, 0
        %v5307 = vsel %vm4728, %v5289, 0
        %5309 = vmatprep.subr.bf16.mxu0 0
        %5310 = vmatpush1.bf16.msra.mxu0 %v5285
        %5311 = vmatprep.subr.bf16.mxu0 0
        %5312 = vmatpush1.bf16.msra.mxu0 %v5286
        %5313 = vmatprep.subr.bf16.mxu0 0
        %5314 = vmatpush1.bf16.msra.mxu0 %v5287
        %5315 = vmatprep.subr.bf16.mxu0 0
        %5316 = vmatpush1.bf16.msra.mxu0 %v5288
        %5317 = vmatprep.subr.bf16.mxu0 0
        %5318 = vmatpush1.bf16.msra.mxu0 %v5307
        %5319 = vmatprep.subr.bf16.mxu0 0
        %5320 = vmatpush1.bf16.msra.mxu0 0
        %5321 = vmatprep.subr.bf16.mxu0 0
        %5322 = vmatpush1.bf16.msra.mxu0 0
        %5323 = vmatprep.subr.bf16.mxu0 0
        %5324 = vmatpush1.bf16.msra.mxu0 0
        %5325 = vmatprep.subr.bf16.mxu0 0
        %5326 = vmatpush1.bf16.msra.mxu0 0
        %5327 = vmatprep.subr.bf16.mxu0 0
        %5328 = vmatpush1.bf16.msra.mxu0 0
        %5329 = vmatprep.subr.bf16.mxu0 0
        %5330 = vmatpush1.bf16.msra.mxu0 0
        %5331 = vmatprep.subr.bf16.mxu0 0
        %5332 = vmatpush1.bf16.msra.mxu0 0
        %5333 = vmatprep.subr.bf16.mxu0 0
        %5334 = vmatpush1.bf16.msra.mxu0 0
        %5335 = vmatprep.subr.bf16.mxu0 0
        %5336 = vmatpush1.bf16.msra.mxu0 0
        %5337 = vmatprep.subr.bf16.mxu0 0
        %5338 = vmatpush1.bf16.msra.mxu0 0
        %5339 = vmatprep.subr.bf16.mxu0 0
        %5340 = vmatpush1.bf16.msra.mxu0 0
        %5341 = vmatprep.mubr.bf16.mxu0 0
        %5342 = vmatmul.mubr.bf16.gmra.mrb[0].mxu0 %v5295
        %v5343 = vpop.f32.mrb[0].mxu0
        %v5344 = vadd.f32 0.0, %v5343
        %v5345 = vpop.f32.mrb[0].mxu0
        %v5346 = vpop.f32.mrb[0].mxu0
        %v5347 = vadd.f32 0.0, %v5346
        %v5348 = vpop.f32.mrb[0].mxu0
        %5349 = vmatprep.mubr.bf16.mxu0 0
        %5350 = vmatmul.mubr.bf16.gmra.mrb[0].mxu0 %v5298
        %v5351 = vpop.f32.mrb[0].mxu0
        %v5352 = vadd.f32 0.0, %v5351
        %v5353 = vpop.f32.mrb[0].mxu0
        %v5354 = vpop.f32.mrb[0].mxu0
        %v5355 = vadd.f32 0.0, %v5354
        %v5356 = vpop.f32.mrb[0].mxu0
        %5357 = vmatprep.mubr.bf16.mxu0 0
        %5358 = vmatmul.mubr.bf16.gmra.mrb[0].mxu0 %v5301
        %v5359 = vpop.f32.mrb[0].mxu0
        %v5360 = vadd.f32 0.0, %v5359
        %v5361 = vpop.f32.mrb[0].mxu0
        %v5362 = vpop.f32.mrb[0].mxu0
        %v5363 = vadd.f32 0.0, %v5362
        %v5364 = vpop.f32.mrb[0].mxu0
        %5365 = vmatprep.mubr.bf16.mxu0 0
        %5366 = vmatmul.mubr.bf16.gmra.mrb[0].mxu0 %v5304
        %v5367 = vpop.f32.mrb[0].mxu0
        %v5368 = vadd.f32 0.0, %v5367
        %v5369 = vpop.f32.mrb[0].mxu0
        %v5370 = vpop.f32.mrb[0].mxu0
        %v5371 = vadd.f32 0.0, %v5370
        %v5372 = vpop.f32.mrb[0].mxu0
        %5373 = vdwg.mxu0
        %v5374 = vadd.f32 %v5173, %v5344
        %v5375 = vadd.f32 %v5174, %v5347
        %v5376 = vadd.f32 %v5175, %v5352
        %v5377 = vadd.f32 %v5176, %v5355
        %v5378 = vadd.f32 %v5177, %v5360
        %v5379 = vadd.f32 %v5178, %v5363
        %v5380 = vadd.f32 %v5179, %v5368
        %v5381 = vadd.f32 %v5180, %v5371
        %s5382 = scalar_lea.vmem %s5, 144
        %v5383 = vld [vmem:[%s5382] sm:$0xf]
        %v5384 = vld [vmem:[%s5382 + $0x4] sm:$0xf]
        %v5385 = vld [vmem:[%s5382 + $0x8] sm:$0xf]
        %v5386 = vld [vmem:[%s5382 + $0xc] sm:$0xf]
        %v5387 = vld [vmem:[%s5382 + $0x10] sm:$0xf]
        %v5388 = vld [vmem:[%s5382 + $0x14] sm:$0xf]
        %v5389 = vld [vmem:[%s5382 + $0x18] sm:$0xf]
        %v5390 = vld [vmem:[%s5382 + $0x1c] sm:$0xf]
        %v5391 = vld [vmem:[%s5382 + $0x20] sm:$0xf]
        %v5400 = vunpack.c.l.b16 %v4389
        %v5401 = vunpack.c.l.b16 %v4401
        %v5402 = vunpack.c.l.b16 %v4413
        %v5403 = vunpack.c.l.b16 %v4425
        %v5404 = vunpack.c.l.b16 %v4437
        %v5405 = vunpack.c.l.b16 %v4449
        %v5406 = vunpack.c.l.b16 %v4461
        %v5407 = vunpack.c.l.b16 %v4473
        %v5408 = vsel %vm4621, %v4561, %v4560
        %v5409 = vsel %vm4623, %v4562, %v5408
        %v5410 = vsel %vm4625, %v4563, %v5409
        %v5411 = vsel %vm4627, %v4564, %v5410
        %v5412 = vsel %vm4629, %v4998, %v5411
        %v5413 = vsel %vm4631, %v5199, %v5412
        %v5414 = vsel %vm4633, %v5400, %v5413
        %v5415 = vsel %vm4621, %v4569, %v4568
        %v5416 = vsel %vm4623, %v4570, %v5415
        %v5417 = vsel %vm4625, %v4571, %v5416
        %v5418 = vsel %vm4627, %v4572, %v5417
        %v5419 = vsel %vm4629, %v4999, %v5418
        %v5420 = vsel %vm4631, %v5200, %v5419
        %v5421 = vsel %vm4633, %v5401, %v5420
        %v5422 = vsel %vm4621, %v4577, %v4576
        %v5423 = vsel %vm4623, %v4578, %v5422
        %v5424 = vsel %vm4625, %v4579, %v5423
        %v5425 = vsel %vm4627, %v4580, %v5424
        %v5426 = vsel %vm4629, %v5000, %v5425
        %v5427 = vsel %vm4631, %v5201, %v5426
        %v5428 = vsel %vm4633, %v5402, %v5427
        %v5429 = vsel %vm4621, %v4585, %v4584
        %v5430 = vsel %vm4623, %v4586, %v5429
        %v5431 = vsel %vm4625, %v4587, %v5430
        %v5432 = vsel %vm4627, %v4588, %v5431
        %v5433 = vsel %vm4629, %v5001, %v5432
        %v5434 = vsel %vm4631, %v5202, %v5433
        %v5435 = vsel %vm4633, %v5403, %v5434
        %v5436 = vsel %vm4621, %v4593, %v4592
        %v5437 = vsel %vm4623, %v4594, %v5436
        %v5438 = vsel %vm4625, %v4595, %v5437
        %v5439 = vsel %vm4627, %v4596, %v5438
        %v5440 = vsel %vm4629, %v5002, %v5439
        %v5441 = vsel %vm4631, %v5203, %v5440
        %v5442 = vsel %vm4633, %v5404, %v5441
        %v5443 = vsel %vm4621, %v4601, %v4600
        %v5444 = vsel %vm4623, %v4602, %v5443
        %v5445 = vsel %vm4625, %v4603, %v5444
        %v5446 = vsel %vm4627, %v4604, %v5445
        %v5447 = vsel %vm4629, %v5003, %v5446
        %v5448 = vsel %vm4631, %v5204, %v5447
        %v5449 = vsel %vm4633, %v5405, %v5448
        %v5450 = vsel %vm4621, %v4609, %v4608
        %v5451 = vsel %vm4623, %v4610, %v5450
        %v5452 = vsel %vm4625, %v4611, %v5451
        %v5453 = vsel %vm4627, %v4612, %v5452
        %v5454 = vsel %vm4629, %v5004, %v5453
        %v5455 = vsel %vm4631, %v5205, %v5454
        %v5456 = vsel %vm4633, %v5406, %v5455
        %v5457 = vsel %vm4621, %v4617, %v4616
        %v5458 = vsel %vm4623, %v4618, %v5457
        %v5459 = vsel %vm4625, %v4619, %v5458
        %v5460 = vsel %vm4627, %v4620, %v5459
        %v5461 = vsel %vm4629, %v5005, %v5460
        %v5462 = vsel %vm4631, %v5206, %v5461
        %v5463 = vsel %vm4633, %v5407, %v5462
        %v5464 = vpack.c.b16 %v5421, %v5414
        %v5465 = vpack.c.b16 %v5435, %v5428
        %v5466 = vpack.c.b16 %v5449, %v5442
        %v5467 = vpack.c.b16 %v5463, %v5456
        %v5477 = vunpack.c.l.b16 %v5383
        %v5478 = vunpack.c.l.b16 %v5384
        %v5479 = vunpack.c.l.b16 %v5385
        %v5480 = vunpack.c.l.b16 %v5386
        %v5481 = vunpack.c.l.b16 %v5387
        %v5482 = vunpack.c.l.b16 %v5388
        %v5483 = vunpack.c.l.b16 %v5389
        %v5484 = vunpack.c.l.b16 %v5390
        %v5485 = vunpack.c.l.b16 %v5391
        %v5486 = vpack.c.b16 %v5478, %v5477
        %v5487 = vpack.c.b16 %v5480, %v5479
        %v5488 = vpack.c.b16 %v5482, %v5481
        %v5489 = vpack.c.b16 %v5484, %v5483
        %v5490 = vpack.c.b16 %v5485, %v5485
        %v5496 = vsel %vm4715, %v5464, 0
        %v5499 = vsel %vm4715, %v5465, 0
        %v5502 = vsel %vm4715, %v5466, 0
        %v5505 = vsel %vm4715, %v5467, 0
        %v5508 = vsel %vm4728, %v5490, 0
        %5510 = vmatprep.subr.bf16.mxu0 0
        %5511 = vmatpush1.bf16.msra.mxu0 %v5486
        %5512 = vmatprep.subr.bf16.mxu0 0
        %5513 = vmatpush1.bf16.msra.mxu0 %v5487
        %5514 = vmatprep.subr.bf16.mxu0 0
        %5515 = vmatpush1.bf16.msra.mxu0 %v5488
        %5516 = vmatprep.subr.bf16.mxu0 0
        %5517 = vmatpush1.bf16.msra.mxu0 %v5489
        %5518 = vmatprep.subr.bf16.mxu0 0
        %5519 = vmatpush1.bf16.msra.mxu0 %v5508
        %5520 = vmatprep.subr.bf16.mxu0 0
        %5521 = vmatpush1.bf16.msra.mxu0 0
        %5522 = vmatprep.subr.bf16.mxu0 0
        %5523 = vmatpush1.bf16.msra.mxu0 0
        %5524 = vmatprep.subr.bf16.mxu0 0
        %5525 = vmatpush1.bf16.msra.mxu0 0
        %5526 = vmatprep.subr.bf16.mxu0 0
        %5527 = vmatpush1.bf16.msra.mxu0 0
        %5528 = vmatprep.subr.bf16.mxu0 0
        %5529 = vmatpush1.bf16.msra.mxu0 0
        %5530 = vmatprep.subr.bf16.mxu0 0
        %5531 = vmatpush1.bf16.msra.mxu0 0
        %5532 = vmatprep.subr.bf16.mxu0 0
        %5533 = vmatpush1.bf16.msra.mxu0 0
        %5534 = vmatprep.subr.bf16.mxu0 0
        %5535 = vmatpush1.bf16.msra.mxu0 0
        %5536 = vmatprep.subr.bf16.mxu0 0
        %5537 = vmatpush1.bf16.msra.mxu0 0
        %5538 = vmatprep.subr.bf16.mxu0 0
        %5539 = vmatpush1.bf16.msra.mxu0 0
        %5540 = vmatprep.subr.bf16.mxu0 0
        %5541 = vmatpush1.bf16.msra.mxu0 0
        %5542 = vmatprep.mubr.bf16.mxu0 0
        %5543 = vmatmul.mubr.bf16.gmra.mrb[0].mxu0 %v5496
        %v5544 = vpop.f32.mrb[0].mxu0
        %v5545 = vadd.f32 0.0, %v5544
        %v5546 = vpop.f32.mrb[0].mxu0
        %v5547 = vpop.f32.mrb[0].mxu0
        %v5548 = vadd.f32 0.0, %v5547
        %v5549 = vpop.f32.mrb[0].mxu0
        %5550 = vmatprep.mubr.bf16.mxu0 0
        %5551 = vmatmul.mubr.bf16.gmra.mrb[0].mxu0 %v5499
        %v5552 = vpop.f32.mrb[0].mxu0
        %v5553 = vadd.f32 0.0, %v5552
        %v5554 = vpop.f32.mrb[0].mxu0
        %v5555 = vpop.f32.mrb[0].mxu0
        %v5556 = vadd.f32 0.0, %v5555
        %v5557 = vpop.f32.mrb[0].mxu0
        %5558 = vmatprep.mubr.bf16.mxu0 0
        %5559 = vmatmul.mubr.bf16.gmra.mrb[0].mxu0 %v5502
        %v5560 = vpop.f32.mrb[0].mxu0
        %v5561 = vadd.f32 0.0, %v5560
        %v5562 = vpop.f32.mrb[0].mxu0
        %v5563 = vpop.f32.mrb[0].mxu0
        %v5564 = vadd.f32 0.0, %v5563
        %v5565 = vpop.f32.mrb[0].mxu0
        %5566 = vmatprep.mubr.bf16.mxu0 0
        %5567 = vmatmul.mubr.bf16.gmra.mrb[0].mxu0 %v5505
        %v5568 = vpop.f32.mrb[0].mxu0
        %v5569 = vadd.f32 0.0, %v5568
        %v5570 = vpop.f32.mrb[0].mxu0
        %v5571 = vpop.f32.mrb[0].mxu0
        %v5572 = vadd.f32 0.0, %v5571
        %v5573 = vpop.f32.mrb[0].mxu0
        %5574 = vdwg.mxu0
        %v5575 = vadd.f32 %v5374, %v5545
        %v5576 = vadd.f32 %v5375, %v5548
        %v5577 = vadd.f32 %v5376, %v5553
        %v5578 = vadd.f32 %v5377, %v5556
        %v5579 = vadd.f32 %v5378, %v5561
        %v5580 = vadd.f32 %v5379, %v5564
        %v5581 = vadd.f32 %v5380, %v5569
        %v5582 = vadd.f32 %v5381, %v5572
        %v5583 = vld [vmem:[%s6] sm:$0x1]
        %v5585 = vlaneseq
        %v5586 = vshrl.u32 %v5585, 7
        %v5587 = vsub.s32 0, %v5586
        %v5588 = vrot.slane %v5583, %v5587
        %v5590 = vadd.f32 %v5575, %v5588
        %v5591 = vadd.f32 %v5576, %v5588
        %v5592 = vadd.f32 %v5577, %v5588
        %v5593 = vadd.f32 %v5578, %v5588
        %v5594 = vadd.f32 %v5579, %v5588
        %v5595 = vadd.f32 %v5580, %v5588
        %v5596 = vadd.f32 %v5581, %v5588
        %v5597 = vadd.f32 %v5582, %v5588
        %v5598 = vmax.f32 %v5590, 0.0
        %v5599 = vmax.f32 %v5591, 0.0
        %v5600 = vmax.f32 %v5592, 0.0
        %v5601 = vmax.f32 %v5593, 0.0
        %v5602 = vmax.f32 %v5594, 0.0
        %v5603 = vmax.f32 %v5595, 0.0
        %v5604 = vmax.f32 %v5596, 0.0
        %v5605 = vmax.f32 %v5597, 0.0
        %v5606 = vpack.c.bf16 %v5599, %v5598
        %v5607 = vpack.c.bf16 %v5601, %v5600
        %v5608 = vpack.c.bf16 %v5603, %v5602
        %v5609 = vpack.c.bf16 %v5605, %v5604
        %v5610 = vld [vmem:[%s7] sm:$0xf]
        %v5611 = vld [vmem:[%s7 + $0x4] sm:$0xf]
        %v5612 = vld [vmem:[%s7 + $0x8] sm:$0xf]
        %v5613 = vld [vmem:[%s7 + $0xc] sm:$0xf]
        %v5614 = vld [vmem:[%s7 + $0x10] sm:$0xf]
        %v5615 = vld [vmem:[%s7 + $0x14] sm:$0xf]
        %v5616 = vld [vmem:[%s7 + $0x18] sm:$0xf]
        %v5617 = vld [vmem:[%s7 + $0x1c] sm:$0xf]
        %v5618 = vld [vmem:[%s7 + $0x20] sm:$0xf]
        %v5619 = vld [vmem:[%s7 + $0x24] sm:$0xf]
        %v5620 = vld [vmem:[%s7 + $0x28] sm:$0xf]
        %v5621 = vld [vmem:[%s7 + $0x2c] sm:$0xf]
        %v5622 = vld [vmem:[%s7 + $0x30] sm:$0xf]
        %v5623 = vld [vmem:[%s7 + $0x34] sm:$0xf]
        %v5624 = vld [vmem:[%s7 + $0x38] sm:$0xf]
        %v5625 = vld [vmem:[%s7 + $0x3c] sm:$0xf]
        %v5642 = vunpack.c.l.b16 %v5610
        %v5643 = vunpack.c.l.b16 %v5611
        %v5644 = vunpack.c.l.b16 %v5612
        %v5645 = vunpack.c.l.b16 %v5613
        %v5646 = vunpack.c.l.b16 %v5614
        %v5647 = vunpack.c.l.b16 %v5615
        %v5648 = vunpack.c.l.b16 %v5616
        %v5649 = vunpack.c.l.b16 %v5617
        %v5650 = vunpack.c.l.b16 %v5618
        %v5651 = vunpack.c.l.b16 %v5619
        %v5652 = vunpack.c.l.b16 %v5620
        %v5653 = vunpack.c.l.b16 %v5621
        %v5654 = vunpack.c.l.b16 %v5622
        %v5655 = vunpack.c.l.b16 %v5623
        %v5656 = vunpack.c.l.b16 %v5624
        %v5657 = vunpack.c.l.b16 %v5625
        %v5658 = vpack.c.b16 %v5643, %v5642
        %v5659 = vpack.c.b16 %v5645, %v5644
        %v5660 = vpack.c.b16 %v5647, %v5646
        %v5661 = vpack.c.b16 %v5649, %v5648
        %v5662 = vpack.c.b16 %v5651, %v5650
        %v5663 = vpack.c.b16 %v5653, %v5652
        %v5664 = vpack.c.b16 %v5655, %v5654
        %v5665 = vpack.c.b16 %v5657, %v5656
        %5674 = vmatprep.subr.bf16.mxu0 0
        %5675 = vmatpush1.bf16.msra.mxu0 %v5658
        %5676 = vmatprep.subr.bf16.mxu0 0
        %5677 = vmatpush1.bf16.msra.mxu0 %v5659
        %5678 = vmatprep.subr.bf16.mxu0 0
        %5679 = vmatpush1.bf16.msra.mxu0 %v5660
        %5680 = vmatprep.subr.bf16.mxu0 0
        %5681 = vmatpush1.bf16.msra.mxu0 %v5661
        %5682 = vmatprep.subr.bf16.mxu0 0
        %5683 = vmatpush1.bf16.msra.mxu0 %v5662
        %5684 = vmatprep.subr.bf16.mxu0 0
        %5685 = vmatpush1.bf16.msra.mxu0 %v5663
        %5686 = vmatprep.subr.bf16.mxu0 0
        %5687 = vmatpush1.bf16.msra.mxu0 %v5664
        %5688 = vmatprep.subr.bf16.mxu0 0
        %5689 = vmatpush1.bf16.msra.mxu0 %v5665
        %5690 = vmatprep.subr.bf16.mxu0 0
        %5691 = vmatpush1.bf16.msra.mxu0 0
        %5692 = vmatprep.subr.bf16.mxu0 0
        %5693 = vmatpush1.bf16.msra.mxu0 0
        %5694 = vmatprep.subr.bf16.mxu0 0
        %5695 = vmatpush1.bf16.msra.mxu0 0
        %5696 = vmatprep.subr.bf16.mxu0 0
        %5697 = vmatpush1.bf16.msra.mxu0 0
        %5698 = vmatprep.subr.bf16.mxu0 0
        %5699 = vmatpush1.bf16.msra.mxu0 0
        %5700 = vmatprep.subr.bf16.mxu0 0
        %5701 = vmatpush1.bf16.msra.mxu0 0
        %5702 = vmatprep.subr.bf16.mxu0 0
        %5703 = vmatpush1.bf16.msra.mxu0 0
        %5704 = vmatprep.subr.bf16.mxu0 0
        %5705 = vmatpush1.bf16.msra.mxu0 0
        %5706 = vmatprep.mubr.bf16.mxu0 0
        %5707 = vmatmul.mubr.bf16.gmra.mrb[0].mxu0 %v5606
        %v5708 = vpop.f32.mrb[0].mxu0
        %v5709 = vadd.f32 0.0, %v5708
        %v5710 = vpop.f32.mrb[0].mxu0
        %v5711 = vpop.f32.mrb[0].mxu0
        %v5712 = vadd.f32 0.0, %v5711
        %v5713 = vpop.f32.mrb[0].mxu0
        %5714 = vmatprep.mubr.bf16.mxu0 0
        %5715 = vmatmul.mubr.bf16.gmra.mrb[0].mxu0 %v5607
        %v5716 = vpop.f32.mrb[0].mxu0
        %v5717 = vadd.f32 0.0, %v5716
        %v5718 = vpop.f32.mrb[0].mxu0
        %v5719 = vpop.f32.mrb[0].mxu0
        %v5720 = vadd.f32 0.0, %v5719
        %v5721 = vpop.f32.mrb[0].mxu0
        %5722 = vmatprep.mubr.bf16.mxu0 0
        %5723 = vmatmul.mubr.bf16.gmra.mrb[0].mxu0 %v5608
        %v5724 = vpop.f32.mrb[0].mxu0
        %v5725 = vadd.f32 0.0, %v5724
        %v5726 = vpop.f32.mrb[0].mxu0
        %v5727 = vpop.f32.mrb[0].mxu0
        %v5728 = vadd.f32 0.0, %v5727
        %v5729 = vpop.f32.mrb[0].mxu0
        %5730 = vmatprep.mubr.bf16.mxu0 0
        %5731 = vmatmul.mubr.bf16.gmra.mrb[0].mxu0 %v5609
        %v5732 = vpop.f32.mrb[0].mxu0
        %v5733 = vadd.f32 0.0, %v5732
        %v5734 = vpop.f32.mrb[0].mxu0
        %v5735 = vpop.f32.mrb[0].mxu0
        %v5736 = vadd.f32 0.0, %v5735
        %v5737 = vpop.f32.mrb[0].mxu0
        %5738 = vdwg.mxu0
        %v5739 = vld [vmem:[%s8] sm:$0xf]
        %v5740 = vld [vmem:[%s8 + $0x4] sm:$0xf]
        %v5741 = vld [vmem:[%s8 + $0x8] sm:$0xf]
        %v5742 = vld [vmem:[%s8 + $0xc] sm:$0xf]
        %v5743 = vld [vmem:[%s8 + $0x10] sm:$0xf]
        %v5744 = vld [vmem:[%s8 + $0x14] sm:$0xf]
        %v5745 = vld [vmem:[%s8 + $0x18] sm:$0xf]
        %v5746 = vld [vmem:[%s8 + $0x1c] sm:$0xf]
        %v5747 = vld [vmem:[%s8 + $0x20] sm:$0xf]
        %v5748 = vld [vmem:[%s8 + $0x24] sm:$0xf]
        %v5749 = vld [vmem:[%s8 + $0x28] sm:$0xf]
        %v5750 = vld [vmem:[%s8 + $0x2c] sm:$0xf]
        %v5751 = vld [vmem:[%s8 + $0x30] sm:$0xf]
        %v5752 = vld [vmem:[%s8 + $0x34] sm:$0xf]
        %v5753 = vld [vmem:[%s8 + $0x38] sm:$0xf]
        %v5754 = vld [vmem:[%s8 + $0x3c] sm:$0xf]
        %v5771 = vunpack.c.l.b16 %v5739
        %v5772 = vunpack.c.l.b16 %v5740
        %v5773 = vunpack.c.l.b16 %v5741
        %v5774 = vunpack.c.l.b16 %v5742
        %v5775 = vunpack.c.l.b16 %v5743
        %v5776 = vunpack.c.l.b16 %v5744
        %v5777 = vunpack.c.l.b16 %v5745
        %v5778 = vunpack.c.l.b16 %v5746
        %v5779 = vunpack.c.l.b16 %v5747
        %v5780 = vunpack.c.l.b16 %v5748
        %v5781 = vunpack.c.l.b16 %v5749
        %v5782 = vunpack.c.l.b16 %v5750
        %v5783 = vunpack.c.l.b16 %v5751
        %v5784 = vunpack.c.l.b16 %v5752
        %v5785 = vunpack.c.l.b16 %v5753
        %v5786 = vunpack.c.l.b16 %v5754
        %v5787 = vpack.c.b16 %v5772, %v5771
        %v5788 = vpack.c.b16 %v5774, %v5773
        %v5789 = vpack.c.b16 %v5776, %v5775
        %v5790 = vpack.c.b16 %v5778, %v5777
        %v5791 = vpack.c.b16 %v5780, %v5779
        %v5792 = vpack.c.b16 %v5782, %v5781
        %v5793 = vpack.c.b16 %v5784, %v5783
        %v5794 = vpack.c.b16 %v5786, %v5785
        %5803 = vmatprep.subr.bf16.mxu0 0
        %5804 = vmatpush1.bf16.msra.mxu0 %v5787
        %5805 = vmatprep.subr.bf16.mxu0 0
        %5806 = vmatpush1.bf16.msra.mxu0 %v5788
        %5807 = vmatprep.subr.bf16.mxu0 0
        %5808 = vmatpush1.bf16.msra.mxu0 %v5789
        %5809 = vmatprep.subr.bf16.mxu0 0
        %5810 = vmatpush1.bf16.msra.mxu0 %v5790
        %5811 = vmatprep.subr.bf16.mxu0 0
        %5812 = vmatpush1.bf16.msra.mxu0 %v5791
        %5813 = vmatprep.subr.bf16.mxu0 0
        %5814 = vmatpush1.bf16.msra.mxu0 %v5792
        %5815 = vmatprep.subr.bf16.mxu0 0
        %5816 = vmatpush1.bf16.msra.mxu0 %v5793
        %5817 = vmatprep.subr.bf16.mxu0 0
        %5818 = vmatpush1.bf16.msra.mxu0 %v5794
        %5819 = vmatprep.subr.bf16.mxu0 0
        %5820 = vmatpush1.bf16.msra.mxu0 0
        %5821 = vmatprep.subr.bf16.mxu0 0
        %5822 = vmatpush1.bf16.msra.mxu0 0
        %5823 = vmatprep.subr.bf16.mxu0 0
        %5824 = vmatpush1.bf16.msra.mxu0 0
        %5825 = vmatprep.subr.bf16.mxu0 0
        %5826 = vmatpush1.bf16.msra.mxu0 0
        %5827 = vmatprep.subr.bf16.mxu0 0
        %5828 = vmatpush1.bf16.msra.mxu0 0
        %5829 = vmatprep.subr.bf16.mxu0 0
        %5830 = vmatpush1.bf16.msra.mxu0 0
        %5831 = vmatprep.subr.bf16.mxu0 0
        %5832 = vmatpush1.bf16.msra.mxu0 0
        %5833 = vmatprep.subr.bf16.mxu0 0
        %5834 = vmatpush1.bf16.msra.mxu0 0
        %5835 = vmatprep.mubr.bf16.mxu0 0
        %5836 = vmatmul.mubr.bf16.gmra.mrb[0].mxu0 %v5606
        %v5837 = vpop.f32.mrb[0].mxu0
        %v5838 = vadd.f32 0.0, %v5837
        %v5839 = vpop.f32.mrb[0].mxu0
        %v5840 = vpop.f32.mrb[0].mxu0
        %v5841 = vadd.f32 0.0, %v5840
        %v5842 = vpop.f32.mrb[0].mxu0
        %5843 = vmatprep.mubr.bf16.mxu0 0
        %5844 = vmatmul.mubr.bf16.gmra.mrb[0].mxu0 %v5607
        %v5845 = vpop.f32.mrb[0].mxu0
        %v5846 = vadd.f32 0.0, %v5845
        %v5847 = vpop.f32.mrb[0].mxu0
        %v5848 = vpop.f32.mrb[0].mxu0
        %v5849 = vadd.f32 0.0, %v5848
        %v5850 = vpop.f32.mrb[0].mxu0
        %5851 = vmatprep.mubr.bf16.mxu0 0
        %5852 = vmatmul.mubr.bf16.gmra.mrb[0].mxu0 %v5608
        %v5853 = vpop.f32.mrb[0].mxu0
        %v5854 = vadd.f32 0.0, %v5853
        %v5855 = vpop.f32.mrb[0].mxu0
        %v5856 = vpop.f32.mrb[0].mxu0
        %v5857 = vadd.f32 0.0, %v5856
        %v5858 = vpop.f32.mrb[0].mxu0
        %5859 = vmatprep.mubr.bf16.mxu0 0
        %5860 = vmatmul.mubr.bf16.gmra.mrb[0].mxu0 %v5609
        %v5861 = vpop.f32.mrb[0].mxu0
        %v5862 = vadd.f32 0.0, %v5861
        %v5863 = vpop.f32.mrb[0].mxu0
        %v5864 = vpop.f32.mrb[0].mxu0
        %v5865 = vadd.f32 0.0, %v5864
        %v5866 = vpop.f32.mrb[0].mxu0
        %5867 = vdwg.mxu0
        %v5868 = vmax.f32 %v5709, %v5838
        %v5869 = vmax.f32 %v5712, %v5841
        %v5870 = vmax.f32 %v5717, %v5846
        %v5871 = vmax.f32 %v5720, %v5849
        %v5872 = vmax.f32 %v5725, %v5854
        %v5873 = vmax.f32 %v5728, %v5857
        %v5874 = vmax.f32 %v5733, %v5862
        %v5875 = vmax.f32 %v5736, %v5865
        %v5884 = vcombine.high %v5868, %v5868
        %v5886 = vunpack.c.l.s4 1983009808
        %v5887 = vunpack.c.0.s8 %v5886
        %v5888 = vlaneseq
        %v5889 = vshrl.u32 %v5888, 7
        %v5890 = vsub.s32 %v5887, %v5889
        %v5891 = vrot.slane %v5868, %v5890
        %v5893 = vunpack.c.l.s4 1983009808
        %v5894 = vunpack.c.0.s8 %v5893
        %v5895 = vlaneseq
        %v5896 = vshrl.u32 %v5895, 7
        %v5897 = vsub.s32 %v5894, %v5896
        %v5898 = vrot.slane %v5884, %v5897
        %v5899 = vcombine.high %v5891, %v5891
        %v5900 = vcombine.high %v5898, %v5898
        %v5901 = vcombine.high %v5869, %v5869
        %v5903 = vunpack.c.l.s4 1983009808
        %v5904 = vunpack.c.0.s8 %v5903
        %v5905 = vlaneseq
        %v5906 = vshrl.u32 %v5905, 7
        %v5907 = vsub.s32 %v5904, %v5906
        %v5908 = vrot.slane %v5869, %v5907
        %v5910 = vunpack.c.l.s4 1983009808
        %v5911 = vunpack.c.0.s8 %v5910
        %v5912 = vlaneseq
        %v5913 = vshrl.u32 %v5912, 7
        %v5914 = vsub.s32 %v5911, %v5913
        %v5915 = vrot.slane %v5901, %v5914
        %v5916 = vcombine.high %v5908, %v5908
        %v5917 = vcombine.high %v5915, %v5915
        %v5918 = vcombine.high %v5870, %v5870
        %v5920 = vunpack.c.l.s4 1983009808
        %v5921 = vunpack.c.0.s8 %v5920
        %v5922 = vlaneseq
        %v5923 = vshrl.u32 %v5922, 7
        %v5924 = vsub.s32 %v5921, %v5923
        %v5925 = vrot.slane %v5870, %v5924
        %v5927 = vunpack.c.l.s4 1983009808
        %v5928 = vunpack.c.0.s8 %v5927
        %v5929 = vlaneseq
        %v5930 = vshrl.u32 %v5929, 7
        %v5931 = vsub.s32 %v5928, %v5930
        %v5932 = vrot.slane %v5918, %v5931
        %v5933 = vcombine.high %v5925, %v5925
        %v5934 = vcombine.high %v5932, %v5932
        %v5935 = vcombine.high %v5871, %v5871
        %v5937 = vunpack.c.l.s4 1983009808
        %v5938 = vunpack.c.0.s8 %v5937
        %v5939 = vlaneseq
        %v5940 = vshrl.u32 %v5939, 7
        %v5941 = vsub.s32 %v5938, %v5940
        %v5942 = vrot.slane %v5871, %v5941
        %v5944 = vunpack.c.l.s4 1983009808
        %v5945 = vunpack.c.0.s8 %v5944
        %v5946 = vlaneseq
        %v5947 = vshrl.u32 %v5946, 7
        %v5948 = vsub.s32 %v5945, %v5947
        %v5949 = vrot.slane %v5935, %v5948
        %v5950 = vcombine.high %v5942, %v5942
        %v5951 = vcombine.high %v5949, %v5949
        %v5952 = vcombine.high %v5872, %v5872
        %v5954 = vunpack.c.l.s4 1983009808
        %v5955 = vunpack.c.0.s8 %v5954
        %v5956 = vlaneseq
        %v5957 = vshrl.u32 %v5956, 7
        %v5958 = vsub.s32 %v5955, %v5957
        %v5959 = vrot.slane %v5872, %v5958
        %v5961 = vunpack.c.l.s4 1983009808
        %v5962 = vunpack.c.0.s8 %v5961
        %v5963 = vlaneseq
        %v5964 = vshrl.u32 %v5963, 7
        %v5965 = vsub.s32 %v5962, %v5964
        %v5966 = vrot.slane %v5952, %v5965
        %v5967 = vcombine.high %v5959, %v5959
        %v5968 = vcombine.high %v5966, %v5966
        %v5969 = vcombine.high %v5873, %v5873
        %v5971 = vunpack.c.l.s4 1983009808
        %v5972 = vunpack.c.0.s8 %v5971
        %v5973 = vlaneseq
        %v5974 = vshrl.u32 %v5973, 7
        %v5975 = vsub.s32 %v5972, %v5974
        %v5976 = vrot.slane %v5873, %v5975
        %v5978 = vunpack.c.l.s4 1983009808
        %v5979 = vunpack.c.0.s8 %v5978
        %v5980 = vlaneseq
        %v5981 = vshrl.u32 %v5980, 7
        %v5982 = vsub.s32 %v5979, %v5981
        %v5983 = vrot.slane %v5969, %v5982
        %v5984 = vcombine.high %v5976, %v5976
        %v5985 = vcombine.high %v5983, %v5983
        %v5986 = vcombine.high %v5874, %v5874
        %v5988 = vunpack.c.l.s4 1983009808
        %v5989 = vunpack.c.0.s8 %v5988
        %v5990 = vlaneseq
        %v5991 = vshrl.u32 %v5990, 7
        %v5992 = vsub.s32 %v5989, %v5991
        %v5993 = vrot.slane %v5874, %v5992
        %v5995 = vunpack.c.l.s4 1983009808
        %v5996 = vunpack.c.0.s8 %v5995
        %v5997 = vlaneseq
        %v5998 = vshrl.u32 %v5997, 7
        %v5999 = vsub.s32 %v5996, %v5998
        %v6000 = vrot.slane %v5986, %v5999
        %v6001 = vcombine.high %v5993, %v5993
        %v6002 = vcombine.high %v6000, %v6000
        %v6003 = vcombine.high %v5875, %v5875
        %v6005 = vunpack.c.l.s4 1983009808
        %v6006 = vunpack.c.0.s8 %v6005
        %v6007 = vlaneseq
        %v6008 = vshrl.u32 %v6007, 7
        %v6009 = vsub.s32 %v6006, %v6008
        %v6010 = vrot.slane %v5875, %v6009
        %v6012 = vunpack.c.l.s4 1983009808
        %v6013 = vunpack.c.0.s8 %v6012
        %v6014 = vlaneseq
        %v6015 = vshrl.u32 %v6014, 7
        %v6016 = vsub.s32 %v6013, %v6015
        %v6017 = vrot.slane %v6003, %v6016
        %v6018 = vcombine.high %v6010, %v6010
        %v6019 = vcombine.high %v6017, %v6017
        %vm6052 = vcmask 517120
        %v6053 = vsel %vm6052, %v5891, -inf
        %v6054 = vrot.slane %v6053, 4
        %v6055 = vmax.f32 %v6053, %v6054
        %v6056 = vrot.slane %v6055, 2
        %v6057 = vmax.f32 %v6055, %v6056
        %v6058 = vrot.slane %v6057, 1
        %v6059 = vmax.f32 %v6057, %v6058
        %v6060 = vsel %vm6052, %v5899, -inf
        %v6061 = vrot.slane %v6060, 4
        %v6062 = vmax.f32 %v6060, %v6061
        %v6063 = vrot.slane %v6062, 2
        %v6064 = vmax.f32 %v6062, %v6063
        %v6065 = vrot.slane %v6064, 1
        %v6066 = vmax.f32 %v6064, %v6065
        %v6067 = vsel %vm6052, %v5898, -inf
        %v6068 = vrot.slane %v6067, 4
        %v6069 = vmax.f32 %v6067, %v6068
        %v6070 = vrot.slane %v6069, 2
        %v6071 = vmax.f32 %v6069, %v6070
        %v6072 = vrot.slane %v6071, 1
        %v6073 = vmax.f32 %v6071, %v6072
        %v6074 = vsel %vm6052, %v5900, -inf
        %v6075 = vrot.slane %v6074, 4
        %v6076 = vmax.f32 %v6074, %v6075
        %v6077 = vrot.slane %v6076, 2
        %v6078 = vmax.f32 %v6076, %v6077
        %v6079 = vrot.slane %v6078, 1
        %v6080 = vmax.f32 %v6078, %v6079
        %v6081 = vsel %vm6052, %v5908, -inf
        %v6082 = vrot.slane %v6081, 4
        %v6083 = vmax.f32 %v6081, %v6082
        %v6084 = vrot.slane %v6083, 2
        %v6085 = vmax.f32 %v6083, %v6084
        %v6086 = vrot.slane %v6085, 1
        %v6087 = vmax.f32 %v6085, %v6086
        %v6088 = vsel %vm6052, %v5916, -inf
        %v6089 = vrot.slane %v6088, 4
        %v6090 = vmax.f32 %v6088, %v6089
        %v6091 = vrot.slane %v6090, 2
        %v6092 = vmax.f32 %v6090, %v6091
        %v6093 = vrot.slane %v6092, 1
        %v6094 = vmax.f32 %v6092, %v6093
        %v6095 = vsel %vm6052, %v5915, -inf
        %v6096 = vrot.slane %v6095, 4
        %v6097 = vmax.f32 %v6095, %v6096
        %v6098 = vrot.slane %v6097, 2
        %v6099 = vmax.f32 %v6097, %v6098
        %v6100 = vrot.slane %v6099, 1
        %v6101 = vmax.f32 %v6099, %v6100
        %v6102 = vsel %vm6052, %v5917, -inf
        %v6103 = vrot.slane %v6102, 4
        %v6104 = vmax.f32 %v6102, %v6103
        %v6105 = vrot.slane %v6104, 2
        %v6106 = vmax.f32 %v6104, %v6105
        %v6107 = vrot.slane %v6106, 1
        %v6108 = vmax.f32 %v6106, %v6107
        %v6109 = vsel %vm6052, %v5925, -inf
        %v6110 = vrot.slane %v6109, 4
        %v6111 = vmax.f32 %v6109, %v6110
        %v6112 = vrot.slane %v6111, 2
        %v6113 = vmax.f32 %v6111, %v6112
        %v6114 = vrot.slane %v6113, 1
        %v6115 = vmax.f32 %v6113, %v6114
        %v6116 = vsel %vm6052, %v5933, -inf
        %v6117 = vrot.slane %v6116, 4
        %v6118 = vmax.f32 %v6116, %v6117
        %v6119 = vrot.slane %v6118, 2
        %v6120 = vmax.f32 %v6118, %v6119
        %v6121 = vrot.slane %v6120, 1
        %v6122 = vmax.f32 %v6120, %v6121
        %v6123 = vsel %vm6052, %v5932, -inf
        %v6124 = vrot.slane %v6123, 4
        %v6125 = vmax.f32 %v6123, %v6124
        %v6126 = vrot.slane %v6125, 2
        %v6127 = vmax.f32 %v6125, %v6126
        %v6128 = vrot.slane %v6127, 1
        %v6129 = vmax.f32 %v6127, %v6128
        %v6130 = vsel %vm6052, %v5934, -inf
        %v6131 = vrot.slane %v6130, 4
        %v6132 = vmax.f32 %v6130, %v6131
        %v6133 = vrot.slane %v6132, 2
        %v6134 = vmax.f32 %v6132, %v6133
        %v6135 = vrot.slane %v6134, 1
        %v6136 = vmax.f32 %v6134, %v6135
        %v6137 = vsel %vm6052, %v5942, -inf
        %v6138 = vrot.slane %v6137, 4
        %v6139 = vmax.f32 %v6137, %v6138
        %v6140 = vrot.slane %v6139, 2
        %v6141 = vmax.f32 %v6139, %v6140
        %v6142 = vrot.slane %v6141, 1
        %v6143 = vmax.f32 %v6141, %v6142
        %v6144 = vsel %vm6052, %v5950, -inf
        %v6145 = vrot.slane %v6144, 4
        %v6146 = vmax.f32 %v6144, %v6145
        %v6147 = vrot.slane %v6146, 2
        %v6148 = vmax.f32 %v6146, %v6147
        %v6149 = vrot.slane %v6148, 1
        %v6150 = vmax.f32 %v6148, %v6149
        %v6151 = vsel %vm6052, %v5949, -inf
        %v6152 = vrot.slane %v6151, 4
        %v6153 = vmax.f32 %v6151, %v6152
        %v6154 = vrot.slane %v6153, 2
        %v6155 = vmax.f32 %v6153, %v6154
        %v6156 = vrot.slane %v6155, 1
        %v6157 = vmax.f32 %v6155, %v6156
        %v6158 = vsel %vm6052, %v5951, -inf
        %v6159 = vrot.slane %v6158, 4
        %v6160 = vmax.f32 %v6158, %v6159
        %v6161 = vrot.slane %v6160, 2
        %v6162 = vmax.f32 %v6160, %v6161
        %v6163 = vrot.slane %v6162, 1
        %v6164 = vmax.f32 %v6162, %v6163
        %v6165 = vsel %vm6052, %v5959, -inf
        %v6166 = vrot.slane %v6165, 4
        %v6167 = vmax.f32 %v6165, %v6166
        %v6168 = vrot.slane %v6167, 2
        %v6169 = vmax.f32 %v6167, %v6168
        %v6170 = vrot.slane %v6169, 1
        %v6171 = vmax.f32 %v6169, %v6170
        %v6172 = vsel %vm6052, %v5967, -inf
        %v6173 = vrot.slane %v6172, 4
        %v6174 = vmax.f32 %v6172, %v6173
        %v6175 = vrot.slane %v6174, 2
        %v6176 = vmax.f32 %v6174, %v6175
        %v6177 = vrot.slane %v6176, 1
        %v6178 = vmax.f32 %v6176, %v6177
        %v6179 = vsel %vm6052, %v5966, -inf
        %v6180 = vrot.slane %v6179, 4
        %v6181 = vmax.f32 %v6179, %v6180
        %v6182 = vrot.slane %v6181, 2
        %v6183 = vmax.f32 %v6181, %v6182
        %v6184 = vrot.slane %v6183, 1
        %v6185 = vmax.f32 %v6183, %v6184
        %v6186 = vsel %vm6052, %v5968, -inf
        %v6187 = vrot.slane %v6186, 4
        %v6188 = vmax.f32 %v6186, %v6187
        %v6189 = vrot.slane %v6188, 2
        %v6190 = vmax.f32 %v6188, %v6189
        %v6191 = vrot.slane %v6190, 1
        %v6192 = vmax.f32 %v6190, %v6191
        %v6193 = vsel %vm6052, %v5976, -inf
        %v6194 = vrot.slane %v6193, 4
        %v6195 = vmax.f32 %v6193, %v6194
        %v6196 = vrot.slane %v6195, 2
        %v6197 = vmax.f32 %v6195, %v6196
        %v6198 = vrot.slane %v6197, 1
        %v6199 = vmax.f32 %v6197, %v6198
        %v6200 = vsel %vm6052, %v5984, -inf
        %v6201 = vrot.slane %v6200, 4
        %v6202 = vmax.f32 %v6200, %v6201
        %v6203 = vrot.slane %v6202, 2
        %v6204 = vmax.f32 %v6202, %v6203
        %v6205 = vrot.slane %v6204, 1
        %v6206 = vmax.f32 %v6204, %v6205
        %v6207 = vsel %vm6052, %v5983, -inf
        %v6208 = vrot.slane %v6207, 4
        %v6209 = vmax.f32 %v6207, %v6208
        %v6210 = vrot.slane %v6209, 2
        %v6211 = vmax.f32 %v6209, %v6210
        %v6212 = vrot.slane %v6211, 1
        %v6213 = vmax.f32 %v6211, %v6212
        %v6214 = vsel %vm6052, %v5985, -inf
        %v6215 = vrot.slane %v6214, 4
        %v6216 = vmax.f32 %v6214, %v6215
        %v6217 = vrot.slane %v6216, 2
        %v6218 = vmax.f32 %v6216, %v6217
        %v6219 = vrot.slane %v6218, 1
        %v6220 = vmax.f32 %v6218, %v6219
        %v6221 = vsel %vm6052, %v5993, -inf
        %v6222 = vrot.slane %v6221, 4
        %v6223 = vmax.f32 %v6221, %v6222
        %v6224 = vrot.slane %v6223, 2
        %v6225 = vmax.f32 %v6223, %v6224
        %v6226 = vrot.slane %v6225, 1
        %v6227 = vmax.f32 %v6225, %v6226
        %v6228 = vsel %vm6052, %v6001, -inf
        %v6229 = vrot.slane %v6228, 4
        %v6230 = vmax.f32 %v6228, %v6229
        %v6231 = vrot.slane %v6230, 2
        %v6232 = vmax.f32 %v6230, %v6231
        %v6233 = vrot.slane %v6232, 1
        %v6234 = vmax.f32 %v6232, %v6233
        %v6235 = vsel %vm6052, %v6000, -inf
        %v6236 = vrot.slane %v6235, 4
        %v6237 = vmax.f32 %v6235, %v6236
        %v6238 = vrot.slane %v6237, 2
        %v6239 = vmax.f32 %v6237, %v6238
        %v6240 = vrot.slane %v6239, 1
        %v6241 = vmax.f32 %v6239, %v6240
        %v6242 = vsel %vm6052, %v6002, -inf
        %v6243 = vrot.slane %v6242, 4
        %v6244 = vmax.f32 %v6242, %v6243
        %v6245 = vrot.slane %v6244, 2
        %v6246 = vmax.f32 %v6244, %v6245
        %v6247 = vrot.slane %v6246, 1
        %v6248 = vmax.f32 %v6246, %v6247
        %v6249 = vsel %vm6052, %v6010, -inf
        %v6250 = vrot.slane %v6249, 4
        %v6251 = vmax.f32 %v6249, %v6250
        %v6252 = vrot.slane %v6251, 2
        %v6253 = vmax.f32 %v6251, %v6252
        %v6254 = vrot.slane %v6253, 1
        %v6255 = vmax.f32 %v6253, %v6254
        %v6256 = vsel %vm6052, %v6018, -inf
        %v6257 = vrot.slane %v6256, 4
        %v6258 = vmax.f32 %v6256, %v6257
        %v6259 = vrot.slane %v6258, 2
        %v6260 = vmax.f32 %v6258, %v6259
        %v6261 = vrot.slane %v6260, 1
        %v6262 = vmax.f32 %v6260, %v6261
        %v6263 = vsel %vm6052, %v6017, -inf
        %v6264 = vrot.slane %v6263, 4
        %v6265 = vmax.f32 %v6263, %v6264
        %v6266 = vrot.slane %v6265, 2
        %v6267 = vmax.f32 %v6265, %v6266
        %v6268 = vrot.slane %v6267, 1
        %v6269 = vmax.f32 %v6267, %v6268
        %v6270 = vsel %vm6052, %v6019, -inf
        %v6271 = vrot.slane %v6270, 4
        %v6272 = vmax.f32 %v6270, %v6271
        %v6273 = vrot.slane %v6272, 2
        %v6274 = vmax.f32 %v6272, %v6273
        %v6275 = vrot.slane %v6274, 1
        %v6276 = vmax.f32 %v6274, %v6275
        %v6277 = vpack.c.bf16 %v6059, %v6059
        %v6278 = vpack.c.bf16 %v6066, %v6066
        %v6279 = vpack.c.bf16 %v6073, %v6073
        %v6280 = vpack.c.bf16 %v6080, %v6080
        %v6281 = vpack.c.bf16 %v6087, %v6087
        %v6282 = vpack.c.bf16 %v6094, %v6094
        %v6283 = vpack.c.bf16 %v6101, %v6101
        %v6284 = vpack.c.bf16 %v6108, %v6108
        %v6285 = vpack.c.bf16 %v6115, %v6115
        %v6286 = vpack.c.bf16 %v6122, %v6122
        %v6287 = vpack.c.bf16 %v6129, %v6129
        %v6288 = vpack.c.bf16 %v6136, %v6136
        %v6289 = vpack.c.bf16 %v6143, %v6143
        %v6290 = vpack.c.bf16 %v6150, %v6150
        %v6291 = vpack.c.bf16 %v6157, %v6157
        %v6292 = vpack.c.bf16 %v6164, %v6164
        %v6293 = vpack.c.bf16 %v6171, %v6171
        %v6294 = vpack.c.bf16 %v6178, %v6178
        %v6295 = vpack.c.bf16 %v6185, %v6185
        %v6296 = vpack.c.bf16 %v6192, %v6192
        %v6297 = vpack.c.bf16 %v6199, %v6199
        %v6298 = vpack.c.bf16 %v6206, %v6206
        %v6299 = vpack.c.bf16 %v6213, %v6213
        %v6300 = vpack.c.bf16 %v6220, %v6220
        %v6301 = vpack.c.bf16 %v6227, %v6227
        %v6302 = vpack.c.bf16 %v6234, %v6234
        %v6303 = vpack.c.bf16 %v6241, %v6241
        %v6304 = vpack.c.bf16 %v6248, %v6248
        %v6305 = vpack.c.bf16 %v6255, %v6255
        %v6306 = vpack.c.bf16 %v6262, %v6262
        %v6307 = vpack.c.bf16 %v6269, %v6269
        %v6308 = vpack.c.bf16 %v6276, %v6276
        %v6309 = vld [vmem:[%s9] sm:$0xf]
        %v6310 = vld [vmem:[%s9 + $0x4] sm:$0xf]
        %v6311 = vld [vmem:[%s9 + $0x8] sm:$0xf]
        %v6312 = vld [vmem:[%s9 + $0xc] sm:$0xf]
        %v6313 = vld [vmem:[%s9 + $0x10] sm:$0xf]
        %v6314 = vld [vmem:[%s9 + $0x14] sm:$0xf]
        %v6315 = vld [vmem:[%s9 + $0x18] sm:$0xf]
        %v6316 = vld [vmem:[%s9 + $0x1c] sm:$0xf]
        %s6317 = scalar_lea.vmem %s9, 32
        %v6318 = vld [vmem:[%s6317] sm:$0xf]
        %v6319 = vld [vmem:[%s6317 + $0x4] sm:$0xf]
        %v6320 = vld [vmem:[%s6317 + $0x8] sm:$0xf]
        %v6321 = vld [vmem:[%s6317 + $0xc] sm:$0xf]
        %v6322 = vld [vmem:[%s6317 + $0x10] sm:$0xf]
        %v6323 = vld [vmem:[%s6317 + $0x14] sm:$0xf]
        %v6324 = vld [vmem:[%s6317 + $0x18] sm:$0xf]
        %v6325 = vld [vmem:[%s6317 + $0x1c] sm:$0xf]
        %v6334 = vunpack.c.l.b16 %v6278
        %v6335 = vunpack.c.l.b16 %v6282
        %v6336 = vunpack.c.l.b16 %v6286
        %v6337 = vunpack.c.l.b16 %v6290
        %v6338 = vunpack.c.l.b16 %v6294
        %v6339 = vunpack.c.l.b16 %v6298
        %v6340 = vunpack.c.l.b16 %v6302
        %v6341 = vunpack.c.l.b16 %v6306
        %v6342 = vsel %vm4621, %v6335, %v6334
        %v6343 = vsel %vm4623, %v6336, %v6342
        %v6344 = vsel %vm4625, %v6337, %v6343
        %v6345 = vsel %vm4627, %v6338, %v6344
        %v6346 = vsel %vm4629, %v6339, %v6345
        %v6347 = vsel %vm4631, %v6340, %v6346
        %v6348 = vsel %vm4633, %v6341, %v6347
        %v6349 = vpack.c.b16 %v6348, %v6348
        %v6358 = vunpack.c.l.b16 %v6318
        %v6359 = vunpack.c.l.b16 %v6319
        %v6360 = vunpack.c.l.b16 %v6320
        %v6361 = vunpack.c.l.b16 %v6321
        %v6362 = vunpack.c.l.b16 %v6322
        %v6363 = vunpack.c.l.b16 %v6323
        %v6364 = vunpack.c.l.b16 %v6324
        %v6365 = vunpack.c.l.b16 %v6325
        %v6366 = vpack.c.b16 %v6359, %v6358
        %v6367 = vpack.c.b16 %v6361, %v6360
        %v6368 = vpack.c.b16 %v6363, %v6362
        %v6369 = vpack.c.b16 %v6365, %v6364
        %vm6374 = vcmask 523264
        %v6376 = vsel %vm6374, %v6349, 0
        %6378 = vmatprep.subr.bf16.mxu0 0
        %6379 = vmatpush1.bf16.msra.mxu0 %v6366
        %6380 = vmatprep.subr.bf16.mxu0 0
        %6381 = vmatpush1.bf16.msra.mxu0 %v6367
        %6382 = vmatprep.subr.bf16.mxu0 0
        %6383 = vmatpush1.bf16.msra.mxu0 %v6368
        %6384 = vmatprep.subr.bf16.mxu0 0
        %6385 = vmatpush1.bf16.msra.mxu0 %v6369
        %6386 = vmatprep.subr.bf16.mxu0 0
        %6387 = vmatpush1.bf16.msra.mxu0 0
        %6388 = vmatprep.subr.bf16.mxu0 0
        %6389 = vmatpush1.bf16.msra.mxu0 0
        %6390 = vmatprep.subr.bf16.mxu0 0
        %6391 = vmatpush1.bf16.msra.mxu0 0
        %6392 = vmatprep.subr.bf16.mxu0 0
        %6393 = vmatpush1.bf16.msra.mxu0 0
        %6394 = vmatprep.subr.bf16.mxu0 0
        %6395 = vmatpush1.bf16.msra.mxu0 0
        %6396 = vmatprep.subr.bf16.mxu0 0
        %6397 = vmatpush1.bf16.msra.mxu0 0
        %6398 = vmatprep.subr.bf16.mxu0 0
        %6399 = vmatpush1.bf16.msra.mxu0 0
        %6400 = vmatprep.subr.bf16.mxu0 0
        %6401 = vmatpush1.bf16.msra.mxu0 0
        %6402 = vmatprep.subr.bf16.mxu0 0
        %6403 = vmatpush1.bf16.msra.mxu0 0
        %6404 = vmatprep.subr.bf16.mxu0 0
        %6405 = vmatpush1.bf16.msra.mxu0 0
        %6406 = vmatprep.subr.bf16.mxu0 0
        %6407 = vmatpush1.bf16.msra.mxu0 0
        %6408 = vmatprep.subr.bf16.mxu0 0
        %6409 = vmatpush1.bf16.msra.mxu0 0
        %6410 = vmatprep.mubr.bf16.mxu0 0
        %6411 = vmatmul.mubr.bf16.gmra.mrb[0].mxu0 %v6376
        %v6412 = vpop.f32.mrb[0].mxu0
        %v6413 = vadd.f32 0.0, %v6412
        %v6414 = vpop.f32.mrb[0].mxu0
        %v6415 = vpop.f32.mrb[0].mxu0
        %v6416 = vpop.f32.mrb[0].mxu0
        %6417 = vdwg.mxu0
        %v6426 = vunpack.c.l.b16 %v6277
        %v6427 = vunpack.c.l.b16 %v6281
        %v6428 = vunpack.c.l.b16 %v6285
        %v6429 = vunpack.c.l.b16 %v6289
        %v6430 = vunpack.c.l.b16 %v6293
        %v6431 = vunpack.c.l.b16 %v6297
        %v6432 = vunpack.c.l.b16 %v6301
        %v6433 = vunpack.c.l.b16 %v6305
        %v6434 = vsel %vm4621, %v6427, %v6426
        %v6435 = vsel %vm4623, %v6428, %v6434
        %v6436 = vsel %vm4625, %v6429, %v6435
        %v6437 = vsel %vm4627, %v6430, %v6436
        %v6438 = vsel %vm4629, %v6431, %v6437
        %v6439 = vsel %vm4631, %v6432, %v6438
        %v6440 = vsel %vm4633, %v6433, %v6439
        %v6441 = vpack.c.b16 %v6440, %v6440
        %v6450 = vunpack.c.l.b16 %v6309
        %v6451 = vunpack.c.l.b16 %v6310
        %v6452 = vunpack.c.l.b16 %v6311
        %v6453 = vunpack.c.l.b16 %v6312
        %v6454 = vunpack.c.l.b16 %v6313
        %v6455 = vunpack.c.l.b16 %v6314
        %v6456 = vunpack.c.l.b16 %v6315
        %v6457 = vunpack.c.l.b16 %v6316
        %v6458 = vpack.c.b16 %v6451, %v6450
        %v6459 = vpack.c.b16 %v6453, %v6452
        %v6460 = vpack.c.b16 %v6455, %v6454
        %v6461 = vpack.c.b16 %v6457, %v6456
        %v6467 = vsel %vm6374, %v6441, 0
        %6469 = vmatprep.subr.bf16.mxu0 0
        %6470 = vmatpush1.bf16.msra.mxu0 %v6458
        %6471 = vmatprep.subr.bf16.mxu0 0
        %6472 = vmatpush1.bf16.msra.mxu0 %v6459
        %6473 = vmatprep.subr.bf16.mxu0 0
        %6474 = vmatpush1.bf16.msra.mxu0 %v6460
        %6475 = vmatprep.subr.bf16.mxu0 0
        %6476 = vmatpush1.bf16.msra.mxu0 %v6461
        %6477 = vmatprep.subr.bf16.mxu0 0
        %6478 = vmatpush1.bf16.msra.mxu0 0
        %6479 = vmatprep.subr.bf16.mxu0 0
        %6480 = vmatpush1.bf16.msra.mxu0 0
        %6481 = vmatprep.subr.bf16.mxu0 0
        %6482 = vmatpush1.bf16.msra.mxu0 0
        %6483 = vmatprep.subr.bf16.mxu0 0
        %6484 = vmatpush1.bf16.msra.mxu0 0
        %6485 = vmatprep.subr.bf16.mxu0 0
        %6486 = vmatpush1.bf16.msra.mxu0 0
        %6487 = vmatprep.subr.bf16.mxu0 0
        %6488 = vmatpush1.bf16.msra.mxu0 0
        %6489 = vmatprep.subr.bf16.mxu0 0
        %6490 = vmatpush1.bf16.msra.mxu0 0
        %6491 = vmatprep.subr.bf16.mxu0 0
        %6492 = vmatpush1.bf16.msra.mxu0 0
        %6493 = vmatprep.subr.bf16.mxu0 0
        %6494 = vmatpush1.bf16.msra.mxu0 0
        %6495 = vmatprep.subr.bf16.mxu0 0
        %6496 = vmatpush1.bf16.msra.mxu0 0
        %6497 = vmatprep.subr.bf16.mxu0 0
        %6498 = vmatpush1.bf16.msra.mxu0 0
        %6499 = vmatprep.subr.bf16.mxu0 0
        %6500 = vmatpush1.bf16.msra.mxu0 0
        %6501 = vmatprep.mubr.bf16.mxu0 0
        %6502 = vmatmul.mubr.bf16.gmra.mrb[0].mxu0 %v6467
        %v6503 = vpop.f32.mrb[0].mxu0
        %v6504 = vadd.f32 %v6413, %v6503
        %v6505 = vpop.f32.mrb[0].mxu0
        %v6506 = vpop.f32.mrb[0].mxu0
        %v6507 = vpop.f32.mrb[0].mxu0
        %6508 = vdwg.mxu0
        %s6509 = scalar_lea.vmem %s9, 64
        %v6510 = vld [vmem:[%s6509] sm:$0xf]
        %v6511 = vld [vmem:[%s6509 + $0x4] sm:$0xf]
        %v6512 = vld [vmem:[%s6509 + $0x8] sm:$0xf]
        %v6513 = vld [vmem:[%s6509 + $0xc] sm:$0xf]
        %v6514 = vld [vmem:[%s6509 + $0x10] sm:$0xf]
        %v6515 = vld [vmem:[%s6509 + $0x14] sm:$0xf]
        %v6516 = vld [vmem:[%s6509 + $0x18] sm:$0xf]
        %v6517 = vld [vmem:[%s6509 + $0x1c] sm:$0xf]
        %v6526 = vunpack.c.l.b16 %v6279
        %v6527 = vunpack.c.l.b16 %v6283
        %v6528 = vunpack.c.l.b16 %v6287
        %v6529 = vunpack.c.l.b16 %v6291
        %v6530 = vunpack.c.l.b16 %v6295
        %v6531 = vunpack.c.l.b16 %v6299
        %v6532 = vunpack.c.l.b16 %v6303
        %v6533 = vunpack.c.l.b16 %v6307
        %v6534 = vsel %vm4621, %v6527, %v6526
        %v6535 = vsel %vm4623, %v6528, %v6534
        %v6536 = vsel %vm4625, %v6529, %v6535
        %v6537 = vsel %vm4627, %v6530, %v6536
        %v6538 = vsel %vm4629, %v6531, %v6537
        %v6539 = vsel %vm4631, %v6532, %v6538
        %v6540 = vsel %vm4633, %v6533, %v6539
        %v6541 = vpack.c.b16 %v6540, %v6540
        %v6550 = vunpack.c.l.b16 %v6510
        %v6551 = vunpack.c.l.b16 %v6511
        %v6552 = vunpack.c.l.b16 %v6512
        %v6553 = vunpack.c.l.b16 %v6513
        %v6554 = vunpack.c.l.b16 %v6514
        %v6555 = vunpack.c.l.b16 %v6515
        %v6556 = vunpack.c.l.b16 %v6516
        %v6557 = vunpack.c.l.b16 %v6517
        %v6558 = vpack.c.b16 %v6551, %v6550
        %v6559 = vpack.c.b16 %v6553, %v6552
        %v6560 = vpack.c.b16 %v6555, %v6554
        %v6561 = vpack.c.b16 %v6557, %v6556
        %v6567 = vsel %vm6374, %v6541, 0
        %6569 = vmatprep.subr.bf16.mxu0 0
        %6570 = vmatpush1.bf16.msra.mxu0 %v6558
        %6571 = vmatprep.subr.bf16.mxu0 0
        %6572 = vmatpush1.bf16.msra.mxu0 %v6559
        %6573 = vmatprep.subr.bf16.mxu0 0
        %6574 = vmatpush1.bf16.msra.mxu0 %v6560
        %6575 = vmatprep.subr.bf16.mxu0 0
        %6576 = vmatpush1.bf16.msra.mxu0 %v6561
        %6577 = vmatprep.subr.bf16.mxu0 0
        %6578 = vmatpush1.bf16.msra.mxu0 0
        %6579 = vmatprep.subr.bf16.mxu0 0
        %6580 = vmatpush1.bf16.msra.mxu0 0
        %6581 = vmatprep.subr.bf16.mxu0 0
        %6582 = vmatpush1.bf16.msra.mxu0 0
        %6583 = vmatprep.subr.bf16.mxu0 0
        %6584 = vmatpush1.bf16.msra.mxu0 0
        %6585 = vmatprep.subr.bf16.mxu0 0
        %6586 = vmatpush1.bf16.msra.mxu0 0
        %6587 = vmatprep.subr.bf16.mxu0 0
        %6588 = vmatpush1.bf16.msra.mxu0 0
        %6589 = vmatprep.subr.bf16.mxu0 0
        %6590 = vmatpush1.bf16.msra.mxu0 0
        %6591 = vmatprep.subr.bf16.mxu0 0
        %6592 = vmatpush1.bf16.msra.mxu0 0
        %6593 = vmatprep.subr.bf16.mxu0 0
        %6594 = vmatpush1.bf16.msra.mxu0 0
        %6595 = vmatprep.subr.bf16.mxu0 0
        %6596 = vmatpush1.bf16.msra.mxu0 0
        %6597 = vmatprep.subr.bf16.mxu0 0
        %6598 = vmatpush1.bf16.msra.mxu0 0
        %6599 = vmatprep.subr.bf16.mxu0 0
        %6600 = vmatpush1.bf16.msra.mxu0 0
        %6601 = vmatprep.mubr.bf16.mxu0 0
        %6602 = vmatmul.mubr.bf16.gmra.mrb[0].mxu0 %v6567
        %v6603 = vpop.f32.mrb[0].mxu0
        %v6604 = vadd.f32 0.0, %v6603
        %v6605 = vpop.f32.mrb[0].mxu0
        %v6606 = vpop.f32.mrb[0].mxu0
        %v6607 = vpop.f32.mrb[0].mxu0
        %6608 = vdwg.mxu0
        %v6609 = vadd.f32 %v6504, %v6604
        %s6610 = scalar_lea.vmem %s9, 96
        %v6611 = vld [vmem:[%s6610] sm:$0xf]
        %v6612 = vld [vmem:[%s6610 + $0x4] sm:$0xf]
        %v6613 = vld [vmem:[%s6610 + $0x8] sm:$0xf]
        %v6614 = vld [vmem:[%s6610 + $0xc] sm:$0xf]
        %v6615 = vld [vmem:[%s6610 + $0x10] sm:$0xf]
        %v6616 = vld [vmem:[%s6610 + $0x14] sm:$0xf]
        %v6617 = vld [vmem:[%s6610 + $0x18] sm:$0xf]
        %v6618 = vld [vmem:[%s6610 + $0x1c] sm:$0xf]
        %v6627 = vunpack.c.l.b16 %v6280
        %v6628 = vunpack.c.l.b16 %v6284
        %v6629 = vunpack.c.l.b16 %v6288
        %v6630 = vunpack.c.l.b16 %v6292
        %v6631 = vunpack.c.l.b16 %v6296
        %v6632 = vunpack.c.l.b16 %v6300
        %v6633 = vunpack.c.l.b16 %v6304
        %v6634 = vunpack.c.l.b16 %v6308
        %v6635 = vsel %vm4621, %v6628, %v6627
        %v6636 = vsel %vm4623, %v6629, %v6635
        %v6637 = vsel %vm4625, %v6630, %v6636
        %v6638 = vsel %vm4627, %v6631, %v6637
        %v6639 = vsel %vm4629, %v6632, %v6638
        %v6640 = vsel %vm4631, %v6633, %v6639
        %v6641 = vsel %vm4633, %v6634, %v6640
        %v6642 = vpack.c.b16 %v6641, %v6641
        %v6651 = vunpack.c.l.b16 %v6611
        %v6652 = vunpack.c.l.b16 %v6612
        %v6653 = vunpack.c.l.b16 %v6613
        %v6654 = vunpack.c.l.b16 %v6614
        %v6655 = vunpack.c.l.b16 %v6615
        %v6656 = vunpack.c.l.b16 %v6616
        %v6657 = vunpack.c.l.b16 %v6617
        %v6658 = vunpack.c.l.b16 %v6618
        %v6659 = vpack.c.b16 %v6652, %v6651
        %v6660 = vpack.c.b16 %v6654, %v6653
        %v6661 = vpack.c.b16 %v6656, %v6655
        %v6662 = vpack.c.b16 %v6658, %v6657
        %v6668 = vsel %vm6374, %v6642, 0
        %6670 = vmatprep.subr.bf16.mxu0 0
        %6671 = vmatpush1.bf16.msra.mxu0 %v6659
        %6672 = vmatprep.subr.bf16.mxu0 0
        %6673 = vmatpush1.bf16.msra.mxu0 %v6660
        %6674 = vmatprep.subr.bf16.mxu0 0
        %6675 = vmatpush1.bf16.msra.mxu0 %v6661
        %6676 = vmatprep.subr.bf16.mxu0 0
        %6677 = vmatpush1.bf16.msra.mxu0 %v6662
        %6678 = vmatprep.subr.bf16.mxu0 0
        %6679 = vmatpush1.bf16.msra.mxu0 0
        %6680 = vmatprep.subr.bf16.mxu0 0
        %6681 = vmatpush1.bf16.msra.mxu0 0
        %6682 = vmatprep.subr.bf16.mxu0 0
        %6683 = vmatpush1.bf16.msra.mxu0 0
        %6684 = vmatprep.subr.bf16.mxu0 0
        %6685 = vmatpush1.bf16.msra.mxu0 0
        %6686 = vmatprep.subr.bf16.mxu0 0
        %6687 = vmatpush1.bf16.msra.mxu0 0
        %6688 = vmatprep.subr.bf16.mxu0 0
        %6689 = vmatpush1.bf16.msra.mxu0 0
        %6690 = vmatprep.subr.bf16.mxu0 0
        %6691 = vmatpush1.bf16.msra.mxu0 0
        %6692 = vmatprep.subr.bf16.mxu0 0
        %6693 = vmatpush1.bf16.msra.mxu0 0
        %6694 = vmatprep.subr.bf16.mxu0 0
        %6695 = vmatpush1.bf16.msra.mxu0 0
        %6696 = vmatprep.subr.bf16.mxu0 0
        %6697 = vmatpush1.bf16.msra.mxu0 0
        %6698 = vmatprep.subr.bf16.mxu0 0
        %6699 = vmatpush1.bf16.msra.mxu0 0
        %6700 = vmatprep.subr.bf16.mxu0 0
        %6701 = vmatpush1.bf16.msra.mxu0 0
        %6702 = vmatprep.mubr.bf16.mxu0 0
        %6703 = vmatmul.mubr.bf16.gmra.mrb[0].mxu0 %v6668
        %v6704 = vpop.f32.mrb[0].mxu0
        %v6705 = vadd.f32 0.0, %v6704
        %v6706 = vpop.f32.mrb[0].mxu0
        %v6707 = vpop.f32.mrb[0].mxu0
        %v6708 = vpop.f32.mrb[0].mxu0
        %6709 = vdwg.mxu0
        %v6710 = vadd.f32 %v6609, %v6705
        %v6711 = vld [vmem:[%s10] sm:$0x1]
        %v6713 = vlaneseq
        %v6714 = vshrl.u32 %v6713, 7
        %v6715 = vsub.s32 0, %v6714
        %v6716 = vrot.slane %v6711, %v6715
        %v6718 = vadd.f32 %v6710, %v6716
        %v6719 = vmax.f32 %v6718, 0.0
        %v6720 = vpack.c.bf16 %v6719, %v6719
        %v6721 = vld [vmem:[%s11] sm:$0xf]
        %v6722 = vld [vmem:[%s11 + $0x4] sm:$0xf]
        %v6723 = vld [vmem:[%s11 + $0x8] sm:$0xf]
        %v6724 = vld [vmem:[%s11 + $0xc] sm:$0xf]
        %v6725 = vld [vmem:[%s11 + $0x10] sm:$0xf]
        %v6726 = vld [vmem:[%s11 + $0x14] sm:$0xf]
        %v6727 = vld [vmem:[%s11 + $0x18] sm:$0xf]
        %v6728 = vld [vmem:[%s11 + $0x1c] sm:$0xf]
        %v6729 = vld [vmem:[%s11 + $0x20] sm:$0xf]
        %v6730 = vld [vmem:[%s11 + $0x24] sm:$0xf]
        %v6731 = vld [vmem:[%s11 + $0x28] sm:$0xf]
        %v6732 = vld [vmem:[%s11 + $0x2c] sm:$0xf]
        %v6733 = vld [vmem:[%s11 + $0x30] sm:$0xf]
        %v6734 = vld [vmem:[%s11 + $0x34] sm:$0xf]
        %v6735 = vld [vmem:[%s11 + $0x38] sm:$0xf]
        %v6736 = vld [vmem:[%s11 + $0x3c] sm:$0xf]
        %v6737 = vld [vmem:[%s12] sm:$0x1]
        %v6739 = vlaneseq
        %v6740 = vshrl.u32 %v6739, 7
        %v6741 = vsub.s32 0, %v6740
        %v6742 = vrot.slane %v6737, %v6741
        %v6760 = vunpack.c.l.b16 %v6721
        %v6761 = vunpack.c.l.b16 %v6722
        %v6762 = vunpack.c.l.b16 %v6723
        %v6763 = vunpack.c.l.b16 %v6724
        %v6764 = vunpack.c.l.b16 %v6725
        %v6765 = vunpack.c.l.b16 %v6726
        %v6766 = vunpack.c.l.b16 %v6727
        %v6767 = vunpack.c.l.b16 %v6728
        %v6768 = vunpack.c.l.b16 %v6729
        %v6769 = vunpack.c.l.b16 %v6730
        %v6770 = vunpack.c.l.b16 %v6731
        %v6771 = vunpack.c.l.b16 %v6732
        %v6772 = vunpack.c.l.b16 %v6733
        %v6773 = vunpack.c.l.b16 %v6734
        %v6774 = vunpack.c.l.b16 %v6735
        %v6775 = vunpack.c.l.b16 %v6736
        %v6776 = vpack.c.b16 %v6761, %v6760
        %v6777 = vpack.c.b16 %v6763, %v6762
        %v6778 = vpack.c.b16 %v6765, %v6764
        %v6779 = vpack.c.b16 %v6767, %v6766
        %v6780 = vpack.c.b16 %v6769, %v6768
        %v6781 = vpack.c.b16 %v6771, %v6770
        %v6782 = vpack.c.b16 %v6773, %v6772
        %v6783 = vpack.c.b16 %v6775, %v6774
        %6792 = vmatprep.subr.bf16.mxu0 0
        %6793 = vmatpush1.bf16.msra.mxu0 %v6776
        %6794 = vmatprep.subr.bf16.mxu0 0
        %6795 = vmatpush1.bf16.msra.mxu0 %v6777
        %6796 = vmatprep.subr.bf16.mxu0 0
        %6797 = vmatpush1.bf16.msra.mxu0 %v6778
        %6798 = vmatprep.subr.bf16.mxu0 0
        %6799 = vmatpush1.bf16.msra.mxu0 %v6779
        %6800 = vmatprep.subr.bf16.mxu0 0
        %6801 = vmatpush1.bf16.msra.mxu0 %v6780
        %6802 = vmatprep.subr.bf16.mxu0 0
        %6803 = vmatpush1.bf16.msra.mxu0 %v6781
        %6804 = vmatprep.subr.bf16.mxu0 0
        %6805 = vmatpush1.bf16.msra.mxu0 %v6782
        %6806 = vmatprep.subr.bf16.mxu0 0
        %6807 = vmatpush1.bf16.msra.mxu0 %v6783
        %6808 = vmatprep.subr.bf16.mxu0 0
        %6809 = vmatpush1.bf16.msra.mxu0 0
        %6810 = vmatprep.subr.bf16.mxu0 0
        %6811 = vmatpush1.bf16.msra.mxu0 0
        %6812 = vmatprep.subr.bf16.mxu0 0
        %6813 = vmatpush1.bf16.msra.mxu0 0
        %6814 = vmatprep.subr.bf16.mxu0 0
        %6815 = vmatpush1.bf16.msra.mxu0 0
        %6816 = vmatprep.subr.bf16.mxu0 0
        %6817 = vmatpush1.bf16.msra.mxu0 0
        %6818 = vmatprep.subr.bf16.mxu0 0
        %6819 = vmatpush1.bf16.msra.mxu0 0
        %6820 = vmatprep.subr.bf16.mxu0 0
        %6821 = vmatpush1.bf16.msra.mxu0 0
        %6822 = vmatprep.subr.bf16.mxu0 0
        %6823 = vmatpush1.bf16.msra.mxu0 0
        %6824 = vmatprep.mubr.bf16.mxu0 0
        %6825 = vmatmul.mubr.bf16.gmra.mrb[0].mxu0 %v6720
        %v6826 = vpop.f32.mrb[0].mxu0
        %v6827 = vadd.f32 %v6742, %v6826
        %v6828 = vpop.f32.mrb[0].mxu0
        %v6829 = vpop.f32.mrb[0].mxu0
        %v6830 = vpop.f32.mrb[0].mxu0
        %6831 = vdwg.mxu0
        %v6832 = vmax.f32 %v6827, 0.0
        %v6833 = vpack.c.bf16 %v6832, %v6832
        %v6834 = vld [vmem:[%s13] sm:$0xf]
        %v6835 = vld [vmem:[%s13 + $0x4] sm:$0xf]
        %v6836 = vld [vmem:[%s13 + $0x8] sm:$0xf]
        %v6837 = vld [vmem:[%s13 + $0xc] sm:$0xf]
        %v6838 = vld [vmem:[%s13 + $0x10] sm:$0xf]
        %v6839 = vld [vmem:[%s13 + $0x14] sm:$0xf]
        %v6840 = vld [vmem:[%s13 + $0x18] sm:$0xf]
        %v6841 = vld [vmem:[%s13 + $0x1c] sm:$0xf]
        %v6842 = vld [vmem:[%s13 + $0x20] sm:$0xf]
        %v6843 = vld [vmem:[%s13 + $0x24] sm:$0xf]
        %v6844 = vld [vmem:[%s13 + $0x28] sm:$0xf]
        %v6845 = vld [vmem:[%s13 + $0x2c] sm:$0xf]
        %v6846 = vld [vmem:[%s13 + $0x30] sm:$0xf]
        %v6847 = vld [vmem:[%s13 + $0x34] sm:$0xf]
        %v6848 = vld [vmem:[%s13 + $0x38] sm:$0xf]
        %v6849 = vld [vmem:[%s13 + $0x3c] sm:$0xf]
        %v6850 = vld [vmem:[%s14] sm:$0x1]
        %v6852 = vlaneseq
        %v6853 = vshrl.u32 %v6852, 7
        %v6854 = vsub.s32 0, %v6853
        %v6855 = vrot.slane %v6850, %v6854
        %v6873 = vunpack.c.l.b16 %v6834
        %v6874 = vunpack.c.l.b16 %v6835
        %v6875 = vunpack.c.l.b16 %v6836
        %v6876 = vunpack.c.l.b16 %v6837
        %v6877 = vunpack.c.l.b16 %v6838
        %v6878 = vunpack.c.l.b16 %v6839
        %v6879 = vunpack.c.l.b16 %v6840
        %v6880 = vunpack.c.l.b16 %v6841
        %v6881 = vunpack.c.l.b16 %v6842
        %v6882 = vunpack.c.l.b16 %v6843
        %v6883 = vunpack.c.l.b16 %v6844
        %v6884 = vunpack.c.l.b16 %v6845
        %v6885 = vunpack.c.l.b16 %v6846
        %v6886 = vunpack.c.l.b16 %v6847
        %v6887 = vunpack.c.l.b16 %v6848
        %v6888 = vunpack.c.l.b16 %v6849
        %v6889 = vpack.c.b16 %v6874, %v6873
        %v6890 = vpack.c.b16 %v6876, %v6875
        %v6891 = vpack.c.b16 %v6878, %v6877
        %v6892 = vpack.c.b16 %v6880, %v6879
        %v6893 = vpack.c.b16 %v6882, %v6881
        %v6894 = vpack.c.b16 %v6884, %v6883
        %v6895 = vpack.c.b16 %v6886, %v6885
        %v6896 = vpack.c.b16 %v6888, %v6887
        %6905 = vmatprep.subr.bf16.mxu0 0
        %6906 = vmatpush1.bf16.msra.mxu0 %v6889
        %6907 = vmatprep.subr.bf16.mxu0 0
        %6908 = vmatpush1.bf16.msra.mxu0 %v6890
        %6909 = vmatprep.subr.bf16.mxu0 0
        %6910 = vmatpush1.bf16.msra.mxu0 %v6891
        %6911 = vmatprep.subr.bf16.mxu0 0
        %6912 = vmatpush1.bf16.msra.mxu0 %v6892
        %6913 = vmatprep.subr.bf16.mxu0 0
        %6914 = vmatpush1.bf16.msra.mxu0 %v6893
        %6915 = vmatprep.subr.bf16.mxu0 0
        %6916 = vmatpush1.bf16.msra.mxu0 %v6894
        %6917 = vmatprep.subr.bf16.mxu0 0
        %6918 = vmatpush1.bf16.msra.mxu0 %v6895
        %6919 = vmatprep.subr.bf16.mxu0 0
        %6920 = vmatpush1.bf16.msra.mxu0 %v6896
        %6921 = vmatprep.subr.bf16.mxu0 0
        %6922 = vmatpush1.bf16.msra.mxu0 0
        %6923 = vmatprep.subr.bf16.mxu0 0
        %6924 = vmatpush1.bf16.msra.mxu0 0
        %6925 = vmatprep.subr.bf16.mxu0 0
        %6926 = vmatpush1.bf16.msra.mxu0 0
        %6927 = vmatprep.subr.bf16.mxu0 0
        %6928 = vmatpush1.bf16.msra.mxu0 0
        %6929 = vmatprep.subr.bf16.mxu0 0
        %6930 = vmatpush1.bf16.msra.mxu0 0
        %6931 = vmatprep.subr.bf16.mxu0 0
        %6932 = vmatpush1.bf16.msra.mxu0 0
        %6933 = vmatprep.subr.bf16.mxu0 0
        %6934 = vmatpush1.bf16.msra.mxu0 0
        %6935 = vmatprep.subr.bf16.mxu0 0
        %6936 = vmatpush1.bf16.msra.mxu0 0
        %6937 = vmatprep.mubr.bf16.mxu0 0
        %6938 = vmatmul.mubr.bf16.gmra.mrb[0].mxu0 %v6833
        %v6939 = vpop.f32.mrb[0].mxu0
        %v6940 = vadd.f32 %v6855, %v6939
        %v6941 = vpop.f32.mrb[0].mxu0
        %v6942 = vpop.f32.mrb[0].mxu0
        %v6943 = vpop.f32.mrb[0].mxu0
        %6944 = vdwg.mxu0
        %6945 = vst [vmem:[%s490] sm:$0xff] %v6940
        %s6946 = sand.u32 %s357, 1
        %s6947 = scalar_lea.sflag [#allocation3], %s6946
        %s6948 = sand.u32 %s357, 1
        %s6949 = smul.addr %s6948, 8
        %s6950 = scalar_lea.vmem [#allocation2], %s6949
        // Predicated region
        $region81: #{net_forward.1} parent=79 // pred_check
          %p6951 = pneg %p367
        $region82: #{net_forward.1} parent=79 // pred_check_branch
          %6953 = sbr.rel (%p6951) target = $region84
        $region83: #{net_forward.1} parent=79 // pred_region
          %s6955 = ssub.s32 128, 128
          %6956 = vsyncadd %s6947, %s6955
          %s6957 = smul.addr %s29, 128
          %s6958 = scalar_lea.hbm %s15, %s6957
          %s6960 = sshll.u32 %s6950, 4
          %s6961 = int_to_ptr.vmem [resolvable:$true] %s6960
          %6963 = dma.vmem_to_hbm [thread:$0]  %s6961, 128, %s6958, %s6947
        $region84: #{net_forward.1} parent=79 // pred_fallthru
          _
      $region80: #{net_forward.1} parent=5 // pred_fallthru
        _
      %p6964 = scmp.le.s32.totalorder 2, %s24
      // Predicated region
      $region85: #{net_forward.1} parent=5 // pred_check
        %p6965 = pneg %p6964
      $region86: #{net_forward.1} parent=5 // pred_check_branch
        %6967 = sbr.rel (%p6965) target = $region88
      $region87: #{net_forward.1} parent=5 // pred_region
        %s6968 = ssub.s32 %s24, 2
        // Predicated region
        $region89: #{net_forward.1} parent=87 // pred_check
          %p6969 = pneg %p373
        $region90: #{net_forward.1} parent=87 // pred_check_branch
          %6971 = sbr.rel (%p6969) target = $region92
        $region91: #{net_forward.1} parent=87 // pred_region
          %s6972 = sand.u32 %s358, 1
          %s6973 = scalar_lea.sflag [#allocation3], %s6972
          %s6974 = sand.u32 %s358, 1
          %s6975 = smul.addr %s6974, 8
          %s6976 = scalar_lea.vmem [#allocation2], %s6975
          %6977 = dma.done %s6973, 128
        $region92: #{net_forward.1} parent=87 // pred_fallthru
          _
      $region88: #{net_forward.1} parent=5 // pred_fallthru
        _
    $region6: #{net_forward.1} parent=1 // loop_footer
      %s28 = sadd.s32 1, %s24
    $region7: #{net_forward.1} parent=1 // loop_footer_branch
      %23 = sbr.rel target = $region3
    $region8: #{net_forward.1} parent=1 // loop_exit
      _
    %6978 = vsyncpa [#allocation3], 1
    %s6979 = scalar_lea.sflag [#allocation3], 1
    %6980 = vsyncpa %s6979, 1

</llo_original>
